<compile_context>
chip_gen: v5e
topology: v5e:2x2
jax: 0.10.0
libtpu: 0.0.40
codegen_flags: <defaults>
</compile_context>

<pallas_src>
import jax
import jax.numpy as jnp
from jax.experimental import pallas as pl
from jax.experimental.pallas import tpu as pltpu


# ----------------------------- Pallas kernel ------------------------------- #
def generator_head_kernel(xc_ref, xp_ref,
                          w1_ref, b1_ref,
                          w2_ref, b2_ref,
                          w3a_ref, w3b_ref, b3_ref,
                          w4_ref, b4_ref,
                          out_ref):
    cdt = w1_ref.dtype  # weight storage / MXU operand dtype (bf16 by default)

    # In-kernel casts: inputs arrive in their native dtype (no wrapper-side cast pass).
    xc = xc_ref[...].astype(cdt)
    xp = xp_ref[...].astype(cdt)

    # Branch A: in_classifier_cnn_block -> Linear + ReLU (+ Dropout).
    # TODO(synk): nn.Dropout(p=0.4) is stochastic in train mode; modeled here as
    # eval-mode identity (standard inference semantics).
    h_cnn = jnp.dot(xc, w1_ref[...], preferred_element_type=jnp.float32)
    h_cnn = jnp.maximum(h_cnn + b1_ref[...], 0.0)

    # Branch B: in_classifier_prediction -> Linear + ReLU
    h_pred = jnp.dot(xp, w2_ref[...], preferred_element_type=jnp.float32)
    h_pred = jnp.maximum(h_pred + b2_ref[...], 0.0)

    # Main stack, layer 1: Linear(concat) + ReLU with the concat folded into split weights:
    #   cat([A, B]) @ W3  ==  A @ W3[:458(pad 512)] + B @ W3[458:(pad 128)]
    h1 = (jnp.dot(h_cnn.astype(cdt), w3a_ref[...], preferred_element_type=jnp.float32)
          + jnp.dot(h_pred.astype(cdt), w3b_ref[...], preferred_element_type=jnp.float32)
          + b3_ref[...])
    h1 = jnp.maximum(h1, 0.0)

    # Main stack, layer 2: Linear + ReLU
    out = jnp.dot(h1.astype(cdt), w4_ref[...], preferred_element_type=jnp.float32) + b4_ref[...]
    out_ref[...] = jnp.maximum(out, 0.0).astype(out_ref.dtype)


# ----------------------------- batch tiling --------------------------------- #
def _choose_batch_tiling(B, tb):
    """Pick (TB, B_pad).  Prefer: single tile for small B; a tile dividing B exactly
    (no wrapper pad / slice) for larger B; pad only as a last resort."""
    tb = max(8, (tb // 8) * 8)
    if B <= tb:
        # v7x has two TensorCores: once per-call compute outweighs the ~2 MiB weight
        # stream, give each TC its own tile.  Tiny batches stay single-step (latency).
        if B >= 512 and B % 16 == 0:
            return B // 2, B
        return B, B
    cand = min(tb, (B // 8) * 8)
    while cand >= 8:
        if B % cand == 0:
            return cand, B
        cand -= 8
    # fallback (B not expressible as grid of 8-multiples): pad the batch
    return tb, pl.cdiv(B, tb) * tb


# ------------------------------- wrapper ------------------------------------ #
def generator_head_block(x_cnn, x_pred, params, *, tb=512, out_dtype=jnp.float32):
    """x_cnn: (B, 512), x_pred: (B, 10)  ->  (B, 1024) in out_dtype.

    tb: max batch tile (rows per grid step).  Weights stay VMEM-resident across the
    grid (constant index_map); activation/output tiles are double-buffered.
    """
    B = x_cnn.shape[0]
    d_cnn_in = x_cnn.shape[1]
    d_pred_pad = params["w2"].shape[0]          # lane-padded branch-B input width (128)
    out_dim = params["w4"].shape[1]

    # Lane-pad x_pred's feature dim (10 -> 128) so every operand is (8,128)-aligned.
    # Exact: the matching rows of w2 are zero.  (Tiny tensor, negligible cost.)
    if x_pred.shape[1] != d_pred_pad:
        x_pred = jnp.pad(x_pred, ((0, 0), (0, d_pred_pad - x_pred.shape[1])))

    TB, B_pad = _choose_batch_tiling(B, tb)
    if B_pad != B:
        pad = B_pad - B
        x_cnn = jnp.pad(x_cnn, ((0, pad), (0, 0)))
        x_pred = jnp.pad(x_pred, ((0, pad), (0, 0)))
    grid = (B_pad // TB,)

    def act_spec(d):
        return pl.BlockSpec((TB, d), lambda i: (i, 0))

    def const_spec(arr):  # weights/biases: same block every grid step -> VMEM resident
        return pl.BlockSpec(arr.shape, lambda i: (0, 0))

    weight_args = (params["w1"], params["b1"],
                   params["w2"], params["b2"],
                   params["w3a"], params["w3b"], params["b3"],
                   params["w4"], params["b4"])

    # --- cost estimate (padded dims; harmless overestimate) ---
    flops = 2 * B_pad * (d_cnn_in * params["w1"].shape[1]
                         + d_pred_pad * params["w2"].shape[1]
                         + params["w3a"].shape[0] * params["w3a"].shape[1]
                         + params["w3b"].shape[0] * params["w3b"].shape[1]
                         + params["w4"].shape[0] * params["w4"].shape[1])
    weight_bytes = sum(int(a.size * a.dtype.itemsize) for a in weight_args)
    in_bytes = int(x_cnn.size * x_cnn.dtype.itemsize) + int(x_pred.size * x_pred.dtype.itemsize)
    out_itemsize = jnp.dtype(out_dtype).itemsize
    bytes_accessed = in_bytes + weight_bytes + int(B_pad * out_dim * out_itemsize)

    # --- VMEM budget: 2x weights + 2x in/out tiles + f32/bf16 temporaries, capped for v7x ---
    in_tile_bytes = TB * (d_cnn_in * x_cnn.dtype.itemsize + d_pred_pad * x_pred.dtype.itemsize)
    out_tile_bytes = TB * out_dim * out_itemsize
    temps_bytes = 12 * TB * 1024                 # h_cnn/h_pred/h1/out f32 + bf16 copies (est.)
    vmem_need = 2 * weight_bytes + 2 * in_tile_bytes + 2 * out_tile_bytes + temps_bytes
    vmem_limit = int(min(max(vmem_need + (4 << 20), 16 << 20), 64 << 20))

    out = pl.pallas_call(
        generator_head_kernel,
        out_shape=jax.ShapeDtypeStruct((B_pad, out_dim), out_dtype),
        grid_spec=pltpu.PrefetchScalarGridSpec(
            num_scalar_prefetch=0,
            grid=grid,
            in_specs=[act_spec(d_cnn_in), act_spec(d_pred_pad)]
                     + [const_spec(a) for a in weight_args],
            out_specs=pl.BlockSpec((TB, out_dim), lambda i: (i, 0)),
        ),
        compiler_params=pltpu.CompilerParams(
            dimension_semantics=("parallel",),      # v7x: 2 TCs split the batch grid
            vmem_limit_bytes=vmem_limit,
        ),
        cost_estimate=pl.CostEstimate(flops=flops, transcendentals=0,
                                      bytes_accessed=bytes_accessed),
    )(x_cnn, x_pred, *weight_args)

    return out[:B] if B_pad != B else out


def init_params(key,
                cnn_shapes=(512, 458),
                pred_shapes=(10, 64),
                main_shapes=(522, 512, 1024),
                param_dtype=jnp.bfloat16):
    """Synthetic parameters matching the module's __init__ shapes.

    Returns (kernel_params, reference_params):
      kernel_params    -- lane-padded (458->512, 64->128, pred-in 10->128), weights cast
                          to param_dtype (bf16 default); biases stay f32.
      reference_params -- original un-padded f32 weights for the pure-JAX reference.
    """
    assert main_shapes[0] == cnn_shapes[-1] + pred_shapes[-1]
    ks = jax.random.split(key, 4)

    def lin(k, fan_in, fan_out):
        # (in, out) layout so the kernel does x @ W + b  (== torch x @ W.T + b)
        w = jax.random.normal(k, (fan_in, fan_out), jnp.float32) * (1.0 / jnp.sqrt(fan_in))
        b = jnp.zeros((1, fan_out), jnp.float32)
        return w, b

    w1, b1 = lin(ks[0], cnn_shapes[0], cnn_shapes[1])     # 512 -> 458
    w2, b2 = lin(ks[1], pred_shapes[0], pred_shapes[1])   # 10  -> 64
    w3, b3 = lin(ks[2], main_shapes[0], main_shapes[1])   # 522 -> 512
    w4, b4 = lin(ks[3], main_shapes[1], main_shapes[2])   # 512 -> 1024

    split = cnn_shapes[-1]                                # 458
    w3a, w3b = w3[:split, :], w3[split:, :]

    ref_params = {"w1": w1, "b1": b1, "w2": w2, "b2": b2,
                  "w3a": w3a, "w3b": w3b, "b3": b3, "w4": w4, "b4": b4}

    # Zero-pad odd widths to multiples of 128 lanes (exact: padded ReLU outputs are 0
    # and the matching W3 rows are 0; padded x_pred columns hit zero W2 rows).
    def round_up(n, m):
        return ((n + m - 1) // m) * m

    pad_a = round_up(cnn_shapes[-1], 128) - cnn_shapes[-1]    # 458 -> 512
    pad_b = round_up(pred_shapes[-1], 128) - pred_shapes[-1]  # 64  -> 128
    pad_pin = round_up(pred_shapes[0], 128) - pred_shapes[0]  # 10  -> 128

    w1p = jnp.pad(w1, ((0, 0), (0, pad_a)))
    b1p = jnp.pad(b1, ((0, 0), (0, pad_a)))
    w3ap = jnp.pad(w3a, ((0, pad_a), (0, 0)))
    w2p = jnp.pad(w2, ((0, pad_pin), (0, pad_b)))
    b2p = jnp.pad(b2, ((0, 0), (0, pad_b)))
    w3bp = jnp.pad(w3b, ((0, pad_b), (0, 0)))

    kernel_params = {
        "w1": w1p.astype(param_dtype), "b1": b1p,             # biases stay f32 (tiny)
        "w2": w2p.astype(param_dtype), "b2": b2p,
        "w3a": w3ap.astype(param_dtype), "w3b": w3bp.astype(param_dtype), "b3": b3,
        "w4": w4.astype(param_dtype), "b4": b4,
    }
    return kernel_params, ref_params


def reference_forward(x_cnn, x_pred, ref_params):
    """Pure-JAX reference (eval-mode dropout), un-padded f32 weights."""
    h_cnn = jnp.maximum(x_cnn @ ref_params["w1"] + ref_params["b1"], 0.0)
    h_pred = jnp.maximum(x_pred @ ref_params["w2"] + ref_params["b2"], 0.0)
    cat = jnp.concatenate([h_cnn, h_pred], axis=1)
    w3 = jnp.concatenate([ref_params["w3a"], ref_params["w3b"]], axis=0)
    h1 = jnp.maximum(cat @ w3 + ref_params["b3"], 0.0)
    return jnp.maximum(h1 @ ref_params["w4"] + ref_params["b4"], 0.0)


if __name__ == "__main__":
    key = jax.random.PRNGKey(0)
    k_params, k_cnn, k_pred = jax.random.split(key, 3)

    # --- small-batch path (single tile), default bf16 weights ----------------
    B = 4
    params_bf16, ref_params = init_params(k_params)                       # bf16 default
    params_f32, _ = init_params(k_params, param_dtype=jnp.float32)
    x_cnn = jax.random.normal(k_cnn, (B, 512), jnp.float32)
    x_pred = jax.random.normal(k_pred, (B, 10), jnp.float32)
    ref = reference_forward(x_cnn, x_pred, ref_params)

    out_bf16 = jax.block_until_ready(generator_head_block(x_cnn, x_pred, params_bf16))
    assert out_bf16.shape == (B, 1024), out_bf16.shape
    assert jnp.allclose(out_bf16, ref, atol=5e-2, rtol=5e-2), "bf16 mismatch vs reference"

    # --- f32 weights: tight parity check -------------------------------------
    out_f32 = jax.block_until_ready(generator_head_block(x_cnn, x_pred, params_f32))
    assert jnp.allclose(out_f32, ref, atol=1e-4, rtol=1e-4), "f32 mismatch vs reference"

    # --- gridded path, tile dividing B exactly (no batch pad / output slice) -
    B2 = 32
    x_cnn2 = jax.random.normal(k_cnn, (B2, 512), jnp.float32)
    x_pred2 = jax.random.normal(k_pred, (B2, 10), jnp.float32)
    out2 = jax.block_until_ready(generator_head_block(x_cnn2, x_pred2, params_bf16, tb=8))
    ref2 = reference_forward(x_cnn2, x_pred2, ref_params)
    assert out2.shape == (B2, 1024), out2.shape
    assert jnp.allclose(out2, ref2, atol=5e-2, rtol=5e-2), "gridded bf16 mismatch"

    # --- ragged batch fallback path (pad + slice) -----------------------------
    B3 = 20
    x_cnn3 = jax.random.normal(k_cnn, (B3, 512), jnp.float32)
    x_pred3 = jax.random.normal(k_pred, (B3, 10), jnp.float32)
    out3 = jax.block_until_ready(generator_head_block(x_cnn3, x_pred3, params_bf16, tb=8))
    ref3 = reference_forward(x_cnn3, x_pred3, ref_params)
    assert out3.shape == (B3, 1024), out3.shape
    assert jnp.allclose(out3, ref3, atol=5e-2, rtol=5e-2), "ragged-batch bf16 mismatch"

    print("KERNEL_OK")
</pallas_src>

<mosaic_0001>
module attributes {stable_mosaic.version = 11 : i64} {
  func.func @generator_head_kernel(%arg0: i32, %arg1: memref<4x512xf32, #tpu.memory_space<vmem>>, %arg2: memref<4x128xf32, #tpu.memory_space<vmem>>, %arg3: memref<512x512xbf16, #tpu.memory_space<vmem>>, %arg4: memref<1x512xf32, #tpu.memory_space<vmem>>, %arg5: memref<128x128xbf16, #tpu.memory_space<vmem>>, %arg6: memref<1x128xf32, #tpu.memory_space<vmem>>, %arg7: memref<512x512xbf16, #tpu.memory_space<vmem>>, %arg8: memref<128x512xbf16, #tpu.memory_space<vmem>>, %arg9: memref<1x512xf32, #tpu.memory_space<vmem>>, %arg10: memref<512x1024xbf16, #tpu.memory_space<vmem>>, %arg11: memref<1x1024xf32, #tpu.memory_space<vmem>>, %arg12: memref<4x1024xf32, #tpu.memory_space<vmem>>) attributes {dimension_semantics = [#tpu.dimension_semantics<parallel>], iteration_bounds = array<i64: 1>, scalar_prefetch = 0 : i64, scratch_operands = 0 : i64, tpu.core_type = #tpu.core_type<tc>, window_params = [{transform_indices = @transform_0, window_bounds = array<i64: 4, 512>}, {transform_indices = @transform_1, window_bounds = array<i64: 4, 128>}, {pipeline_mode = #tpu.pipeline_mode<synchronous>, transform_indices = @transform_2, window_bounds = array<i64: 512, 512>}, {pipeline_mode = #tpu.pipeline_mode<synchronous>, transform_indices = @transform_3, window_bounds = array<i64: 1, 512>}, {pipeline_mode = #tpu.pipeline_mode<synchronous>, transform_indices = @transform_4, window_bounds = array<i64: 128, 128>}, {pipeline_mode = #tpu.pipeline_mode<synchronous>, transform_indices = @transform_5, window_bounds = array<i64: 1, 128>}, {pipeline_mode = #tpu.pipeline_mode<synchronous>, transform_indices = @transform_6, window_bounds = array<i64: 512, 512>}, {pipeline_mode = #tpu.pipeline_mode<synchronous>, transform_indices = @transform_7, window_bounds = array<i64: 128, 512>}, {pipeline_mode = #tpu.pipeline_mode<synchronous>, transform_indices = @transform_8, window_bounds = array<i64: 1, 512>}, {pipeline_mode = #tpu.pipeline_mode<synchronous>, transform_indices = @transform_9, window_bounds = array<i64: 512, 1024>}, {pipeline_mode = #tpu.pipeline_mode<synchronous>, transform_indices = @transform_10, window_bounds = array<i64: 1, 1024>}, {transform_indices = @transform_11, window_bounds = array<i64: 4, 1024>}]} {
    %c0 = arith.constant 0 : index
    %c0_0 = arith.constant 0 : index
    %0 = vector.load %arg1[%c0, %c0_0] : memref<4x512xf32, #tpu.memory_space<vmem>>, vector<4x512xf32>
    %1 = arith.truncf %0 : vector<4x512xf32> to vector<4x512xbf16>
    %c0_1 = arith.constant 0 : index
    %c0_2 = arith.constant 0 : index
    %2 = vector.load %arg2[%c0_1, %c0_2] : memref<4x128xf32, #tpu.memory_space<vmem>>, vector<4x128xf32>
    %3 = arith.truncf %2 : vector<4x128xf32> to vector<4x128xbf16>
    %c0_3 = arith.constant 0 : index
    %c0_4 = arith.constant 0 : index
    %4 = vector.load %arg3[%c0_3, %c0_4] : memref<512x512xbf16, #tpu.memory_space<vmem>>, vector<512x512xbf16>
    %cst = arith.constant dense<0.000000e+00> : vector<4x512xf32>
    %5 = tpu.matmul %1, %4, %cst {dimension_numbers = #tpu.dot_dimension_numbers<[1], [0], [0], [1], [0, 0, 1, 1], [], []>} : vector<4x512xbf16>, vector<512x512xbf16>, vector<4x512xf32> -> vector<4x512xf32>
    %c0_5 = arith.constant 0 : index
    %c0_6 = arith.constant 0 : index
    %6 = vector.load %arg4[%c0_5, %c0_6] : memref<1x512xf32, #tpu.memory_space<vmem>>, vector<1x512xf32>
    %7 = vector.broadcast %6 : vector<1x512xf32> to vector<4x512xf32>
    %8 = arith.addf %5, %7 : vector<4x512xf32>
    %cst_7 = arith.constant 0.000000e+00 : f32
    %9 = vector.broadcast %cst_7 : f32 to vector<4x512xf32>
    %10 = arith.maximumf %8, %9 : vector<4x512xf32>
    %c0_8 = arith.constant 0 : index
    %c0_9 = arith.constant 0 : index
    %11 = vector.load %arg5[%c0_8, %c0_9] : memref<128x128xbf16, #tpu.memory_space<vmem>>, vector<128x128xbf16>
    %cst_10 = arith.constant dense<0.000000e+00> : vector<4x128xf32>
    %12 = tpu.matmul %3, %11, %cst_10 {dimension_numbers = #tpu.dot_dimension_numbers<[1], [0], [0], [1], [0, 0, 1, 1], [], []>} : vector<4x128xbf16>, vector<128x128xbf16>, vector<4x128xf32> -> vector<4x128xf32>
    %c0_11 = arith.constant 0 : index
    %c0_12 = arith.constant 0 : index
    %13 = vector.load %arg6[%c0_11, %c0_12] : memref<1x128xf32, #tpu.memory_space<vmem>>, vector<1x128xf32>
    %14 = vector.broadcast %13 : vector<1x128xf32> to vector<4x128xf32>
    %15 = arith.addf %12, %14 : vector<4x128xf32>
    %cst_13 = arith.constant 0.000000e+00 : f32
    %16 = vector.broadcast %cst_13 : f32 to vector<4x128xf32>
    %17 = arith.maximumf %15, %16 : vector<4x128xf32>
    %18 = arith.truncf %10 : vector<4x512xf32> to vector<4x512xbf16>
    %c0_14 = arith.constant 0 : index
    %c0_15 = arith.constant 0 : index
    %19 = vector.load %arg7[%c0_14, %c0_15] : memref<512x512xbf16, #tpu.memory_space<vmem>>, vector<512x512xbf16>
    %cst_16 = arith.constant dense<0.000000e+00> : vector<4x512xf32>
    %20 = tpu.matmul %18, %19, %cst_16 {dimension_numbers = #tpu.dot_dimension_numbers<[1], [0], [0], [1], [0, 0, 1, 1], [], []>} : vector<4x512xbf16>, vector<512x512xbf16>, vector<4x512xf32> -> vector<4x512xf32>
    %21 = arith.truncf %17 : vector<4x128xf32> to vector<4x128xbf16>
    %c0_17 = arith.constant 0 : index
    %c0_18 = arith.constant 0 : index
    %22 = vector.load %arg8[%c0_17, %c0_18] : memref<128x512xbf16, #tpu.memory_space<vmem>>, vector<128x512xbf16>
    %cst_19 = arith.constant dense<0.000000e+00> : vector<4x512xf32>
    %23 = tpu.matmul %21, %22, %cst_19 {dimension_numbers = #tpu.dot_dimension_numbers<[1], [0], [0], [1], [0, 0, 1, 1], [], []>} : vector<4x128xbf16>, vector<128x512xbf16>, vector<4x512xf32> -> vector<4x512xf32>
    %24 = arith.addf %20, %23 : vector<4x512xf32>
    %c0_20 = arith.constant 0 : index
    %c0_21 = arith.constant 0 : index
    %25 = vector.load %arg9[%c0_20, %c0_21] : memref<1x512xf32, #tpu.memory_space<vmem>>, vector<1x512xf32>
    %26 = vector.broadcast %25 : vector<1x512xf32> to vector<4x512xf32>
    %27 = arith.addf %24, %26 : vector<4x512xf32>
    %cst_22 = arith.constant 0.000000e+00 : f32
    %28 = vector.broadcast %cst_22 : f32 to vector<4x512xf32>
    %29 = arith.maximumf %27, %28 : vector<4x512xf32>
    %30 = arith.truncf %29 : vector<4x512xf32> to vector<4x512xbf16>
    %c0_23 = arith.constant 0 : index
    %c0_24 = arith.constant 0 : index
    %31 = vector.load %arg10[%c0_23, %c0_24] : memref<512x1024xbf16, #tpu.memory_space<vmem>>, vector<512x1024xbf16>
    %cst_25 = arith.constant dense<0.000000e+00> : vector<4x1024xf32>
    %32 = tpu.matmul %30, %31, %cst_25 {dimension_numbers = #tpu.dot_dimension_numbers<[1], [0], [0], [1], [0, 0, 1, 1], [], []>} : vector<4x512xbf16>, vector<512x1024xbf16>, vector<4x1024xf32> -> vector<4x1024xf32>
    %c0_26 = arith.constant 0 : index
    %c0_27 = arith.constant 0 : index
    %33 = vector.load %arg11[%c0_26, %c0_27] : memref<1x1024xf32, #tpu.memory_space<vmem>>, vector<1x1024xf32>
    %34 = vector.broadcast %33 : vector<1x1024xf32> to vector<4x1024xf32>
    %35 = arith.addf %32, %34 : vector<4x1024xf32>
    %cst_28 = arith.constant 0.000000e+00 : f32
    %36 = vector.broadcast %cst_28 : f32 to vector<4x1024xf32>
    %37 = arith.maximumf %35, %36 : vector<4x1024xf32>
    %c0_29 = arith.constant 0 : index
    %c0_30 = arith.constant 0 : index
    %38 = vector.load %arg12[%c0_29, %c0_30] : memref<4x1024xf32, #tpu.memory_space<vmem>>, vector<4x1024xf32>
    tpu.vector_store %arg12[%c0_29, %c0_30], %37 {strides = array<i32>} : memref<4x1024xf32, #tpu.memory_space<vmem>>, vector<4x1024xf32>,
    return
  }
  func.func @transform_0(%arg0: i32) -> (i32, i32) {
    %c0_i32 = arith.constant 0 : i32
    %c0_i32_0 = arith.constant 0 : i32
    return %arg0, %c0_i32 : i32, i32
  }
  func.func @transform_1(%arg0: i32) -> (i32, i32) {
    %c0_i32 = arith.constant 0 : i32
    %c0_i32_0 = arith.constant 0 : i32
    return %arg0, %c0_i32 : i32, i32
  }
  func.func @transform_2(%arg0: i32) -> (i32, i32) {
    %c0_i32 = arith.constant 0 : i32
    %c0_i32_0 = arith.constant 0 : i32
    %c0_i32_1 = arith.constant 0 : i32
    return %c0_i32, %c0_i32_0 : i32, i32
  }
  func.func @transform_3(%arg0: i32) -> (i32, i32) {
    %c0_i32 = arith.constant 0 : i32
    %c0_i32_0 = arith.constant 0 : i32
    %c0_i32_1 = arith.constant 0 : i32
    return %c0_i32, %c0_i32_0 : i32, i32
  }
  func.func @transform_4(%arg0: i32) -> (i32, i32) {
    %c0_i32 = arith.constant 0 : i32
    %c0_i32_0 = arith.constant 0 : i32
    %c0_i32_1 = arith.constant 0 : i32
    return %c0_i32, %c0_i32_0 : i32, i32
  }
  func.func @transform_5(%arg0: i32) -> (i32, i32) {
    %c0_i32 = arith.constant 0 : i32
    %c0_i32_0 = arith.constant 0 : i32
    %c0_i32_1 = arith.constant 0 : i32
    return %c0_i32, %c0_i32_0 : i32, i32
  }
  func.func @transform_6(%arg0: i32) -> (i32, i32) {
    %c0_i32 = arith.constant 0 : i32
    %c0_i32_0 = arith.constant 0 : i32
    %c0_i32_1 = arith.constant 0 : i32
    return %c0_i32, %c0_i32_0 : i32, i32
  }
  func.func @transform_7(%arg0: i32) -> (i32, i32) {
    %c0_i32 = arith.constant 0 : i32
    %c0_i32_0 = arith.constant 0 : i32
    %c0_i32_1 = arith.constant 0 : i32
    return %c0_i32, %c0_i32_0 : i32, i32
  }
  func.func @transform_8(%arg0: i32) -> (i32, i32) {
    %c0_i32 = arith.constant 0 : i32
    %c0_i32_0 = arith.constant 0 : i32
    %c0_i32_1 = arith.constant 0 : i32
    return %c0_i32, %c0_i32_0 : i32, i32
  }
  func.func @transform_9(%arg0: i32) -> (i32, i32) {
    %c0_i32 = arith.constant 0 : i32
    %c0_i32_0 = arith.constant 0 : i32
    %c0_i32_1 = arith.constant 0 : i32
    return %c0_i32, %c0_i32_0 : i32, i32
  }
  func.func @transform_10(%arg0: i32) -> (i32, i32) {
    %c0_i32 = arith.constant 0 : i32
    %c0_i32_0 = arith.constant 0 : i32
    %c0_i32_1 = arith.constant 0 : i32
    return %c0_i32, %c0_i32_0 : i32, i32
  }
  func.func @transform_11(%arg0: i32) -> (i32, i32) {
    %c0_i32 = arith.constant 0 : i32
    %c0_i32_0 = arith.constant 0 : i32
    return %arg0, %c0_i32 : i32, i32
  }
}

</mosaic_0001>

<llo_original>
// kernel: tpu_custom_call.1
$region0: #{tpu_custom_call.1}
  #allocation0 [shape = 'u32[]', space=smem, size = 0x4, offset = 0x4, fixed_abs, tag = 'smem constant byte address 0x4 - core index']
  #allocation1 [shape = 'u32[72,128]{1,0:T(1,128)}', space=vmem, size = 0x9000, scoped, tag = 'internal scratch']
  %s0 = inlined_call_operand.hbm [shape: f32[4,512], index: 0, kind: input, shape index: {}]
  %s1 = inlined_call_operand.hbm [shape: f32[4,128], index: 1, kind: input, shape index: {}]
  %s2 = inlined_call_operand.hbm [shape: bf16[512,512], index: 2, kind: input, shape index: {}]
  %s3 = inlined_call_operand.hbm [shape: f32[1,512], index: 3, kind: input, shape index: {}]
  %s4 = inlined_call_operand.hbm [shape: bf16[128,128], index: 4, kind: input, shape index: {}]
  %s5 = inlined_call_operand.vmem [shape: f32[1,128], index: 5, kind: input, shape index: {}]
  %s6 = inlined_call_operand.hbm [shape: bf16[512,512], index: 6, kind: input, shape index: {}]
  %s7 = inlined_call_operand.hbm [shape: bf16[128,512], index: 7, kind: input, shape index: {}]
  %s8 = inlined_call_operand.hbm [shape: f32[1,512], index: 8, kind: input, shape index: {}]
  %s9 = inlined_call_operand.hbm [shape: bf16[512,1024], index: 9, kind: input, shape index: {}]
  %s10 = inlined_call_operand.vmem [shape: f32[1,1024], index: 10, kind: input, shape index: {}]
  %s11 = inlined_call_operand.hbm [shape: f32[4,1024], index: 11, kind: output, shape index: {}]
  %s12 = sld [smem:[#allocation0]]
  $region90: #{tpu_custom_call.1} parent=0
    _
  %s14 = ssub.s32 1, %s12
  %s15 = scalar_select 0, %s14, %s12
  $region1: #{tpu_custom_call.1} parent=0
    #allocation2 [shape = 'u8[8192]{0}', space=vmem, size = 0x2000, scoped, tag = 'input window, operand 0, single buffered']
    #allocation3 [shape = 's32[1]{0}', space=sflag, size = 0x4, scoped, tag = 'scoped memory for tpu_custom_call.1']
    #allocation4 [shape = 's32[1]{0}', space=sflag, size = 0x4, scoped, tag = 'scoped memory for tpu_custom_call.1']
    #allocation5 [shape = 'u8[2048]{0}', space=vmem, size = 0x800, scoped, tag = 'input window, operand 1, single buffered']
    #allocation6 [shape = 's32[1]{0}', space=sflag, size = 0x4, scoped, tag = 'scoped memory for tpu_custom_call.1']
    #allocation7 [shape = 'u8[524288]{0}', space=vmem, size = 0x80000, scoped, tag = 'input window, operand 2, single buffered']
    #allocation8 [shape = 'u8[2048]{0}', space=vmem, size = 0x800, scoped, tag = 'input window, operand 3, single buffered']
    #allocation9 [shape = 's32[1]{0}', space=sflag, size = 0x4, scoped, tag = 'scoped memory for tpu_custom_call.1']
    #allocation10 [shape = 'u8[32768]{0}', space=vmem, size = 0x8000, scoped, tag = 'input window, operand 4, single buffered']
    #allocation11 [shape = 'u8[524288]{0}', space=vmem, size = 0x80000, scoped, tag = 'input window, operand 6, single buffered']
    #allocation12 [shape = 's32[1]{0}', space=sflag, size = 0x4, scoped, tag = 'scoped memory for tpu_custom_call.1']
    #allocation13 [shape = 'u8[131072]{0}', space=vmem, size = 0x20000, scoped, tag = 'input window, operand 7, single buffered']
    #allocation14 [shape = 'u8[2048]{0}', space=vmem, size = 0x800, scoped, tag = 'input window, operand 8, single buffered']
    #allocation15 [shape = 's32[1]{0}', space=sflag, size = 0x4, scoped, tag = 'scoped memory for tpu_custom_call.1']
    #allocation16 [shape = 'u8[1048576]{0}', space=vmem, size = 0x100000, scoped, tag = 'input window, operand 9, single buffered']
    #allocation17 [shape = 'u8[16384]{0}', space=vmem, size = 0x4000, scoped, tag = 'output window, operand 0, single buffered']
    %16 = vsyncpa [#allocation3], 0
    %17 = vsyncpa [#allocation6], 0
    %18 = vsyncpa [#allocation9], 0
    %19 = vsyncpa [#allocation12], 0
    %20 = vsyncpa [#allocation15], 0
    %21 = vsyncpa [#allocation4], 0
    // Predicated region
    $region2: #{tpu_custom_call.1} parent=1 // pred_check
      _
    $region3: #{tpu_custom_call.1} parent=1 // pred_check_branch
      %23 = sbr.rel (0) target = $region5
    $region4: #{tpu_custom_call.1} parent=1 // pred_region
      %25 = vsyncadd [#allocation3], 0
      %s27 = sshll.u32 %s0, 4
      %s28 = int_to_ptr.hbm [resolvable:$true] %s27
      %s29 = sshll.u32 [#allocation2], 4
      %s30 = int_to_ptr.vmem [resolvable:$true] %s29
      %32 = dma.hbm_to_vmem [thread:$0]  %s28, 256, %s30, [#allocation3]
    $region5: #{tpu_custom_call.1} parent=1 // pred_fallthru
      _
    // Predicated region
    $region6: #{tpu_custom_call.1} parent=1 // pred_check
      _
    $region7: #{tpu_custom_call.1} parent=1 // pred_check_branch
      %34 = sbr.rel (0) target = $region9
    $region8: #{tpu_custom_call.1} parent=1 // pred_region
      %36 = vsyncadd [#allocation6], 0
      %s38 = sshll.u32 %s1, 4
      %s39 = int_to_ptr.hbm [resolvable:$true] %s38
      %s40 = sshll.u32 [#allocation5], 4
      %s41 = int_to_ptr.vmem [resolvable:$true] %s40
      %43 = dma.hbm_to_vmem [thread:$0]  %s39, 64, %s41, [#allocation6]
    $region9: #{tpu_custom_call.1} parent=1 // pred_fallthru
      _
    // Predicated region
    $region10: #{tpu_custom_call.1} parent=1 // pred_check
      _
    $region11: #{tpu_custom_call.1} parent=1 // pred_check_branch
      %45 = sbr.rel (0) target = $region13
    $region12: #{tpu_custom_call.1} parent=1 // pred_region
      %47 = vsyncadd [#allocation6], 0
      %s48 = sshll.u32 %s2, 4
      %s49 = int_to_ptr.hbm [resolvable:$true] %s48
      %s50 = sshll.u32 [#allocation7], 4
      %s51 = int_to_ptr.vmem [resolvable:$true] %s50
      %56 = dma.hbm_to_vmem [thread:$0]  %s49, 16384, %s51, [#allocation6], 256, 256, 16
    $region13: #{tpu_custom_call.1} parent=1 // pred_fallthru
      _
    // Predicated region
    $region14: #{tpu_custom_call.1} parent=1 // pred_check
      _
    $region15: #{tpu_custom_call.1} parent=1 // pred_check_branch
      %58 = sbr.rel (0) target = $region17
    $region16: #{tpu_custom_call.1} parent=1 // pred_region
      %60 = vsyncadd [#allocation9], 0
      %s62 = sshll.u32 %s3, 4
      %s63 = int_to_ptr.hbm [resolvable:$true] %s62
      %s64 = sshll.u32 [#allocation8], 4
      %s65 = int_to_ptr.vmem [resolvable:$true] %s64
      %67 = dma.hbm_to_vmem [thread:$0]  %s63, 64, %s65, [#allocation9]
    $region17: #{tpu_custom_call.1} parent=1 // pred_fallthru
      _
    // Predicated region
    $region18: #{tpu_custom_call.1} parent=1 // pred_check
      _
    $region19: #{tpu_custom_call.1} parent=1 // pred_check_branch
      %69 = sbr.rel (0) target = $region21
    $region20: #{tpu_custom_call.1} parent=1 // pred_region
      %71 = vsyncadd [#allocation9], 0
      %s72 = sshll.u32 %s4, 4
      %s73 = int_to_ptr.hbm [resolvable:$true] %s72
      %s74 = sshll.u32 [#allocation10], 4
      %s75 = int_to_ptr.vmem [resolvable:$true] %s74
      %80 = dma.hbm_to_vmem [thread:$0]  %s73, 1024, %s75, [#allocation9], 64, 64, 4
    $region21: #{tpu_custom_call.1} parent=1 // pred_fallthru
      _
    // Predicated region
    $region22: #{tpu_custom_call.1} parent=1 // pred_check
      _
    $region23: #{tpu_custom_call.1} parent=1 // pred_check_branch
      %82 = sbr.rel (0) target = $region25
    $region24: #{tpu_custom_call.1} parent=1 // pred_region
      _
    $region25: #{tpu_custom_call.1} parent=1 // pred_fallthru
      _
    // Predicated region
    $region26: #{tpu_custom_call.1} parent=1 // pred_check
      _
    $region27: #{tpu_custom_call.1} parent=1 // pred_check_branch
      %84 = sbr.rel (0) target = $region29
    $region28: #{tpu_custom_call.1} parent=1 // pred_region
      %86 = vsyncadd [#allocation12], 0
      %s87 = sshll.u32 %s6, 4
      %s88 = int_to_ptr.hbm [resolvable:$true] %s87
      %s89 = sshll.u32 [#allocation11], 4
      %s90 = int_to_ptr.vmem [resolvable:$true] %s89
      %95 = dma.hbm_to_vmem [thread:$0]  %s88, 16384, %s90, [#allocation12], 256, 256, 16
    $region29: #{tpu_custom_call.1} parent=1 // pred_fallthru
      _
    // Predicated region
    $region30: #{tpu_custom_call.1} parent=1 // pred_check
      _
    $region31: #{tpu_custom_call.1} parent=1 // pred_check_branch
      %97 = sbr.rel (0) target = $region33
    $region32: #{tpu_custom_call.1} parent=1 // pred_region
      %99 = vsyncadd [#allocation12], 0
      %s100 = sshll.u32 %s7, 4
      %s101 = int_to_ptr.hbm [resolvable:$true] %s100
      %s102 = sshll.u32 [#allocation13], 4
      %s103 = int_to_ptr.vmem [resolvable:$true] %s102
      %108 = dma.hbm_to_vmem [thread:$0]  %s101, 4096, %s103, [#allocation12], 256, 256, 16
    $region33: #{tpu_custom_call.1} parent=1 // pred_fallthru
      _
    // Predicated region
    $region34: #{tpu_custom_call.1} parent=1 // pred_check
      _
    $region35: #{tpu_custom_call.1} parent=1 // pred_check_branch
      %110 = sbr.rel (0) target = $region37
    $region36: #{tpu_custom_call.1} parent=1 // pred_region
      %112 = vsyncadd [#allocation15], 0
      %s114 = sshll.u32 %s8, 4
      %s115 = int_to_ptr.hbm [resolvable:$true] %s114
      %s116 = sshll.u32 [#allocation14], 4
      %s117 = int_to_ptr.vmem [resolvable:$true] %s116
      %119 = dma.hbm_to_vmem [thread:$0]  %s115, 64, %s117, [#allocation15]
    $region37: #{tpu_custom_call.1} parent=1 // pred_fallthru
      _
    // Predicated region
    $region38: #{tpu_custom_call.1} parent=1 // pred_check
      _
    $region39: #{tpu_custom_call.1} parent=1 // pred_check_branch
      %121 = sbr.rel (0) target = $region41
    $region40: #{tpu_custom_call.1} parent=1 // pred_region
      %123 = vsyncadd [#allocation15], 0
      %s124 = sshll.u32 %s9, 4
      %s125 = int_to_ptr.hbm [resolvable:$true] %s124
      %s126 = sshll.u32 [#allocation16], 4
      %s127 = int_to_ptr.vmem [resolvable:$true] %s126
      %132 = dma.hbm_to_vmem [thread:$0]  %s125, 32768, %s127, [#allocation15], 512, 512, 32
    $region41: #{tpu_custom_call.1} parent=1 // pred_fallthru
      _
    // Predicated region
    $region42: #{tpu_custom_call.1} parent=1 // pred_check
      _
    $region43: #{tpu_custom_call.1} parent=1 // pred_check_branch
      %134 = sbr.rel (0) target = $region45
    $region44: #{tpu_custom_call.1} parent=1 // pred_region
      _
    $region45: #{tpu_custom_call.1} parent=1 // pred_fallthru
      _
    // Predicated region
    $region46: #{tpu_custom_call.1} parent=1 // pred_check
      _
    $region47: #{tpu_custom_call.1} parent=1 // pred_check_branch
      %136 = sbr.rel (0) target = $region49
    $region48: #{tpu_custom_call.1} parent=1 // pred_region
      %138 = dma.done [#allocation3], 256
    $region49: #{tpu_custom_call.1} parent=1 // pred_fallthru
      _
    // Predicated region
    $region50: #{tpu_custom_call.1} parent=1 // pred_check
      _
    $region51: #{tpu_custom_call.1} parent=1 // pred_check_branch
      %140 = sbr.rel (0) target = $region53
    $region52: #{tpu_custom_call.1} parent=1 // pred_region
      %142 = dma.done [#allocation6], 64
    $region53: #{tpu_custom_call.1} parent=1 // pred_fallthru
      _
    // Predicated region
    $region54: #{tpu_custom_call.1} parent=1 // pred_check
      _
    $region55: #{tpu_custom_call.1} parent=1 // pred_check_branch
      %144 = sbr.rel (0) target = $region57
    $region56: #{tpu_custom_call.1} parent=1 // pred_region
      %146 = dma.done [#allocation6], 16384
    $region57: #{tpu_custom_call.1} parent=1 // pred_fallthru
      _
    // Predicated region
    $region58: #{tpu_custom_call.1} parent=1 // pred_check
      _
    $region59: #{tpu_custom_call.1} parent=1 // pred_check_branch
      %148 = sbr.rel (0) target = $region61
    $region60: #{tpu_custom_call.1} parent=1 // pred_region
      %150 = dma.done [#allocation9], 64
    $region61: #{tpu_custom_call.1} parent=1 // pred_fallthru
      _
    // Predicated region
    $region62: #{tpu_custom_call.1} parent=1 // pred_check
      _
    $region63: #{tpu_custom_call.1} parent=1 // pred_check_branch
      %152 = sbr.rel (0) target = $region65
    $region64: #{tpu_custom_call.1} parent=1 // pred_region
      %154 = dma.done [#allocation9], 1024
    $region65: #{tpu_custom_call.1} parent=1 // pred_fallthru
      _
    // Predicated region
    $region66: #{tpu_custom_call.1} parent=1 // pred_check
      _
    $region67: #{tpu_custom_call.1} parent=1 // pred_check_branch
      %156 = sbr.rel (0) target = $region69
    $region68: #{tpu_custom_call.1} parent=1 // pred_region
      %158 = dma.done [#allocation12], 16384
    $region69: #{tpu_custom_call.1} parent=1 // pred_fallthru
      _
    // Predicated region
    $region70: #{tpu_custom_call.1} parent=1 // pred_check
      _
    $region71: #{tpu_custom_call.1} parent=1 // pred_check_branch
      %160 = sbr.rel (0) target = $region73
    $region72: #{tpu_custom_call.1} parent=1 // pred_region
      %162 = dma.done [#allocation12], 4096
    $region73: #{tpu_custom_call.1} parent=1 // pred_fallthru
      _
    // Predicated region
    $region74: #{tpu_custom_call.1} parent=1 // pred_check
      _
    $region75: #{tpu_custom_call.1} parent=1 // pred_check_branch
      %164 = sbr.rel (0) target = $region77
    $region76: #{tpu_custom_call.1} parent=1 // pred_region
      %166 = dma.done [#allocation15], 64
    $region77: #{tpu_custom_call.1} parent=1 // pred_fallthru
      _
    // Predicated region
    $region78: #{tpu_custom_call.1} parent=1 // pred_check
      _
    $region79: #{tpu_custom_call.1} parent=1 // pred_check_branch
      %168 = sbr.rel (0) target = $region81
    $region80: #{tpu_custom_call.1} parent=1 // pred_region
      %170 = dma.done [#allocation15], 32768
    $region81: #{tpu_custom_call.1} parent=1 // pred_fallthru
      _
    %v171 = vld [vmem:[#allocation2] sm:$0xff]
    %v172 = vld [vmem:[#allocation2 + $0x8] sm:$0xff]
    %175 = vst [vmem:[#allocation1] ss:$2 sm:$0xff] %v171
    %s176 = scalar_lea.vmem [#allocation1], 16
    %177 = vst [vmem:[%s176] ss:$2 sm:$0xff] %v172
    %v178 = vld.sshfl [vmem:[#allocation1] sm:$0xff pattern:$0x75316420]
    %v179 = vld.sshfl [vmem:[#allocation1 + $0x8] sm:$0xff pattern:$0x75316420]
    %v180 = vld.sshfl [vmem:[#allocation1 + $0x10] sm:$0xff pattern:$0x75316420]
    %v181 = vld.sshfl [vmem:[#allocation1 + $0x18] sm:$0xff pattern:$0x75316420]
    %v186 = vpack.c.bf16 %v178, %v178
    %v187 = vpack.c.bf16 %v179, %v179
    %v188 = vpack.c.bf16 %v180, %v180
    %v189 = vpack.c.bf16 %v181, %v181
    %v190 = vld [vmem:[#allocation5] sm:$0xf]
    %v191 = vpack.c.bf16 %v190, %v190
    %v192 = vld [vmem:[#allocation7] sm:$0xff]
    %v193 = vld [vmem:[#allocation7 + $0x8] sm:$0xff]
    %v194 = vld [vmem:[#allocation7 + $0x10] sm:$0xff]
    %v195 = vld [vmem:[#allocation7 + $0x18] sm:$0xff]
    %v196 = vld [vmem:[#allocation7 + $0x20] sm:$0xff]
    %v197 = vld [vmem:[#allocation7 + $0x28] sm:$0xff]
    %v198 = vld [vmem:[#allocation7 + $0x30] sm:$0xff]
    %v199 = vld [vmem:[#allocation7 + $0x38] sm:$0xff]
    %v200 = vld [vmem:[#allocation7 + $0x40] sm:$0xff]
    %v201 = vld [vmem:[#allocation7 + $0x48] sm:$0xff]
    %v202 = vld [vmem:[#allocation7 + $0x50] sm:$0xff]
    %v203 = vld [vmem:[#allocation7 + $0x58] sm:$0xff]
    %v204 = vld [vmem:[#allocation7 + $0x60] sm:$0xff]
    %v205 = vld [vmem:[#allocation7 + $0x68] sm:$0xff]
    %v206 = vld [vmem:[#allocation7 + $0x70] sm:$0xff]
    %v207 = vld [vmem:[#allocation7 + $0x78] sm:$0xff]
    %v208 = vld [vmem:[#allocation7 + $0x80] sm:$0xff]
    %v209 = vld [vmem:[#allocation7 + $0x88] sm:$0xff]
    %v210 = vld [vmem:[#allocation7 + $0x90] sm:$0xff]
    %v211 = vld [vmem:[#allocation7 + $0x98] sm:$0xff]
    %v212 = vld [vmem:[#allocation7 + $0xa0] sm:$0xff]
    %v213 = vld [vmem:[#allocation7 + $0xa8] sm:$0xff]
    %v214 = vld [vmem:[#allocation7 + $0xb0] sm:$0xff]
    %v215 = vld [vmem:[#allocation7 + $0xb8] sm:$0xff]
    %v216 = vld [vmem:[#allocation7 + $0xc0] sm:$0xff]
    %v217 = vld [vmem:[#allocation7 + $0xc8] sm:$0xff]
    %v218 = vld [vmem:[#allocation7 + $0xd0] sm:$0xff]
    %v219 = vld [vmem:[#allocation7 + $0xd8] sm:$0xff]
    %v220 = vld [vmem:[#allocation7 + $0xe0] sm:$0xff]
    %v221 = vld [vmem:[#allocation7 + $0xe8] sm:$0xff]
    %v222 = vld [vmem:[#allocation7 + $0xf0] sm:$0xff]
    %v223 = vld [vmem:[#allocation7 + $0xf8] sm:$0xff]
    %v224 = vld [vmem:[#allocation7 + $0x100] sm:$0xff]
    %v225 = vld [vmem:[#allocation7 + $0x108] sm:$0xff]
    %v226 = vld [vmem:[#allocation7 + $0x110] sm:$0xff]
    %v227 = vld [vmem:[#allocation7 + $0x118] sm:$0xff]
    %v228 = vld [vmem:[#allocation7 + $0x120] sm:$0xff]
    %v229 = vld [vmem:[#allocation7 + $0x128] sm:$0xff]
    %v230 = vld [vmem:[#allocation7 + $0x130] sm:$0xff]
    %v231 = vld [vmem:[#allocation7 + $0x138] sm:$0xff]
    %v232 = vld [vmem:[#allocation7 + $0x140] sm:$0xff]
    %v233 = vld [vmem:[#allocation7 + $0x148] sm:$0xff]
    %v234 = vld [vmem:[#allocation7 + $0x150] sm:$0xff]
    %v235 = vld [vmem:[#allocation7 + $0x158] sm:$0xff]
    %v236 = vld [vmem:[#allocation7 + $0x160] sm:$0xff]
    %v237 = vld [vmem:[#allocation7 + $0x168] sm:$0xff]
    %v238 = vld [vmem:[#allocation7 + $0x170] sm:$0xff]
    %v239 = vld [vmem:[#allocation7 + $0x178] sm:$0xff]
    %v240 = vld [vmem:[#allocation7 + $0x180] sm:$0xff]
    %v241 = vld [vmem:[#allocation7 + $0x188] sm:$0xff]
    %v242 = vld [vmem:[#allocation7 + $0x190] sm:$0xff]
    %v243 = vld [vmem:[#allocation7 + $0x198] sm:$0xff]
    %v244 = vld [vmem:[#allocation7 + $0x1a0] sm:$0xff]
    %v245 = vld [vmem:[#allocation7 + $0x1a8] sm:$0xff]
    %v246 = vld [vmem:[#allocation7 + $0x1b0] sm:$0xff]
    %v247 = vld [vmem:[#allocation7 + $0x1b8] sm:$0xff]
    %v248 = vld [vmem:[#allocation7 + $0x1c0] sm:$0xff]
    %v249 = vld [vmem:[#allocation7 + $0x1c8] sm:$0xff]
    %v250 = vld [vmem:[#allocation7 + $0x1d0] sm:$0xff]
    %v251 = vld [vmem:[#allocation7 + $0x1d8] sm:$0xff]
    %v252 = vld [vmem:[#allocation7 + $0x1e0] sm:$0xff]
    %v253 = vld [vmem:[#allocation7 + $0x1e8] sm:$0xff]
    %v254 = vld [vmem:[#allocation7 + $0x1f0] sm:$0xff]
    %v255 = vld [vmem:[#allocation7 + $0x1f8] sm:$0xff]
    %v256 = vld [vmem:[#allocation7 + $0x200] sm:$0xff]
    %v257 = vld [vmem:[#allocation7 + $0x208] sm:$0xff]
    %v258 = vld [vmem:[#allocation7 + $0x210] sm:$0xff]
    %v259 = vld [vmem:[#allocation7 + $0x218] sm:$0xff]
    %v260 = vld [vmem:[#allocation7 + $0x220] sm:$0xff]
    %v261 = vld [vmem:[#allocation7 + $0x228] sm:$0xff]
    %v262 = vld [vmem:[#allocation7 + $0x230] sm:$0xff]
    %v263 = vld [vmem:[#allocation7 + $0x238] sm:$0xff]
    %v264 = vld [vmem:[#allocation7 + $0x240] sm:$0xff]
    %v265 = vld [vmem:[#allocation7 + $0x248] sm:$0xff]
    %v266 = vld [vmem:[#allocation7 + $0x250] sm:$0xff]
    %v267 = vld [vmem:[#allocation7 + $0x258] sm:$0xff]
    %v268 = vld [vmem:[#allocation7 + $0x260] sm:$0xff]
    %v269 = vld [vmem:[#allocation7 + $0x268] sm:$0xff]
    %v270 = vld [vmem:[#allocation7 + $0x270] sm:$0xff]
    %v271 = vld [vmem:[#allocation7 + $0x278] sm:$0xff]
    %v272 = vld [vmem:[#allocation7 + $0x280] sm:$0xff]
    %v273 = vld [vmem:[#allocation7 + $0x288] sm:$0xff]
    %v274 = vld [vmem:[#allocation7 + $0x290] sm:$0xff]
    %v275 = vld [vmem:[#allocation7 + $0x298] sm:$0xff]
    %v276 = vld [vmem:[#allocation7 + $0x2a0] sm:$0xff]
    %v277 = vld [vmem:[#allocation7 + $0x2a8] sm:$0xff]
    %v278 = vld [vmem:[#allocation7 + $0x2b0] sm:$0xff]
    %v279 = vld [vmem:[#allocation7 + $0x2b8] sm:$0xff]
    %v280 = vld [vmem:[#allocation7 + $0x2c0] sm:$0xff]
    %v281 = vld [vmem:[#allocation7 + $0x2c8] sm:$0xff]
    %v282 = vld [vmem:[#allocation7 + $0x2d0] sm:$0xff]
    %v283 = vld [vmem:[#allocation7 + $0x2d8] sm:$0xff]
    %v284 = vld [vmem:[#allocation7 + $0x2e0] sm:$0xff]
    %v285 = vld [vmem:[#allocation7 + $0x2e8] sm:$0xff]
    %v286 = vld [vmem:[#allocation7 + $0x2f0] sm:$0xff]
    %v287 = vld [vmem:[#allocation7 + $0x2f8] sm:$0xff]
    %v288 = vld [vmem:[#allocation7 + $0x300] sm:$0xff]
    %v289 = vld [vmem:[#allocation7 + $0x308] sm:$0xff]
    %v290 = vld [vmem:[#allocation7 + $0x310] sm:$0xff]
    %v291 = vld [vmem:[#allocation7 + $0x318] sm:$0xff]
    %v292 = vld [vmem:[#allocation7 + $0x320] sm:$0xff]
    %v293 = vld [vmem:[#allocation7 + $0x328] sm:$0xff]
    %v294 = vld [vmem:[#allocation7 + $0x330] sm:$0xff]
    %v295 = vld [vmem:[#allocation7 + $0x338] sm:$0xff]
    %v296 = vld [vmem:[#allocation7 + $0x340] sm:$0xff]
    %v297 = vld [vmem:[#allocation7 + $0x348] sm:$0xff]
    %v298 = vld [vmem:[#allocation7 + $0x350] sm:$0xff]
    %v299 = vld [vmem:[#allocation7 + $0x358] sm:$0xff]
    %v300 = vld [vmem:[#allocation7 + $0x360] sm:$0xff]
    %v301 = vld [vmem:[#allocation7 + $0x368] sm:$0xff]
    %v302 = vld [vmem:[#allocation7 + $0x370] sm:$0xff]
    %v303 = vld [vmem:[#allocation7 + $0x378] sm:$0xff]
    %v304 = vld [vmem:[#allocation7 + $0x380] sm:$0xff]
    %v305 = vld [vmem:[#allocation7 + $0x388] sm:$0xff]
    %v306 = vld [vmem:[#allocation7 + $0x390] sm:$0xff]
    %v307 = vld [vmem:[#allocation7 + $0x398] sm:$0xff]
    %v308 = vld [vmem:[#allocation7 + $0x3a0] sm:$0xff]
    %v309 = vld [vmem:[#allocation7 + $0x3a8] sm:$0xff]
    %v310 = vld [vmem:[#allocation7 + $0x3b0] sm:$0xff]
    %v311 = vld [vmem:[#allocation7 + $0x3b8] sm:$0xff]
    %v312 = vld [vmem:[#allocation7 + $0x3c0] sm:$0xff]
    %v313 = vld [vmem:[#allocation7 + $0x3c8] sm:$0xff]
    %v314 = vld [vmem:[#allocation7 + $0x3d0] sm:$0xff]
    %v315 = vld [vmem:[#allocation7 + $0x3d8] sm:$0xff]
    %v316 = vld [vmem:[#allocation7 + $0x3e0] sm:$0xff]
    %v317 = vld [vmem:[#allocation7 + $0x3e8] sm:$0xff]
    %v318 = vld [vmem:[#allocation7 + $0x3f0] sm:$0xff]
    %v319 = vld [vmem:[#allocation7 + $0x3f8] sm:$0xff]
    %v320 = vld [vmem:[#allocation8] sm:$0xf]
    %v322 = vperm.slane %v320, 0
    %v323 = vperm.slane %v320, 1
    %v324 = vperm.slane %v320, 2
    %v325 = vperm.slane %v320, 3
    %v458 = vunpack.c.l.b16 %v192
    %v459 = vunpack.c.h.b16 %v192
    %v460 = vunpack.c.l.b16 %v193
    %v461 = vunpack.c.h.b16 %v193
    %v462 = vunpack.c.l.b16 %v194
    %v463 = vunpack.c.h.b16 %v194
    %v464 = vunpack.c.l.b16 %v195
    %v465 = vunpack.c.h.b16 %v195
    %v466 = vunpack.c.l.b16 %v196
    %v467 = vunpack.c.h.b16 %v196
    %v468 = vunpack.c.l.b16 %v197
    %v469 = vunpack.c.h.b16 %v197
    %v470 = vunpack.c.l.b16 %v198
    %v471 = vunpack.c.h.b16 %v198
    %v472 = vunpack.c.l.b16 %v199
    %v473 = vunpack.c.h.b16 %v199
    %v474 = vunpack.c.l.b16 %v200
    %v475 = vunpack.c.h.b16 %v200
    %v476 = vunpack.c.l.b16 %v201
    %v477 = vunpack.c.h.b16 %v201
    %v478 = vunpack.c.l.b16 %v202
    %v479 = vunpack.c.h.b16 %v202
    %v480 = vunpack.c.l.b16 %v203
    %v481 = vunpack.c.h.b16 %v203
    %v482 = vunpack.c.l.b16 %v204
    %v483 = vunpack.c.h.b16 %v204
    %v484 = vunpack.c.l.b16 %v205
    %v485 = vunpack.c.h.b16 %v205
    %v486 = vunpack.c.l.b16 %v206
    %v487 = vunpack.c.h.b16 %v206
    %v488 = vunpack.c.l.b16 %v207
    %v489 = vunpack.c.h.b16 %v207
    %v490 = vunpack.c.l.b16 %v208
    %v491 = vunpack.c.h.b16 %v208
    %v492 = vunpack.c.l.b16 %v209
    %v493 = vunpack.c.h.b16 %v209
    %v494 = vunpack.c.l.b16 %v210
    %v495 = vunpack.c.h.b16 %v210
    %v496 = vunpack.c.l.b16 %v211
    %v497 = vunpack.c.h.b16 %v211
    %v498 = vunpack.c.l.b16 %v212
    %v499 = vunpack.c.h.b16 %v212
    %v500 = vunpack.c.l.b16 %v213
    %v501 = vunpack.c.h.b16 %v213
    %v502 = vunpack.c.l.b16 %v214
    %v503 = vunpack.c.h.b16 %v214
    %v504 = vunpack.c.l.b16 %v215
    %v505 = vunpack.c.h.b16 %v215
    %v506 = vunpack.c.l.b16 %v216
    %v507 = vunpack.c.h.b16 %v216
    %v508 = vunpack.c.l.b16 %v217
    %v509 = vunpack.c.h.b16 %v217
    %v510 = vunpack.c.l.b16 %v218
    %v511 = vunpack.c.h.b16 %v218
    %v512 = vunpack.c.l.b16 %v219
    %v513 = vunpack.c.h.b16 %v219
    %v514 = vunpack.c.l.b16 %v220
    %v515 = vunpack.c.h.b16 %v220
    %v516 = vunpack.c.l.b16 %v221
    %v517 = vunpack.c.h.b16 %v221
    %v518 = vunpack.c.l.b16 %v222
    %v519 = vunpack.c.h.b16 %v222
    %v520 = vunpack.c.l.b16 %v223
    %v521 = vunpack.c.h.b16 %v223
    %v522 = vunpack.c.l.b16 %v224
    %v523 = vunpack.c.h.b16 %v224
    %v524 = vunpack.c.l.b16 %v225
    %v525 = vunpack.c.h.b16 %v225
    %v526 = vunpack.c.l.b16 %v226
    %v527 = vunpack.c.h.b16 %v226
    %v528 = vunpack.c.l.b16 %v227
    %v529 = vunpack.c.h.b16 %v227
    %v530 = vunpack.c.l.b16 %v228
    %v531 = vunpack.c.h.b16 %v228
    %v532 = vunpack.c.l.b16 %v229
    %v533 = vunpack.c.h.b16 %v229
    %v534 = vunpack.c.l.b16 %v230
    %v535 = vunpack.c.h.b16 %v230
    %v536 = vunpack.c.l.b16 %v231
    %v537 = vunpack.c.h.b16 %v231
    %v538 = vunpack.c.l.b16 %v232
    %v539 = vunpack.c.h.b16 %v232
    %v540 = vunpack.c.l.b16 %v233
    %v541 = vunpack.c.h.b16 %v233
    %v542 = vunpack.c.l.b16 %v234
    %v543 = vunpack.c.h.b16 %v234
    %v544 = vunpack.c.l.b16 %v235
    %v545 = vunpack.c.h.b16 %v235
    %v546 = vunpack.c.l.b16 %v236
    %v547 = vunpack.c.h.b16 %v236
    %v548 = vunpack.c.l.b16 %v237
    %v549 = vunpack.c.h.b16 %v237
    %v550 = vunpack.c.l.b16 %v238
    %v551 = vunpack.c.h.b16 %v238
    %v552 = vunpack.c.l.b16 %v239
    %v553 = vunpack.c.h.b16 %v239
    %v554 = vunpack.c.l.b16 %v240
    %v555 = vunpack.c.h.b16 %v240
    %v556 = vunpack.c.l.b16 %v241
    %v557 = vunpack.c.h.b16 %v241
    %v558 = vunpack.c.l.b16 %v242
    %v559 = vunpack.c.h.b16 %v242
    %v560 = vunpack.c.l.b16 %v243
    %v561 = vunpack.c.h.b16 %v243
    %v562 = vunpack.c.l.b16 %v244
    %v563 = vunpack.c.h.b16 %v244
    %v564 = vunpack.c.l.b16 %v245
    %v565 = vunpack.c.h.b16 %v245
    %v566 = vunpack.c.l.b16 %v246
    %v567 = vunpack.c.h.b16 %v246
    %v568 = vunpack.c.l.b16 %v247
    %v569 = vunpack.c.h.b16 %v247
    %v570 = vunpack.c.l.b16 %v248
    %v571 = vunpack.c.h.b16 %v248
    %v572 = vunpack.c.l.b16 %v249
    %v573 = vunpack.c.h.b16 %v249
    %v574 = vunpack.c.l.b16 %v250
    %v575 = vunpack.c.h.b16 %v250
    %v576 = vunpack.c.l.b16 %v251
    %v577 = vunpack.c.h.b16 %v251
    %v578 = vunpack.c.l.b16 %v252
    %v579 = vunpack.c.h.b16 %v252
    %v580 = vunpack.c.l.b16 %v253
    %v581 = vunpack.c.h.b16 %v253
    %v582 = vunpack.c.l.b16 %v254
    %v583 = vunpack.c.h.b16 %v254
    %v584 = vunpack.c.l.b16 %v255
    %v585 = vunpack.c.h.b16 %v255
    %v586 = vunpack.c.l.b16 %v256
    %v587 = vunpack.c.h.b16 %v256
    %v588 = vunpack.c.l.b16 %v257
    %v589 = vunpack.c.h.b16 %v257
    %v590 = vunpack.c.l.b16 %v258
    %v591 = vunpack.c.h.b16 %v258
    %v592 = vunpack.c.l.b16 %v259
    %v593 = vunpack.c.h.b16 %v259
    %v594 = vunpack.c.l.b16 %v260
    %v595 = vunpack.c.h.b16 %v260
    %v596 = vunpack.c.l.b16 %v261
    %v597 = vunpack.c.h.b16 %v261
    %v598 = vunpack.c.l.b16 %v262
    %v599 = vunpack.c.h.b16 %v262
    %v600 = vunpack.c.l.b16 %v263
    %v601 = vunpack.c.h.b16 %v263
    %v602 = vunpack.c.l.b16 %v264
    %v603 = vunpack.c.h.b16 %v264
    %v604 = vunpack.c.l.b16 %v265
    %v605 = vunpack.c.h.b16 %v265
    %v606 = vunpack.c.l.b16 %v266
    %v607 = vunpack.c.h.b16 %v266
    %v608 = vunpack.c.l.b16 %v267
    %v609 = vunpack.c.h.b16 %v267
    %v610 = vunpack.c.l.b16 %v268
    %v611 = vunpack.c.h.b16 %v268
    %v612 = vunpack.c.l.b16 %v269
    %v613 = vunpack.c.h.b16 %v269
    %v614 = vunpack.c.l.b16 %v270
    %v615 = vunpack.c.h.b16 %v270
    %v616 = vunpack.c.l.b16 %v271
    %v617 = vunpack.c.h.b16 %v271
    %v618 = vunpack.c.l.b16 %v272
    %v619 = vunpack.c.h.b16 %v272
    %v620 = vunpack.c.l.b16 %v273
    %v621 = vunpack.c.h.b16 %v273
    %v622 = vunpack.c.l.b16 %v274
    %v623 = vunpack.c.h.b16 %v274
    %v624 = vunpack.c.l.b16 %v275
    %v625 = vunpack.c.h.b16 %v275
    %v626 = vunpack.c.l.b16 %v276
    %v627 = vunpack.c.h.b16 %v276
    %v628 = vunpack.c.l.b16 %v277
    %v629 = vunpack.c.h.b16 %v277
    %v630 = vunpack.c.l.b16 %v278
    %v631 = vunpack.c.h.b16 %v278
    %v632 = vunpack.c.l.b16 %v279
    %v633 = vunpack.c.h.b16 %v279
    %v634 = vunpack.c.l.b16 %v280
    %v635 = vunpack.c.h.b16 %v280
    %v636 = vunpack.c.l.b16 %v281
    %v637 = vunpack.c.h.b16 %v281
    %v638 = vunpack.c.l.b16 %v282
    %v639 = vunpack.c.h.b16 %v282
    %v640 = vunpack.c.l.b16 %v283
    %v641 = vunpack.c.h.b16 %v283
    %v642 = vunpack.c.l.b16 %v284
    %v643 = vunpack.c.h.b16 %v284
    %v644 = vunpack.c.l.b16 %v285
    %v645 = vunpack.c.h.b16 %v285
    %v646 = vunpack.c.l.b16 %v286
    %v647 = vunpack.c.h.b16 %v286
    %v648 = vunpack.c.l.b16 %v287
    %v649 = vunpack.c.h.b16 %v287
    %v650 = vunpack.c.l.b16 %v288
    %v651 = vunpack.c.h.b16 %v288
    %v652 = vunpack.c.l.b16 %v289
    %v653 = vunpack.c.h.b16 %v289
    %v654 = vunpack.c.l.b16 %v290
    %v655 = vunpack.c.h.b16 %v290
    %v656 = vunpack.c.l.b16 %v291
    %v657 = vunpack.c.h.b16 %v291
    %v658 = vunpack.c.l.b16 %v292
    %v659 = vunpack.c.h.b16 %v292
    %v660 = vunpack.c.l.b16 %v293
    %v661 = vunpack.c.h.b16 %v293
    %v662 = vunpack.c.l.b16 %v294
    %v663 = vunpack.c.h.b16 %v294
    %v664 = vunpack.c.l.b16 %v295
    %v665 = vunpack.c.h.b16 %v295
    %v666 = vunpack.c.l.b16 %v296
    %v667 = vunpack.c.h.b16 %v296
    %v668 = vunpack.c.l.b16 %v297
    %v669 = vunpack.c.h.b16 %v297
    %v670 = vunpack.c.l.b16 %v298
    %v671 = vunpack.c.h.b16 %v298
    %v672 = vunpack.c.l.b16 %v299
    %v673 = vunpack.c.h.b16 %v299
    %v674 = vunpack.c.l.b16 %v300
    %v675 = vunpack.c.h.b16 %v300
    %v676 = vunpack.c.l.b16 %v301
    %v677 = vunpack.c.h.b16 %v301
    %v678 = vunpack.c.l.b16 %v302
    %v679 = vunpack.c.h.b16 %v302
    %v680 = vunpack.c.l.b16 %v303
    %v681 = vunpack.c.h.b16 %v303
    %v682 = vunpack.c.l.b16 %v304
    %v683 = vunpack.c.h.b16 %v304
    %v684 = vunpack.c.l.b16 %v305
    %v685 = vunpack.c.h.b16 %v305
    %v686 = vunpack.c.l.b16 %v306
    %v687 = vunpack.c.h.b16 %v306
    %v688 = vunpack.c.l.b16 %v307
    %v689 = vunpack.c.h.b16 %v307
    %v690 = vunpack.c.l.b16 %v308
    %v691 = vunpack.c.h.b16 %v308
    %v692 = vunpack.c.l.b16 %v309
    %v693 = vunpack.c.h.b16 %v309
    %v694 = vunpack.c.l.b16 %v310
    %v695 = vunpack.c.h.b16 %v310
    %v696 = vunpack.c.l.b16 %v311
    %v697 = vunpack.c.h.b16 %v311
    %v698 = vunpack.c.l.b16 %v312
    %v699 = vunpack.c.h.b16 %v312
    %v700 = vunpack.c.l.b16 %v313
    %v701 = vunpack.c.h.b16 %v313
    %v702 = vunpack.c.l.b16 %v314
    %v703 = vunpack.c.h.b16 %v314
    %v704 = vunpack.c.l.b16 %v315
    %v705 = vunpack.c.h.b16 %v315
    %v706 = vunpack.c.l.b16 %v316
    %v707 = vunpack.c.h.b16 %v316
    %v708 = vunpack.c.l.b16 %v317
    %v709 = vunpack.c.h.b16 %v317
    %v710 = vunpack.c.l.b16 %v318
    %v711 = vunpack.c.h.b16 %v318
    %v712 = vunpack.c.l.b16 %v319
    %v713 = vunpack.c.h.b16 %v319
    %v714 = vpack.c.b16 %v462, %v458
    %v715 = vpack.c.b16 %v463, %v459
    %v716 = vpack.c.b16 %v464, %v460
    %v717 = vpack.c.b16 %v465, %v461
    %v718 = vpack.c.b16 %v470, %v466
    %v719 = vpack.c.b16 %v471, %v467
    %v720 = vpack.c.b16 %v472, %v468
    %v721 = vpack.c.b16 %v473, %v469
    %v722 = vpack.c.b16 %v478, %v474
    %v723 = vpack.c.b16 %v479, %v475
    %v724 = vpack.c.b16 %v480, %v476
    %v725 = vpack.c.b16 %v481, %v477
    %v726 = vpack.c.b16 %v486, %v482
    %v727 = vpack.c.b16 %v487, %v483
    %v728 = vpack.c.b16 %v488, %v484
    %v729 = vpack.c.b16 %v489, %v485
    %v730 = vpack.c.b16 %v494, %v490
    %v731 = vpack.c.b16 %v495, %v491
    %v732 = vpack.c.b16 %v496, %v492
    %v733 = vpack.c.b16 %v497, %v493
    %v734 = vpack.c.b16 %v502, %v498
    %v735 = vpack.c.b16 %v503, %v499
    %v736 = vpack.c.b16 %v504, %v500
    %v737 = vpack.c.b16 %v505, %v501
    %v738 = vpack.c.b16 %v510, %v506
    %v739 = vpack.c.b16 %v511, %v507
    %v740 = vpack.c.b16 %v512, %v508
    %v741 = vpack.c.b16 %v513, %v509
    %v742 = vpack.c.b16 %v518, %v514
    %v743 = vpack.c.b16 %v519, %v515
    %v744 = vpack.c.b16 %v520, %v516
    %v745 = vpack.c.b16 %v521, %v517
    %v746 = vpack.c.b16 %v526, %v522
    %v747 = vpack.c.b16 %v527, %v523
    %v748 = vpack.c.b16 %v528, %v524
    %v749 = vpack.c.b16 %v529, %v525
    %v750 = vpack.c.b16 %v534, %v530
    %v751 = vpack.c.b16 %v535, %v531
    %v752 = vpack.c.b16 %v536, %v532
    %v753 = vpack.c.b16 %v537, %v533
    %v754 = vpack.c.b16 %v542, %v538
    %v755 = vpack.c.b16 %v543, %v539
    %v756 = vpack.c.b16 %v544, %v540
    %v757 = vpack.c.b16 %v545, %v541
    %v758 = vpack.c.b16 %v550, %v546
    %v759 = vpack.c.b16 %v551, %v547
    %v760 = vpack.c.b16 %v552, %v548
    %v761 = vpack.c.b16 %v553, %v549
    %v762 = vpack.c.b16 %v558, %v554
    %v763 = vpack.c.b16 %v559, %v555
    %v764 = vpack.c.b16 %v560, %v556
    %v765 = vpack.c.b16 %v561, %v557
    %v766 = vpack.c.b16 %v566, %v562
    %v767 = vpack.c.b16 %v567, %v563
    %v768 = vpack.c.b16 %v568, %v564
    %v769 = vpack.c.b16 %v569, %v565
    %v770 = vpack.c.b16 %v574, %v570
    %v771 = vpack.c.b16 %v575, %v571
    %v772 = vpack.c.b16 %v576, %v572
    %v773 = vpack.c.b16 %v577, %v573
    %v774 = vpack.c.b16 %v582, %v578
    %v775 = vpack.c.b16 %v583, %v579
    %v776 = vpack.c.b16 %v584, %v580
    %v777 = vpack.c.b16 %v585, %v581
    %v778 = vpack.c.b16 %v590, %v586
    %v779 = vpack.c.b16 %v591, %v587
    %v780 = vpack.c.b16 %v592, %v588
    %v781 = vpack.c.b16 %v593, %v589
    %v782 = vpack.c.b16 %v598, %v594
    %v783 = vpack.c.b16 %v599, %v595
    %v784 = vpack.c.b16 %v600, %v596
    %v785 = vpack.c.b16 %v601, %v597
    %v786 = vpack.c.b16 %v606, %v602
    %v787 = vpack.c.b16 %v607, %v603
    %v788 = vpack.c.b16 %v608, %v604
    %v789 = vpack.c.b16 %v609, %v605
    %v790 = vpack.c.b16 %v614, %v610
    %v791 = vpack.c.b16 %v615, %v611
    %v792 = vpack.c.b16 %v616, %v612
    %v793 = vpack.c.b16 %v617, %v613
    %v794 = vpack.c.b16 %v622, %v618
    %v795 = vpack.c.b16 %v623, %v619
    %v796 = vpack.c.b16 %v624, %v620
    %v797 = vpack.c.b16 %v625, %v621
    %v798 = vpack.c.b16 %v630, %v626
    %v799 = vpack.c.b16 %v631, %v627
    %v800 = vpack.c.b16 %v632, %v628
    %v801 = vpack.c.b16 %v633, %v629
    %v802 = vpack.c.b16 %v638, %v634
    %v803 = vpack.c.b16 %v639, %v635
    %v804 = vpack.c.b16 %v640, %v636
    %v805 = vpack.c.b16 %v641, %v637
    %v806 = vpack.c.b16 %v646, %v642
    %v807 = vpack.c.b16 %v647, %v643
    %v808 = vpack.c.b16 %v648, %v644
    %v809 = vpack.c.b16 %v649, %v645
    %v810 = vpack.c.b16 %v654, %v650
    %v811 = vpack.c.b16 %v655, %v651
    %v812 = vpack.c.b16 %v656, %v652
    %v813 = vpack.c.b16 %v657, %v653
    %v814 = vpack.c.b16 %v662, %v658
    %v815 = vpack.c.b16 %v663, %v659
    %v816 = vpack.c.b16 %v664, %v660
    %v817 = vpack.c.b16 %v665, %v661
    %v818 = vpack.c.b16 %v670, %v666
    %v819 = vpack.c.b16 %v671, %v667
    %v820 = vpack.c.b16 %v672, %v668
    %v821 = vpack.c.b16 %v673, %v669
    %v822 = vpack.c.b16 %v678, %v674
    %v823 = vpack.c.b16 %v679, %v675
    %v824 = vpack.c.b16 %v680, %v676
    %v825 = vpack.c.b16 %v681, %v677
    %v826 = vpack.c.b16 %v686, %v682
    %v827 = vpack.c.b16 %v687, %v683
    %v828 = vpack.c.b16 %v688, %v684
    %v829 = vpack.c.b16 %v689, %v685
    %v830 = vpack.c.b16 %v694, %v690
    %v831 = vpack.c.b16 %v695, %v691
    %v832 = vpack.c.b16 %v696, %v692
    %v833 = vpack.c.b16 %v697, %v693
    %v834 = vpack.c.b16 %v702, %v698
    %v835 = vpack.c.b16 %v703, %v699
    %v836 = vpack.c.b16 %v704, %v700
    %v837 = vpack.c.b16 %v705, %v701
    %v838 = vpack.c.b16 %v710, %v706
    %v839 = vpack.c.b16 %v711, %v707
    %v840 = vpack.c.b16 %v712, %v708
    %v841 = vpack.c.b16 %v713, %v709
    %970 = vmatpush.bf16.msra.mxu0 %v742
    %971 = vmatpush.bf16.msra.mxu0 %v738
    %972 = vmatpush.bf16.msra.mxu0 %v734
    %973 = vmatpush.bf16.msra.mxu0 %v730
    %974 = vmatpush.bf16.msra.mxu0 %v726
    %975 = vmatpush.bf16.msra.mxu0 %v722
    %976 = vmatpush.bf16.msra.mxu0 %v718
    %977 = vmatpush.bf16.msra.mxu0 %v714
    %978 = vmatmul.bf16.gmra.mxu0 %v186
    %v979 = vpop.f32.mrf.mxu0
    %v980 = vadd.f32 %v322, %v979
    %v981 = vpop.f32.mrf.mxu0
    %982 = vdwg.mxu0
    %983 = vmatpush.bf16.msra.mxu0 %v774
    %984 = vmatpush.bf16.msra.mxu0 %v770
    %985 = vmatpush.bf16.msra.mxu0 %v766
    %986 = vmatpush.bf16.msra.mxu0 %v762
    %987 = vmatpush.bf16.msra.mxu0 %v758
    %988 = vmatpush.bf16.msra.mxu0 %v754
    %989 = vmatpush.bf16.msra.mxu0 %v750
    %990 = vmatpush.bf16.msra.mxu0 %v746
    %991 = vmatmul.bf16.gmra.mxu0 %v187
    %v992 = vpop.f32.mrf.mxu0
    %v993 = vadd.f32 %v980, %v992
    %v994 = vpop.f32.mrf.mxu0
    %995 = vdwg.mxu0
    %996 = vmatpush.bf16.msra.mxu0 %v806
    %997 = vmatpush.bf16.msra.mxu0 %v802
    %998 = vmatpush.bf16.msra.mxu0 %v798
    %999 = vmatpush.bf16.msra.mxu0 %v794
    %1000 = vmatpush.bf16.msra.mxu0 %v790
    %1001 = vmatpush.bf16.msra.mxu0 %v786
    %1002 = vmatpush.bf16.msra.mxu0 %v782
    %1003 = vmatpush.bf16.msra.mxu0 %v778
    %1004 = vmatmul.bf16.gmra.mxu0 %v188
    %v1005 = vpop.f32.mrf.mxu0
    %v1006 = vadd.f32 %v993, %v1005
    %v1007 = vpop.f32.mrf.mxu0
    %1008 = vdwg.mxu0
    %1009 = vmatpush.bf16.msra.mxu0 %v838
    %1010 = vmatpush.bf16.msra.mxu0 %v834
    %1011 = vmatpush.bf16.msra.mxu0 %v830
    %1012 = vmatpush.bf16.msra.mxu0 %v826
    %1013 = vmatpush.bf16.msra.mxu0 %v822
    %1014 = vmatpush.bf16.msra.mxu0 %v818
    %1015 = vmatpush.bf16.msra.mxu0 %v814
    %1016 = vmatpush.bf16.msra.mxu0 %v810
    %1017 = vmatmul.bf16.gmra.mxu0 %v189
    %v1018 = vpop.f32.mrf.mxu0
    %v1019 = vadd.f32 %v1006, %v1018
    %v1020 = vpop.f32.mrf.mxu0
    %1021 = vdwg.mxu0
    %1022 = vmatpush.bf16.msra.mxu0 %v743
    %1023 = vmatpush.bf16.msra.mxu0 %v739
    %1024 = vmatpush.bf16.msra.mxu0 %v735
    %1025 = vmatpush.bf16.msra.mxu0 %v731
    %1026 = vmatpush.bf16.msra.mxu0 %v727
    %1027 = vmatpush.bf16.msra.mxu0 %v723
    %1028 = vmatpush.bf16.msra.mxu0 %v719
    %1029 = vmatpush.bf16.msra.mxu0 %v715
    %1030 = vmatmul.bf16.gmra.mxu0 %v186
    %v1031 = vpop.f32.mrf.mxu0
    %v1032 = vadd.f32 %v323, %v1031
    %v1033 = vpop.f32.mrf.mxu0
    %1034 = vdwg.mxu0
    %1035 = vmatpush.bf16.msra.mxu0 %v775
    %1036 = vmatpush.bf16.msra.mxu0 %v771
    %1037 = vmatpush.bf16.msra.mxu0 %v767
    %1038 = vmatpush.bf16.msra.mxu0 %v763
    %1039 = vmatpush.bf16.msra.mxu0 %v759
    %1040 = vmatpush.bf16.msra.mxu0 %v755
    %1041 = vmatpush.bf16.msra.mxu0 %v751
    %1042 = vmatpush.bf16.msra.mxu0 %v747
    %1043 = vmatmul.bf16.gmra.mxu0 %v187
    %v1044 = vpop.f32.mrf.mxu0
    %v1045 = vadd.f32 %v1032, %v1044
    %v1046 = vpop.f32.mrf.mxu0
    %1047 = vdwg.mxu0
    %1048 = vmatpush.bf16.msra.mxu0 %v807
    %1049 = vmatpush.bf16.msra.mxu0 %v803
    %1050 = vmatpush.bf16.msra.mxu0 %v799
    %1051 = vmatpush.bf16.msra.mxu0 %v795
    %1052 = vmatpush.bf16.msra.mxu0 %v791
    %1053 = vmatpush.bf16.msra.mxu0 %v787
    %1054 = vmatpush.bf16.msra.mxu0 %v783
    %1055 = vmatpush.bf16.msra.mxu0 %v779
    %1056 = vmatmul.bf16.gmra.mxu0 %v188
    %v1057 = vpop.f32.mrf.mxu0
    %v1058 = vadd.f32 %v1045, %v1057
    %v1059 = vpop.f32.mrf.mxu0
    %1060 = vdwg.mxu0
    %1061 = vmatpush.bf16.msra.mxu0 %v839
    %1062 = vmatpush.bf16.msra.mxu0 %v835
    %1063 = vmatpush.bf16.msra.mxu0 %v831
    %1064 = vmatpush.bf16.msra.mxu0 %v827
    %1065 = vmatpush.bf16.msra.mxu0 %v823
    %1066 = vmatpush.bf16.msra.mxu0 %v819
    %1067 = vmatpush.bf16.msra.mxu0 %v815
    %1068 = vmatpush.bf16.msra.mxu0 %v811
    %1069 = vmatmul.bf16.gmra.mxu0 %v189
    %v1070 = vpop.f32.mrf.mxu0
    %v1071 = vadd.f32 %v1058, %v1070
    %v1072 = vpop.f32.mrf.mxu0
    %1073 = vdwg.mxu0
    %1074 = vmatpush.bf16.msra.mxu0 %v744
    %1075 = vmatpush.bf16.msra.mxu0 %v740
    %1076 = vmatpush.bf16.msra.mxu0 %v736
    %1077 = vmatpush.bf16.msra.mxu0 %v732
    %1078 = vmatpush.bf16.msra.mxu0 %v728
    %1079 = vmatpush.bf16.msra.mxu0 %v724
    %1080 = vmatpush.bf16.msra.mxu0 %v720
    %1081 = vmatpush.bf16.msra.mxu0 %v716
    %1082 = vmatmul.bf16.gmra.mxu0 %v186
    %v1083 = vpop.f32.mrf.mxu0
    %v1084 = vadd.f32 %v324, %v1083
    %v1085 = vpop.f32.mrf.mxu0
    %1086 = vdwg.mxu0
    %1087 = vmatpush.bf16.msra.mxu0 %v776
    %1088 = vmatpush.bf16.msra.mxu0 %v772
    %1089 = vmatpush.bf16.msra.mxu0 %v768
    %1090 = vmatpush.bf16.msra.mxu0 %v764
    %1091 = vmatpush.bf16.msra.mxu0 %v760
    %1092 = vmatpush.bf16.msra.mxu0 %v756
    %1093 = vmatpush.bf16.msra.mxu0 %v752
    %1094 = vmatpush.bf16.msra.mxu0 %v748
    %1095 = vmatmul.bf16.gmra.mxu0 %v187
    %v1096 = vpop.f32.mrf.mxu0
    %v1097 = vadd.f32 %v1084, %v1096
    %v1098 = vpop.f32.mrf.mxu0
    %1099 = vdwg.mxu0
    %1100 = vmatpush.bf16.msra.mxu0 %v808
    %1101 = vmatpush.bf16.msra.mxu0 %v804
    %1102 = vmatpush.bf16.msra.mxu0 %v800
    %1103 = vmatpush.bf16.msra.mxu0 %v796
    %1104 = vmatpush.bf16.msra.mxu0 %v792
    %1105 = vmatpush.bf16.msra.mxu0 %v788
    %1106 = vmatpush.bf16.msra.mxu0 %v784
    %1107 = vmatpush.bf16.msra.mxu0 %v780
    %1108 = vmatmul.bf16.gmra.mxu0 %v188
    %v1109 = vpop.f32.mrf.mxu0
    %v1110 = vadd.f32 %v1097, %v1109
    %v1111 = vpop.f32.mrf.mxu0
    %1112 = vdwg.mxu0
    %1113 = vmatpush.bf16.msra.mxu0 %v840
    %1114 = vmatpush.bf16.msra.mxu0 %v836
    %1115 = vmatpush.bf16.msra.mxu0 %v832
    %1116 = vmatpush.bf16.msra.mxu0 %v828
    %1117 = vmatpush.bf16.msra.mxu0 %v824
    %1118 = vmatpush.bf16.msra.mxu0 %v820
    %1119 = vmatpush.bf16.msra.mxu0 %v816
    %1120 = vmatpush.bf16.msra.mxu0 %v812
    %1121 = vmatmul.bf16.gmra.mxu0 %v189
    %v1122 = vpop.f32.mrf.mxu0
    %v1123 = vadd.f32 %v1110, %v1122
    %v1124 = vpop.f32.mrf.mxu0
    %1125 = vdwg.mxu0
    %1126 = vmatpush.bf16.msra.mxu0 %v745
    %1127 = vmatpush.bf16.msra.mxu0 %v741
    %1128 = vmatpush.bf16.msra.mxu0 %v737
    %1129 = vmatpush.bf16.msra.mxu0 %v733
    %1130 = vmatpush.bf16.msra.mxu0 %v729
    %1131 = vmatpush.bf16.msra.mxu0 %v725
    %1132 = vmatpush.bf16.msra.mxu0 %v721
    %1133 = vmatpush.bf16.msra.mxu0 %v717
    %1134 = vmatmul.bf16.gmra.mxu0 %v186
    %v1135 = vpop.f32.mrf.mxu0
    %v1136 = vadd.f32 %v325, %v1135
    %v1137 = vpop.f32.mrf.mxu0
    %1138 = vdwg.mxu0
    %1139 = vmatpush.bf16.msra.mxu0 %v777
    %1140 = vmatpush.bf16.msra.mxu0 %v773
    %1141 = vmatpush.bf16.msra.mxu0 %v769
    %1142 = vmatpush.bf16.msra.mxu0 %v765
    %1143 = vmatpush.bf16.msra.mxu0 %v761
    %1144 = vmatpush.bf16.msra.mxu0 %v757
    %1145 = vmatpush.bf16.msra.mxu0 %v753
    %1146 = vmatpush.bf16.msra.mxu0 %v749
    %1147 = vmatmul.bf16.gmra.mxu0 %v187
    %v1148 = vpop.f32.mrf.mxu0
    %v1149 = vadd.f32 %v1136, %v1148
    %v1150 = vpop.f32.mrf.mxu0
    %1151 = vdwg.mxu0
    %1152 = vmatpush.bf16.msra.mxu0 %v809
    %1153 = vmatpush.bf16.msra.mxu0 %v805
    %1154 = vmatpush.bf16.msra.mxu0 %v801
    %1155 = vmatpush.bf16.msra.mxu0 %v797
    %1156 = vmatpush.bf16.msra.mxu0 %v793
    %1157 = vmatpush.bf16.msra.mxu0 %v789
    %1158 = vmatpush.bf16.msra.mxu0 %v785
    %1159 = vmatpush.bf16.msra.mxu0 %v781
    %1160 = vmatmul.bf16.gmra.mxu0 %v188
    %v1161 = vpop.f32.mrf.mxu0
    %v1162 = vadd.f32 %v1149, %v1161
    %v1163 = vpop.f32.mrf.mxu0
    %1164 = vdwg.mxu0
    %1165 = vmatpush.bf16.msra.mxu0 %v841
    %1166 = vmatpush.bf16.msra.mxu0 %v837
    %1167 = vmatpush.bf16.msra.mxu0 %v833
    %1168 = vmatpush.bf16.msra.mxu0 %v829
    %1169 = vmatpush.bf16.msra.mxu0 %v825
    %1170 = vmatpush.bf16.msra.mxu0 %v821
    %1171 = vmatpush.bf16.msra.mxu0 %v817
    %1172 = vmatpush.bf16.msra.mxu0 %v813
    %1173 = vmatmul.bf16.gmra.mxu0 %v189
    %v1174 = vpop.f32.mrf.mxu0
    %v1175 = vadd.f32 %v1162, %v1174
    %v1176 = vpop.f32.mrf.mxu0
    %1177 = vdwg.mxu0
    %v1178 = vmax.f32 %v1019, 0.0
    %v1179 = vmax.f32 %v1071, 0.0
    %v1180 = vmax.f32 %v1123, 0.0
    %v1181 = vmax.f32 %v1175, 0.0
    %v1182 = vld [vmem:[#allocation10] sm:$0xf]
    %v1183 = vld [vmem:[#allocation10 + $0x4] sm:$0xf]
    %v1184 = vld [vmem:[#allocation10 + $0x8] sm:$0xf]
    %v1185 = vld [vmem:[#allocation10 + $0xc] sm:$0xf]
    %v1186 = vld [vmem:[#allocation10 + $0x10] sm:$0xf]
    %v1187 = vld [vmem:[#allocation10 + $0x14] sm:$0xf]
    %v1188 = vld [vmem:[#allocation10 + $0x18] sm:$0xf]
    %v1189 = vld [vmem:[#allocation10 + $0x1c] sm:$0xf]
    %v1190 = vld [vmem:[#allocation10 + $0x20] sm:$0xf]
    %v1191 = vld [vmem:[#allocation10 + $0x24] sm:$0xf]
    %v1192 = vld [vmem:[#allocation10 + $0x28] sm:$0xf]
    %v1193 = vld [vmem:[#allocation10 + $0x2c] sm:$0xf]
    %v1194 = vld [vmem:[#allocation10 + $0x30] sm:$0xf]
    %v1195 = vld [vmem:[#allocation10 + $0x34] sm:$0xf]
    %v1196 = vld [vmem:[#allocation10 + $0x38] sm:$0xf]
    %v1197 = vld [vmem:[#allocation10 + $0x3c] sm:$0xf]
    %v1198 = vld [vmem:[%s5] sm:$0x1]
    %v1200 = vperm.slane %v1198, 0
    %v1218 = vunpack.c.l.b16 %v1182
    %v1219 = vunpack.c.l.b16 %v1183
    %v1220 = vunpack.c.l.b16 %v1184
    %v1221 = vunpack.c.l.b16 %v1185
    %v1222 = vunpack.c.l.b16 %v1186
    %v1223 = vunpack.c.l.b16 %v1187
    %v1224 = vunpack.c.l.b16 %v1188
    %v1225 = vunpack.c.l.b16 %v1189
    %v1226 = vunpack.c.l.b16 %v1190
    %v1227 = vunpack.c.l.b16 %v1191
    %v1228 = vunpack.c.l.b16 %v1192
    %v1229 = vunpack.c.l.b16 %v1193
    %v1230 = vunpack.c.l.b16 %v1194
    %v1231 = vunpack.c.l.b16 %v1195
    %v1232 = vunpack.c.l.b16 %v1196
    %v1233 = vunpack.c.l.b16 %v1197
    %v1234 = vpack.c.b16 %v1219, %v1218
    %v1235 = vpack.c.b16 %v1221, %v1220
    %v1236 = vpack.c.b16 %v1223, %v1222
    %v1237 = vpack.c.b16 %v1225, %v1224
    %v1238 = vpack.c.b16 %v1227, %v1226
    %v1239 = vpack.c.b16 %v1229, %v1228
    %v1240 = vpack.c.b16 %v1231, %v1230
    %v1241 = vpack.c.b16 %v1233, %v1232
    %1250 = vmatpush.bf16.msra.mxu0 %v1241
    %1251 = vmatpush.bf16.msra.mxu0 %v1240
    %1252 = vmatpush.bf16.msra.mxu0 %v1239
    %1253 = vmatpush.bf16.msra.mxu0 %v1238
    %1254 = vmatpush.bf16.msra.mxu0 %v1237
    %1255 = vmatpush.bf16.msra.mxu0 %v1236
    %1256 = vmatpush.bf16.msra.mxu0 %v1235
    %1257 = vmatpush.bf16.msra.mxu0 %v1234
    %1258 = vmatmul.bf16.gmra.mxu0 %v191
    %v1259 = vpop.f32.mrf.mxu0
    %v1260 = vadd.f32 %v1200, %v1259
    %v1261 = vpop.f32.mrf.mxu0
    %1262 = vdwg.mxu0
    %v1263 = vmax.f32 %v1260, 0.0
    %v1264 = vpack.c.bf16 %v1178, %v1178
    %v1265 = vpack.c.bf16 %v1179, %v1179
    %v1266 = vpack.c.bf16 %v1180, %v1180
    %v1267 = vpack.c.bf16 %v1181, %v1181
    %v1268 = vld [vmem:[#allocation11] sm:$0xff]
    %v1269 = vld [vmem:[#allocation11 + $0x8] sm:$0xff]
    %v1270 = vld [vmem:[#allocation11 + $0x10] sm:$0xff]
    %v1271 = vld [vmem:[#allocation11 + $0x18] sm:$0xff]
    %v1272 = vld [vmem:[#allocation11 + $0x20] sm:$0xff]
    %v1273 = vld [vmem:[#allocation11 + $0x28] sm:$0xff]
    %v1274 = vld [vmem:[#allocation11 + $0x30] sm:$0xff]
    %v1275 = vld [vmem:[#allocation11 + $0x38] sm:$0xff]
    %v1276 = vld [vmem:[#allocation11 + $0x40] sm:$0xff]
    %v1277 = vld [vmem:[#allocation11 + $0x48] sm:$0xff]
    %v1278 = vld [vmem:[#allocation11 + $0x50] sm:$0xff]
    %v1279 = vld [vmem:[#allocation11 + $0x58] sm:$0xff]
    %v1280 = vld [vmem:[#allocation11 + $0x60] sm:$0xff]
    %v1281 = vld [vmem:[#allocation11 + $0x68] sm:$0xff]
    %v1282 = vld [vmem:[#allocation11 + $0x70] sm:$0xff]
    %v1283 = vld [vmem:[#allocation11 + $0x78] sm:$0xff]
    %v1284 = vld [vmem:[#allocation11 + $0x80] sm:$0xff]
    %v1285 = vld [vmem:[#allocation11 + $0x88] sm:$0xff]
    %v1286 = vld [vmem:[#allocation11 + $0x90] sm:$0xff]
    %v1287 = vld [vmem:[#allocation11 + $0x98] sm:$0xff]
    %v1288 = vld [vmem:[#allocation11 + $0xa0] sm:$0xff]
    %v1289 = vld [vmem:[#allocation11 + $0xa8] sm:$0xff]
    %v1290 = vld [vmem:[#allocation11 + $0xb0] sm:$0xff]
    %v1291 = vld [vmem:[#allocation11 + $0xb8] sm:$0xff]
    %v1292 = vld [vmem:[#allocation11 + $0xc0] sm:$0xff]
    %v1293 = vld [vmem:[#allocation11 + $0xc8] sm:$0xff]
    %v1294 = vld [vmem:[#allocation11 + $0xd0] sm:$0xff]
    %v1295 = vld [vmem:[#allocation11 + $0xd8] sm:$0xff]
    %v1296 = vld [vmem:[#allocation11 + $0xe0] sm:$0xff]
    %v1297 = vld [vmem:[#allocation11 + $0xe8] sm:$0xff]
    %v1298 = vld [vmem:[#allocation11 + $0xf0] sm:$0xff]
    %v1299 = vld [vmem:[#allocation11 + $0xf8] sm:$0xff]
    %v1300 = vld [vmem:[#allocation11 + $0x100] sm:$0xff]
    %v1301 = vld [vmem:[#allocation11 + $0x108] sm:$0xff]
    %v1302 = vld [vmem:[#allocation11 + $0x110] sm:$0xff]
    %v1303 = vld [vmem:[#allocation11 + $0x118] sm:$0xff]
    %v1304 = vld [vmem:[#allocation11 + $0x120] sm:$0xff]
    %v1305 = vld [vmem:[#allocation11 + $0x128] sm:$0xff]
    %v1306 = vld [vmem:[#allocation11 + $0x130] sm:$0xff]
    %v1307 = vld [vmem:[#allocation11 + $0x138] sm:$0xff]
    %v1308 = vld [vmem:[#allocation11 + $0x140] sm:$0xff]
    %v1309 = vld [vmem:[#allocation11 + $0x148] sm:$0xff]
    %v1310 = vld [vmem:[#allocation11 + $0x150] sm:$0xff]
    %v1311 = vld [vmem:[#allocation11 + $0x158] sm:$0xff]
    %v1312 = vld [vmem:[#allocation11 + $0x160] sm:$0xff]
    %v1313 = vld [vmem:[#allocation11 + $0x168] sm:$0xff]
    %v1314 = vld [vmem:[#allocation11 + $0x170] sm:$0xff]
    %v1315 = vld [vmem:[#allocation11 + $0x178] sm:$0xff]
    %v1316 = vld [vmem:[#allocation11 + $0x180] sm:$0xff]
    %v1317 = vld [vmem:[#allocation11 + $0x188] sm:$0xff]
    %v1318 = vld [vmem:[#allocation11 + $0x190] sm:$0xff]
    %v1319 = vld [vmem:[#allocation11 + $0x198] sm:$0xff]
    %v1320 = vld [vmem:[#allocation11 + $0x1a0] sm:$0xff]
    %v1321 = vld [vmem:[#allocation11 + $0x1a8] sm:$0xff]
    %v1322 = vld [vmem:[#allocation11 + $0x1b0] sm:$0xff]
    %v1323 = vld [vmem:[#allocation11 + $0x1b8] sm:$0xff]
    %v1324 = vld [vmem:[#allocation11 + $0x1c0] sm:$0xff]
    %v1325 = vld [vmem:[#allocation11 + $0x1c8] sm:$0xff]
    %v1326 = vld [vmem:[#allocation11 + $0x1d0] sm:$0xff]
    %v1327 = vld [vmem:[#allocation11 + $0x1d8] sm:$0xff]
    %v1328 = vld [vmem:[#allocation11 + $0x1e0] sm:$0xff]
    %v1329 = vld [vmem:[#allocation11 + $0x1e8] sm:$0xff]
    %v1330 = vld [vmem:[#allocation11 + $0x1f0] sm:$0xff]
    %v1331 = vld [vmem:[#allocation11 + $0x1f8] sm:$0xff]
    %v1332 = vld [vmem:[#allocation11 + $0x200] sm:$0xff]
    %v1333 = vld [vmem:[#allocation11 + $0x208] sm:$0xff]
    %v1334 = vld [vmem:[#allocation11 + $0x210] sm:$0xff]
    %v1335 = vld [vmem:[#allocation11 + $0x218] sm:$0xff]
    %v1336 = vld [vmem:[#allocation11 + $0x220] sm:$0xff]
    %v1337 = vld [vmem:[#allocation11 + $0x228] sm:$0xff]
    %v1338 = vld [vmem:[#allocation11 + $0x230] sm:$0xff]
    %v1339 = vld [vmem:[#allocation11 + $0x238] sm:$0xff]
    %v1340 = vld [vmem:[#allocation11 + $0x240] sm:$0xff]
    %v1341 = vld [vmem:[#allocation11 + $0x248] sm:$0xff]
    %v1342 = vld [vmem:[#allocation11 + $0x250] sm:$0xff]
    %v1343 = vld [vmem:[#allocation11 + $0x258] sm:$0xff]
    %v1344 = vld [vmem:[#allocation11 + $0x260] sm:$0xff]
    %v1345 = vld [vmem:[#allocation11 + $0x268] sm:$0xff]
    %v1346 = vld [vmem:[#allocation11 + $0x270] sm:$0xff]
    %v1347 = vld [vmem:[#allocation11 + $0x278] sm:$0xff]
    %v1348 = vld [vmem:[#allocation11 + $0x280] sm:$0xff]
    %v1349 = vld [vmem:[#allocation11 + $0x288] sm:$0xff]
    %v1350 = vld [vmem:[#allocation11 + $0x290] sm:$0xff]
    %v1351 = vld [vmem:[#allocation11 + $0x298] sm:$0xff]
    %v1352 = vld [vmem:[#allocation11 + $0x2a0] sm:$0xff]
    %v1353 = vld [vmem:[#allocation11 + $0x2a8] sm:$0xff]
    %v1354 = vld [vmem:[#allocation11 + $0x2b0] sm:$0xff]
    %v1355 = vld [vmem:[#allocation11 + $0x2b8] sm:$0xff]
    %v1356 = vld [vmem:[#allocation11 + $0x2c0] sm:$0xff]
    %v1357 = vld [vmem:[#allocation11 + $0x2c8] sm:$0xff]
    %v1358 = vld [vmem:[#allocation11 + $0x2d0] sm:$0xff]
    %v1359 = vld [vmem:[#allocation11 + $0x2d8] sm:$0xff]
    %v1360 = vld [vmem:[#allocation11 + $0x2e0] sm:$0xff]
    %v1361 = vld [vmem:[#allocation11 + $0x2e8] sm:$0xff]
    %v1362 = vld [vmem:[#allocation11 + $0x2f0] sm:$0xff]
    %v1363 = vld [vmem:[#allocation11 + $0x2f8] sm:$0xff]
    %v1364 = vld [vmem:[#allocation11 + $0x300] sm:$0xff]
    %v1365 = vld [vmem:[#allocation11 + $0x308] sm:$0xff]
    %v1366 = vld [vmem:[#allocation11 + $0x310] sm:$0xff]
    %v1367 = vld [vmem:[#allocation11 + $0x318] sm:$0xff]
    %v1368 = vld [vmem:[#allocation11 + $0x320] sm:$0xff]
    %v1369 = vld [vmem:[#allocation11 + $0x328] sm:$0xff]
    %v1370 = vld [vmem:[#allocation11 + $0x330] sm:$0xff]
    %v1371 = vld [vmem:[#allocation11 + $0x338] sm:$0xff]
    %v1372 = vld [vmem:[#allocation11 + $0x340] sm:$0xff]
    %v1373 = vld [vmem:[#allocation11 + $0x348] sm:$0xff]
    %v1374 = vld [vmem:[#allocation11 + $0x350] sm:$0xff]
    %v1375 = vld [vmem:[#allocation11 + $0x358] sm:$0xff]
    %v1376 = vld [vmem:[#allocation11 + $0x360] sm:$0xff]
    %v1377 = vld [vmem:[#allocation11 + $0x368] sm:$0xff]
    %v1378 = vld [vmem:[#allocation11 + $0x370] sm:$0xff]
    %v1379 = vld [vmem:[#allocation11 + $0x378] sm:$0xff]
    %v1380 = vld [vmem:[#allocation11 + $0x380] sm:$0xff]
    %v1381 = vld [vmem:[#allocation11 + $0x388] sm:$0xff]
    %v1382 = vld [vmem:[#allocation11 + $0x390] sm:$0xff]
    %v1383 = vld [vmem:[#allocation11 + $0x398] sm:$0xff]
    %v1384 = vld [vmem:[#allocation11 + $0x3a0] sm:$0xff]
    %v1385 = vld [vmem:[#allocation11 + $0x3a8] sm:$0xff]
    %v1386 = vld [vmem:[#allocation11 + $0x3b0] sm:$0xff]
    %v1387 = vld [vmem:[#allocation11 + $0x3b8] sm:$0xff]
    %v1388 = vld [vmem:[#allocation11 + $0x3c0] sm:$0xff]
    %v1389 = vld [vmem:[#allocation11 + $0x3c8] sm:$0xff]
    %v1390 = vld [vmem:[#allocation11 + $0x3d0] sm:$0xff]
    %v1391 = vld [vmem:[#allocation11 + $0x3d8] sm:$0xff]
    %v1392 = vld [vmem:[#allocation11 + $0x3e0] sm:$0xff]
    %v1393 = vld [vmem:[#allocation11 + $0x3e8] sm:$0xff]
    %v1394 = vld [vmem:[#allocation11 + $0x3f0] sm:$0xff]
    %v1395 = vld [vmem:[#allocation11 + $0x3f8] sm:$0xff]
    %v1396 = vpack.c.bf16 %v1263, %v1263
    %v1397 = vld [vmem:[#allocation13] sm:$0xff]
    %v1398 = vld [vmem:[#allocation13 + $0x8] sm:$0xff]
    %v1399 = vld [vmem:[#allocation13 + $0x10] sm:$0xff]
    %v1400 = vld [vmem:[#allocation13 + $0x18] sm:$0xff]
    %v1401 = vld [vmem:[#allocation13 + $0x20] sm:$0xff]
    %v1402 = vld [vmem:[#allocation13 + $0x28] sm:$0xff]
    %v1403 = vld [vmem:[#allocation13 + $0x30] sm:$0xff]
    %v1404 = vld [vmem:[#allocation13 + $0x38] sm:$0xff]
    %v1405 = vld [vmem:[#allocation13 + $0x40] sm:$0xff]
    %v1406 = vld [vmem:[#allocation13 + $0x48] sm:$0xff]
    %v1407 = vld [vmem:[#allocation13 + $0x50] sm:$0xff]
    %v1408 = vld [vmem:[#allocation13 + $0x58] sm:$0xff]
    %v1409 = vld [vmem:[#allocation13 + $0x60] sm:$0xff]
    %v1410 = vld [vmem:[#allocation13 + $0x68] sm:$0xff]
    %v1411 = vld [vmem:[#allocation13 + $0x70] sm:$0xff]
    %v1412 = vld [vmem:[#allocation13 + $0x78] sm:$0xff]
    %v1413 = vld [vmem:[#allocation13 + $0x80] sm:$0xff]
    %v1414 = vld [vmem:[#allocation13 + $0x88] sm:$0xff]
    %v1415 = vld [vmem:[#allocation13 + $0x90] sm:$0xff]
    %v1416 = vld [vmem:[#allocation13 + $0x98] sm:$0xff]
    %v1417 = vld [vmem:[#allocation13 + $0xa0] sm:$0xff]
    %v1418 = vld [vmem:[#allocation13 + $0xa8] sm:$0xff]
    %v1419 = vld [vmem:[#allocation13 + $0xb0] sm:$0xff]
    %v1420 = vld [vmem:[#allocation13 + $0xb8] sm:$0xff]
    %v1421 = vld [vmem:[#allocation13 + $0xc0] sm:$0xff]
    %v1422 = vld [vmem:[#allocation13 + $0xc8] sm:$0xff]
    %v1423 = vld [vmem:[#allocation13 + $0xd0] sm:$0xff]
    %v1424 = vld [vmem:[#allocation13 + $0xd8] sm:$0xff]
    %v1425 = vld [vmem:[#allocation13 + $0xe0] sm:$0xff]
    %v1426 = vld [vmem:[#allocation13 + $0xe8] sm:$0xff]
    %v1427 = vld [vmem:[#allocation13 + $0xf0] sm:$0xff]
    %v1428 = vld [vmem:[#allocation13 + $0xf8] sm:$0xff]
    %v1461 = vunpack.c.l.b16 %v1397
    %v1462 = vunpack.c.h.b16 %v1397
    %v1463 = vunpack.c.l.b16 %v1398
    %v1464 = vunpack.c.h.b16 %v1398
    %v1465 = vunpack.c.l.b16 %v1399
    %v1466 = vunpack.c.h.b16 %v1399
    %v1467 = vunpack.c.l.b16 %v1400
    %v1468 = vunpack.c.h.b16 %v1400
    %v1469 = vunpack.c.l.b16 %v1401
    %v1470 = vunpack.c.h.b16 %v1401
    %v1471 = vunpack.c.l.b16 %v1402
    %v1472 = vunpack.c.h.b16 %v1402
    %v1473 = vunpack.c.l.b16 %v1403
    %v1474 = vunpack.c.h.b16 %v1403
    %v1475 = vunpack.c.l.b16 %v1404
    %v1476 = vunpack.c.h.b16 %v1404
    %v1477 = vunpack.c.l.b16 %v1405
    %v1478 = vunpack.c.h.b16 %v1405
    %v1479 = vunpack.c.l.b16 %v1406
    %v1480 = vunpack.c.h.b16 %v1406
    %v1481 = vunpack.c.l.b16 %v1407
    %v1482 = vunpack.c.h.b16 %v1407
    %v1483 = vunpack.c.l.b16 %v1408
    %v1484 = vunpack.c.h.b16 %v1408
    %v1485 = vunpack.c.l.b16 %v1409
    %v1486 = vunpack.c.h.b16 %v1409
    %v1487 = vunpack.c.l.b16 %v1410
    %v1488 = vunpack.c.h.b16 %v1410
    %v1489 = vunpack.c.l.b16 %v1411
    %v1490 = vunpack.c.h.b16 %v1411
    %v1491 = vunpack.c.l.b16 %v1412
    %v1492 = vunpack.c.h.b16 %v1412
    %v1493 = vunpack.c.l.b16 %v1413
    %v1494 = vunpack.c.h.b16 %v1413
    %v1495 = vunpack.c.l.b16 %v1414
    %v1496 = vunpack.c.h.b16 %v1414
    %v1497 = vunpack.c.l.b16 %v1415
    %v1498 = vunpack.c.h.b16 %v1415
    %v1499 = vunpack.c.l.b16 %v1416
    %v1500 = vunpack.c.h.b16 %v1416
    %v1501 = vunpack.c.l.b16 %v1417
    %v1502 = vunpack.c.h.b16 %v1417
    %v1503 = vunpack.c.l.b16 %v1418
    %v1504 = vunpack.c.h.b16 %v1418
    %v1505 = vunpack.c.l.b16 %v1419
    %v1506 = vunpack.c.h.b16 %v1419
    %v1507 = vunpack.c.l.b16 %v1420
    %v1508 = vunpack.c.h.b16 %v1420
    %v1509 = vunpack.c.l.b16 %v1421
    %v1510 = vunpack.c.h.b16 %v1421
    %v1511 = vunpack.c.l.b16 %v1422
    %v1512 = vunpack.c.h.b16 %v1422
    %v1513 = vunpack.c.l.b16 %v1423
    %v1514 = vunpack.c.h.b16 %v1423
    %v1515 = vunpack.c.l.b16 %v1424
    %v1516 = vunpack.c.h.b16 %v1424
    %v1517 = vunpack.c.l.b16 %v1425
    %v1518 = vunpack.c.h.b16 %v1425
    %v1519 = vunpack.c.l.b16 %v1426
    %v1520 = vunpack.c.h.b16 %v1426
    %v1521 = vunpack.c.l.b16 %v1427
    %v1522 = vunpack.c.h.b16 %v1427
    %v1523 = vunpack.c.l.b16 %v1428
    %v1524 = vunpack.c.h.b16 %v1428
    %v1525 = vpack.c.b16 %v1465, %v1461
    %v1526 = vpack.c.b16 %v1466, %v1462
    %v1527 = vpack.c.b16 %v1467, %v1463
    %v1528 = vpack.c.b16 %v1468, %v1464
    %v1529 = vpack.c.b16 %v1473, %v1469
    %v1530 = vpack.c.b16 %v1474, %v1470
    %v1531 = vpack.c.b16 %v1475, %v1471
    %v1532 = vpack.c.b16 %v1476, %v1472
    %v1533 = vpack.c.b16 %v1481, %v1477
    %v1534 = vpack.c.b16 %v1482, %v1478
    %v1535 = vpack.c.b16 %v1483, %v1479
    %v1536 = vpack.c.b16 %v1484, %v1480
    %v1537 = vpack.c.b16 %v1489, %v1485
    %v1538 = vpack.c.b16 %v1490, %v1486
    %v1539 = vpack.c.b16 %v1491, %v1487
    %v1540 = vpack.c.b16 %v1492, %v1488
    %v1541 = vpack.c.b16 %v1497, %v1493
    %v1542 = vpack.c.b16 %v1498, %v1494
    %v1543 = vpack.c.b16 %v1499, %v1495
    %v1544 = vpack.c.b16 %v1500, %v1496
    %v1545 = vpack.c.b16 %v1505, %v1501
    %v1546 = vpack.c.b16 %v1506, %v1502
    %v1547 = vpack.c.b16 %v1507, %v1503
    %v1548 = vpack.c.b16 %v1508, %v1504
    %v1549 = vpack.c.b16 %v1513, %v1509
    %v1550 = vpack.c.b16 %v1514, %v1510
    %v1551 = vpack.c.b16 %v1515, %v1511
    %v1552 = vpack.c.b16 %v1516, %v1512
    %v1553 = vpack.c.b16 %v1521, %v1517
    %v1554 = vpack.c.b16 %v1522, %v1518
    %v1555 = vpack.c.b16 %v1523, %v1519
    %v1556 = vpack.c.b16 %v1524, %v1520
    %1589 = vmatpush.bf16.msra.mxu0 %v1553
    %1590 = vmatpush.bf16.msra.mxu0 %v1549
    %1591 = vmatpush.bf16.msra.mxu0 %v1545
    %1592 = vmatpush.bf16.msra.mxu0 %v1541
    %1593 = vmatpush.bf16.msra.mxu0 %v1537
    %1594 = vmatpush.bf16.msra.mxu0 %v1533
    %1595 = vmatpush.bf16.msra.mxu0 %v1529
    %1596 = vmatpush.bf16.msra.mxu0 %v1525
    %1597 = vmatmul.bf16.gmra.mxu0 %v1396
    %v1598 = vpop.f32.mrf.mxu0
    %v1599 = vadd.f32 0.0, %v1598
    %v1600 = vpop.f32.mrf.mxu0
    %1601 = vdwg.mxu0
    %1602 = vmatpush.bf16.msra.mxu0 %v1554
    %1603 = vmatpush.bf16.msra.mxu0 %v1550
    %1604 = vmatpush.bf16.msra.mxu0 %v1546
    %1605 = vmatpush.bf16.msra.mxu0 %v1542
    %1606 = vmatpush.bf16.msra.mxu0 %v1538
    %1607 = vmatpush.bf16.msra.mxu0 %v1534
    %1608 = vmatpush.bf16.msra.mxu0 %v1530
    %1609 = vmatpush.bf16.msra.mxu0 %v1526
    %1610 = vmatmul.bf16.gmra.mxu0 %v1396
    %v1611 = vpop.f32.mrf.mxu0
    %v1612 = vadd.f32 0.0, %v1611
    %v1613 = vpop.f32.mrf.mxu0
    %1614 = vdwg.mxu0
    %1615 = vmatpush.bf16.msra.mxu0 %v1555
    %1616 = vmatpush.bf16.msra.mxu0 %v1551
    %1617 = vmatpush.bf16.msra.mxu0 %v1547
    %1618 = vmatpush.bf16.msra.mxu0 %v1543
    %1619 = vmatpush.bf16.msra.mxu0 %v1539
    %1620 = vmatpush.bf16.msra.mxu0 %v1535
    %1621 = vmatpush.bf16.msra.mxu0 %v1531
    %1622 = vmatpush.bf16.msra.mxu0 %v1527
    %1623 = vmatmul.bf16.gmra.mxu0 %v1396
    %v1624 = vpop.f32.mrf.mxu0
    %v1625 = vadd.f32 0.0, %v1624
    %v1626 = vpop.f32.mrf.mxu0
    %1627 = vdwg.mxu0
    %1628 = vmatpush.bf16.msra.mxu0 %v1556
    %1629 = vmatpush.bf16.msra.mxu0 %v1552
    %1630 = vmatpush.bf16.msra.mxu0 %v1548
    %1631 = vmatpush.bf16.msra.mxu0 %v1544
    %1632 = vmatpush.bf16.msra.mxu0 %v1540
    %1633 = vmatpush.bf16.msra.mxu0 %v1536
    %1634 = vmatpush.bf16.msra.mxu0 %v1532
    %1635 = vmatpush.bf16.msra.mxu0 %v1528
    %1636 = vmatmul.bf16.gmra.mxu0 %v1396
    %v1637 = vpop.f32.mrf.mxu0
    %v1638 = vadd.f32 0.0, %v1637
    %v1639 = vpop.f32.mrf.mxu0
    %1640 = vdwg.mxu0
    %v1769 = vunpack.c.l.b16 %v1268
    %v1770 = vunpack.c.h.b16 %v1268
    %v1771 = vunpack.c.l.b16 %v1269
    %v1772 = vunpack.c.h.b16 %v1269
    %v1773 = vunpack.c.l.b16 %v1270
    %v1774 = vunpack.c.h.b16 %v1270
    %v1775 = vunpack.c.l.b16 %v1271
    %v1776 = vunpack.c.h.b16 %v1271
    %v1777 = vunpack.c.l.b16 %v1272
    %v1778 = vunpack.c.h.b16 %v1272
    %v1779 = vunpack.c.l.b16 %v1273
    %v1780 = vunpack.c.h.b16 %v1273
    %v1781 = vunpack.c.l.b16 %v1274
    %v1782 = vunpack.c.h.b16 %v1274
    %v1783 = vunpack.c.l.b16 %v1275
    %v1784 = vunpack.c.h.b16 %v1275
    %v1785 = vunpack.c.l.b16 %v1276
    %v1786 = vunpack.c.h.b16 %v1276
    %v1787 = vunpack.c.l.b16 %v1277
    %v1788 = vunpack.c.h.b16 %v1277
    %v1789 = vunpack.c.l.b16 %v1278
    %v1790 = vunpack.c.h.b16 %v1278
    %v1791 = vunpack.c.l.b16 %v1279
    %v1792 = vunpack.c.h.b16 %v1279
    %v1793 = vunpack.c.l.b16 %v1280
    %v1794 = vunpack.c.h.b16 %v1280
    %v1795 = vunpack.c.l.b16 %v1281
    %v1796 = vunpack.c.h.b16 %v1281
    %v1797 = vunpack.c.l.b16 %v1282
    %v1798 = vunpack.c.h.b16 %v1282
    %v1799 = vunpack.c.l.b16 %v1283
    %v1800 = vunpack.c.h.b16 %v1283
    %v1801 = vunpack.c.l.b16 %v1284
    %v1802 = vunpack.c.h.b16 %v1284
    %v1803 = vunpack.c.l.b16 %v1285
    %v1804 = vunpack.c.h.b16 %v1285
    %v1805 = vunpack.c.l.b16 %v1286
    %v1806 = vunpack.c.h.b16 %v1286
    %v1807 = vunpack.c.l.b16 %v1287
    %v1808 = vunpack.c.h.b16 %v1287
    %v1809 = vunpack.c.l.b16 %v1288
    %v1810 = vunpack.c.h.b16 %v1288
    %v1811 = vunpack.c.l.b16 %v1289
    %v1812 = vunpack.c.h.b16 %v1289
    %v1813 = vunpack.c.l.b16 %v1290
    %v1814 = vunpack.c.h.b16 %v1290
    %v1815 = vunpack.c.l.b16 %v1291
    %v1816 = vunpack.c.h.b16 %v1291
    %v1817 = vunpack.c.l.b16 %v1292
    %v1818 = vunpack.c.h.b16 %v1292
    %v1819 = vunpack.c.l.b16 %v1293
    %v1820 = vunpack.c.h.b16 %v1293
    %v1821 = vunpack.c.l.b16 %v1294
    %v1822 = vunpack.c.h.b16 %v1294
    %v1823 = vunpack.c.l.b16 %v1295
    %v1824 = vunpack.c.h.b16 %v1295
    %v1825 = vunpack.c.l.b16 %v1296
    %v1826 = vunpack.c.h.b16 %v1296
    %v1827 = vunpack.c.l.b16 %v1297
    %v1828 = vunpack.c.h.b16 %v1297
    %v1829 = vunpack.c.l.b16 %v1298
    %v1830 = vunpack.c.h.b16 %v1298
    %v1831 = vunpack.c.l.b16 %v1299
    %v1832 = vunpack.c.h.b16 %v1299
    %v1833 = vunpack.c.l.b16 %v1300
    %v1834 = vunpack.c.h.b16 %v1300
    %v1835 = vunpack.c.l.b16 %v1301
    %v1836 = vunpack.c.h.b16 %v1301
    %v1837 = vunpack.c.l.b16 %v1302
    %v1838 = vunpack.c.h.b16 %v1302
    %v1839 = vunpack.c.l.b16 %v1303
    %v1840 = vunpack.c.h.b16 %v1303
    %v1841 = vunpack.c.l.b16 %v1304
    %v1842 = vunpack.c.h.b16 %v1304
    %v1843 = vunpack.c.l.b16 %v1305
    %v1844 = vunpack.c.h.b16 %v1305
    %v1845 = vunpack.c.l.b16 %v1306
    %v1846 = vunpack.c.h.b16 %v1306
    %v1847 = vunpack.c.l.b16 %v1307
    %v1848 = vunpack.c.h.b16 %v1307
    %v1849 = vunpack.c.l.b16 %v1308
    %v1850 = vunpack.c.h.b16 %v1308
    %v1851 = vunpack.c.l.b16 %v1309
    %v1852 = vunpack.c.h.b16 %v1309
    %v1853 = vunpack.c.l.b16 %v1310
    %v1854 = vunpack.c.h.b16 %v1310
    %v1855 = vunpack.c.l.b16 %v1311
    %v1856 = vunpack.c.h.b16 %v1311
    %v1857 = vunpack.c.l.b16 %v1312
    %v1858 = vunpack.c.h.b16 %v1312
    %v1859 = vunpack.c.l.b16 %v1313
    %v1860 = vunpack.c.h.b16 %v1313
    %v1861 = vunpack.c.l.b16 %v1314
    %v1862 = vunpack.c.h.b16 %v1314
    %v1863 = vunpack.c.l.b16 %v1315
    %v1864 = vunpack.c.h.b16 %v1315
    %v1865 = vunpack.c.l.b16 %v1316
    %v1866 = vunpack.c.h.b16 %v1316
    %v1867 = vunpack.c.l.b16 %v1317
    %v1868 = vunpack.c.h.b16 %v1317
    %v1869 = vunpack.c.l.b16 %v1318
    %v1870 = vunpack.c.h.b16 %v1318
    %v1871 = vunpack.c.l.b16 %v1319
    %v1872 = vunpack.c.h.b16 %v1319
    %v1873 = vunpack.c.l.b16 %v1320
    %v1874 = vunpack.c.h.b16 %v1320
    %v1875 = vunpack.c.l.b16 %v1321
    %v1876 = vunpack.c.h.b16 %v1321
    %v1877 = vunpack.c.l.b16 %v1322
    %v1878 = vunpack.c.h.b16 %v1322
    %v1879 = vunpack.c.l.b16 %v1323
    %v1880 = vunpack.c.h.b16 %v1323
    %v1881 = vunpack.c.l.b16 %v1324
    %v1882 = vunpack.c.h.b16 %v1324
    %v1883 = vunpack.c.l.b16 %v1325
    %v1884 = vunpack.c.h.b16 %v1325
    %v1885 = vunpack.c.l.b16 %v1326
    %v1886 = vunpack.c.h.b16 %v1326
    %v1887 = vunpack.c.l.b16 %v1327
    %v1888 = vunpack.c.h.b16 %v1327
    %v1889 = vunpack.c.l.b16 %v1328
    %v1890 = vunpack.c.h.b16 %v1328
    %v1891 = vunpack.c.l.b16 %v1329
    %v1892 = vunpack.c.h.b16 %v1329
    %v1893 = vunpack.c.l.b16 %v1330
    %v1894 = vunpack.c.h.b16 %v1330
    %v1895 = vunpack.c.l.b16 %v1331
    %v1896 = vunpack.c.h.b16 %v1331
    %v1897 = vunpack.c.l.b16 %v1332
    %v1898 = vunpack.c.h.b16 %v1332
    %v1899 = vunpack.c.l.b16 %v1333
    %v1900 = vunpack.c.h.b16 %v1333
    %v1901 = vunpack.c.l.b16 %v1334
    %v1902 = vunpack.c.h.b16 %v1334
    %v1903 = vunpack.c.l.b16 %v1335
    %v1904 = vunpack.c.h.b16 %v1335
    %v1905 = vunpack.c.l.b16 %v1336
    %v1906 = vunpack.c.h.b16 %v1336
    %v1907 = vunpack.c.l.b16 %v1337
    %v1908 = vunpack.c.h.b16 %v1337
    %v1909 = vunpack.c.l.b16 %v1338
    %v1910 = vunpack.c.h.b16 %v1338
    %v1911 = vunpack.c.l.b16 %v1339
    %v1912 = vunpack.c.h.b16 %v1339
    %v1913 = vunpack.c.l.b16 %v1340
    %v1914 = vunpack.c.h.b16 %v1340
    %v1915 = vunpack.c.l.b16 %v1341
    %v1916 = vunpack.c.h.b16 %v1341
    %v1917 = vunpack.c.l.b16 %v1342
    %v1918 = vunpack.c.h.b16 %v1342
    %v1919 = vunpack.c.l.b16 %v1343
    %v1920 = vunpack.c.h.b16 %v1343
    %v1921 = vunpack.c.l.b16 %v1344
    %v1922 = vunpack.c.h.b16 %v1344
    %v1923 = vunpack.c.l.b16 %v1345
    %v1924 = vunpack.c.h.b16 %v1345
    %v1925 = vunpack.c.l.b16 %v1346
    %v1926 = vunpack.c.h.b16 %v1346
    %v1927 = vunpack.c.l.b16 %v1347
    %v1928 = vunpack.c.h.b16 %v1347
    %v1929 = vunpack.c.l.b16 %v1348
    %v1930 = vunpack.c.h.b16 %v1348
    %v1931 = vunpack.c.l.b16 %v1349
    %v1932 = vunpack.c.h.b16 %v1349
    %v1933 = vunpack.c.l.b16 %v1350
    %v1934 = vunpack.c.h.b16 %v1350
    %v1935 = vunpack.c.l.b16 %v1351
    %v1936 = vunpack.c.h.b16 %v1351
    %v1937 = vunpack.c.l.b16 %v1352
    %v1938 = vunpack.c.h.b16 %v1352
    %v1939 = vunpack.c.l.b16 %v1353
    %v1940 = vunpack.c.h.b16 %v1353
    %v1941 = vunpack.c.l.b16 %v1354
    %v1942 = vunpack.c.h.b16 %v1354
    %v1943 = vunpack.c.l.b16 %v1355
    %v1944 = vunpack.c.h.b16 %v1355
    %v1945 = vunpack.c.l.b16 %v1356
    %v1946 = vunpack.c.h.b16 %v1356
    %v1947 = vunpack.c.l.b16 %v1357
    %v1948 = vunpack.c.h.b16 %v1357
    %v1949 = vunpack.c.l.b16 %v1358
    %v1950 = vunpack.c.h.b16 %v1358
    %v1951 = vunpack.c.l.b16 %v1359
    %v1952 = vunpack.c.h.b16 %v1359
    %v1953 = vunpack.c.l.b16 %v1360
    %v1954 = vunpack.c.h.b16 %v1360
    %v1955 = vunpack.c.l.b16 %v1361
    %v1956 = vunpack.c.h.b16 %v1361
    %v1957 = vunpack.c.l.b16 %v1362
    %v1958 = vunpack.c.h.b16 %v1362
    %v1959 = vunpack.c.l.b16 %v1363
    %v1960 = vunpack.c.h.b16 %v1363
    %v1961 = vunpack.c.l.b16 %v1364
    %v1962 = vunpack.c.h.b16 %v1364
    %v1963 = vunpack.c.l.b16 %v1365
    %v1964 = vunpack.c.h.b16 %v1365
    %v1965 = vunpack.c.l.b16 %v1366
    %v1966 = vunpack.c.h.b16 %v1366
    %v1967 = vunpack.c.l.b16 %v1367
    %v1968 = vunpack.c.h.b16 %v1367
    %v1969 = vunpack.c.l.b16 %v1368
    %v1970 = vunpack.c.h.b16 %v1368
    %v1971 = vunpack.c.l.b16 %v1369
    %v1972 = vunpack.c.h.b16 %v1369
    %v1973 = vunpack.c.l.b16 %v1370
    %v1974 = vunpack.c.h.b16 %v1370
    %v1975 = vunpack.c.l.b16 %v1371
    %v1976 = vunpack.c.h.b16 %v1371
    %v1977 = vunpack.c.l.b16 %v1372
    %v1978 = vunpack.c.h.b16 %v1372
    %v1979 = vunpack.c.l.b16 %v1373
    %v1980 = vunpack.c.h.b16 %v1373
    %v1981 = vunpack.c.l.b16 %v1374
    %v1982 = vunpack.c.h.b16 %v1374
    %v1983 = vunpack.c.l.b16 %v1375
    %v1984 = vunpack.c.h.b16 %v1375
    %v1985 = vunpack.c.l.b16 %v1376
    %v1986 = vunpack.c.h.b16 %v1376
    %v1987 = vunpack.c.l.b16 %v1377
    %v1988 = vunpack.c.h.b16 %v1377
    %v1989 = vunpack.c.l.b16 %v1378
    %v1990 = vunpack.c.h.b16 %v1378
    %v1991 = vunpack.c.l.b16 %v1379
    %v1992 = vunpack.c.h.b16 %v1379
    %v1993 = vunpack.c.l.b16 %v1380
    %v1994 = vunpack.c.h.b16 %v1380
    %v1995 = vunpack.c.l.b16 %v1381
    %v1996 = vunpack.c.h.b16 %v1381
    %v1997 = vunpack.c.l.b16 %v1382
    %v1998 = vunpack.c.h.b16 %v1382
    %v1999 = vunpack.c.l.b16 %v1383
    %v2000 = vunpack.c.h.b16 %v1383
    %v2001 = vunpack.c.l.b16 %v1384
    %v2002 = vunpack.c.h.b16 %v1384
    %v2003 = vunpack.c.l.b16 %v1385
    %v2004 = vunpack.c.h.b16 %v1385
    %v2005 = vunpack.c.l.b16 %v1386
    %v2006 = vunpack.c.h.b16 %v1386
    %v2007 = vunpack.c.l.b16 %v1387
    %v2008 = vunpack.c.h.b16 %v1387
    %v2009 = vunpack.c.l.b16 %v1388
    %v2010 = vunpack.c.h.b16 %v1388
    %v2011 = vunpack.c.l.b16 %v1389
    %v2012 = vunpack.c.h.b16 %v1389
    %v2013 = vunpack.c.l.b16 %v1390
    %v2014 = vunpack.c.h.b16 %v1390
    %v2015 = vunpack.c.l.b16 %v1391
    %v2016 = vunpack.c.h.b16 %v1391
    %v2017 = vunpack.c.l.b16 %v1392
    %v2018 = vunpack.c.h.b16 %v1392
    %v2019 = vunpack.c.l.b16 %v1393
    %v2020 = vunpack.c.h.b16 %v1393
    %v2021 = vunpack.c.l.b16 %v1394
    %v2022 = vunpack.c.h.b16 %v1394
    %v2023 = vunpack.c.l.b16 %v1395
    %v2024 = vunpack.c.h.b16 %v1395
    %v2025 = vpack.c.b16 %v1773, %v1769
    %v2026 = vpack.c.b16 %v1774, %v1770
    %v2027 = vpack.c.b16 %v1775, %v1771
    %v2028 = vpack.c.b16 %v1776, %v1772
    %v2029 = vpack.c.b16 %v1781, %v1777
    %v2030 = vpack.c.b16 %v1782, %v1778
    %v2031 = vpack.c.b16 %v1783, %v1779
    %v2032 = vpack.c.b16 %v1784, %v1780
    %v2033 = vpack.c.b16 %v1789, %v1785
    %v2034 = vpack.c.b16 %v1790, %v1786
    %v2035 = vpack.c.b16 %v1791, %v1787
    %v2036 = vpack.c.b16 %v1792, %v1788
    %v2037 = vpack.c.b16 %v1797, %v1793
    %v2038 = vpack.c.b16 %v1798, %v1794
    %v2039 = vpack.c.b16 %v1799, %v1795
    %v2040 = vpack.c.b16 %v1800, %v1796
    %v2041 = vpack.c.b16 %v1805, %v1801
    %v2042 = vpack.c.b16 %v1806, %v1802
    %v2043 = vpack.c.b16 %v1807, %v1803
    %v2044 = vpack.c.b16 %v1808, %v1804
    %v2045 = vpack.c.b16 %v1813, %v1809
    %v2046 = vpack.c.b16 %v1814, %v1810
    %v2047 = vpack.c.b16 %v1815, %v1811
    %v2048 = vpack.c.b16 %v1816, %v1812
    %v2049 = vpack.c.b16 %v1821, %v1817
    %v2050 = vpack.c.b16 %v1822, %v1818
    %v2051 = vpack.c.b16 %v1823, %v1819
    %v2052 = vpack.c.b16 %v1824, %v1820
    %v2053 = vpack.c.b16 %v1829, %v1825
    %v2054 = vpack.c.b16 %v1830, %v1826
    %v2055 = vpack.c.b16 %v1831, %v1827
    %v2056 = vpack.c.b16 %v1832, %v1828
    %v2057 = vpack.c.b16 %v1837, %v1833
    %v2058 = vpack.c.b16 %v1838, %v1834
    %v2059 = vpack.c.b16 %v1839, %v1835
    %v2060 = vpack.c.b16 %v1840, %v1836
    %v2061 = vpack.c.b16 %v1845, %v1841
    %v2062 = vpack.c.b16 %v1846, %v1842
    %v2063 = vpack.c.b16 %v1847, %v1843
    %v2064 = vpack.c.b16 %v1848, %v1844
    %v2065 = vpack.c.b16 %v1853, %v1849
    %v2066 = vpack.c.b16 %v1854, %v1850
    %v2067 = vpack.c.b16 %v1855, %v1851
    %v2068 = vpack.c.b16 %v1856, %v1852
    %v2069 = vpack.c.b16 %v1861, %v1857
    %v2070 = vpack.c.b16 %v1862, %v1858
    %v2071 = vpack.c.b16 %v1863, %v1859
    %v2072 = vpack.c.b16 %v1864, %v1860
    %v2073 = vpack.c.b16 %v1869, %v1865
    %v2074 = vpack.c.b16 %v1870, %v1866
    %v2075 = vpack.c.b16 %v1871, %v1867
    %v2076 = vpack.c.b16 %v1872, %v1868
    %v2077 = vpack.c.b16 %v1877, %v1873
    %v2078 = vpack.c.b16 %v1878, %v1874
    %v2079 = vpack.c.b16 %v1879, %v1875
    %v2080 = vpack.c.b16 %v1880, %v1876
    %v2081 = vpack.c.b16 %v1885, %v1881
    %v2082 = vpack.c.b16 %v1886, %v1882
    %v2083 = vpack.c.b16 %v1887, %v1883
    %v2084 = vpack.c.b16 %v1888, %v1884
    %v2085 = vpack.c.b16 %v1893, %v1889
    %v2086 = vpack.c.b16 %v1894, %v1890
    %v2087 = vpack.c.b16 %v1895, %v1891
    %v2088 = vpack.c.b16 %v1896, %v1892
    %v2089 = vpack.c.b16 %v1901, %v1897
    %v2090 = vpack.c.b16 %v1902, %v1898
    %v2091 = vpack.c.b16 %v1903, %v1899
    %v2092 = vpack.c.b16 %v1904, %v1900
    %v2093 = vpack.c.b16 %v1909, %v1905
    %v2094 = vpack.c.b16 %v1910, %v1906
    %v2095 = vpack.c.b16 %v1911, %v1907
    %v2096 = vpack.c.b16 %v1912, %v1908
    %v2097 = vpack.c.b16 %v1917, %v1913
    %v2098 = vpack.c.b16 %v1918, %v1914
    %v2099 = vpack.c.b16 %v1919, %v1915
    %v2100 = vpack.c.b16 %v1920, %v1916
    %v2101 = vpack.c.b16 %v1925, %v1921
    %v2102 = vpack.c.b16 %v1926, %v1922
    %v2103 = vpack.c.b16 %v1927, %v1923
    %v2104 = vpack.c.b16 %v1928, %v1924
    %v2105 = vpack.c.b16 %v1933, %v1929
    %v2106 = vpack.c.b16 %v1934, %v1930
    %v2107 = vpack.c.b16 %v1935, %v1931
    %v2108 = vpack.c.b16 %v1936, %v1932
    %v2109 = vpack.c.b16 %v1941, %v1937
    %v2110 = vpack.c.b16 %v1942, %v1938
    %v2111 = vpack.c.b16 %v1943, %v1939
    %v2112 = vpack.c.b16 %v1944, %v1940
    %v2113 = vpack.c.b16 %v1949, %v1945
    %v2114 = vpack.c.b16 %v1950, %v1946
    %v2115 = vpack.c.b16 %v1951, %v1947
    %v2116 = vpack.c.b16 %v1952, %v1948
    %v2117 = vpack.c.b16 %v1957, %v1953
    %v2118 = vpack.c.b16 %v1958, %v1954
    %v2119 = vpack.c.b16 %v1959, %v1955
    %v2120 = vpack.c.b16 %v1960, %v1956
    %v2121 = vpack.c.b16 %v1965, %v1961
    %v2122 = vpack.c.b16 %v1966, %v1962
    %v2123 = vpack.c.b16 %v1967, %v1963
    %v2124 = vpack.c.b16 %v1968, %v1964
    %v2125 = vpack.c.b16 %v1973, %v1969
    %v2126 = vpack.c.b16 %v1974, %v1970
    %v2127 = vpack.c.b16 %v1975, %v1971
    %v2128 = vpack.c.b16 %v1976, %v1972
    %v2129 = vpack.c.b16 %v1981, %v1977
    %v2130 = vpack.c.b16 %v1982, %v1978
    %v2131 = vpack.c.b16 %v1983, %v1979
    %v2132 = vpack.c.b16 %v1984, %v1980
    %v2133 = vpack.c.b16 %v1989, %v1985
    %v2134 = vpack.c.b16 %v1990, %v1986
    %v2135 = vpack.c.b16 %v1991, %v1987
    %v2136 = vpack.c.b16 %v1992, %v1988
    %v2137 = vpack.c.b16 %v1997, %v1993
    %v2138 = vpack.c.b16 %v1998, %v1994
    %v2139 = vpack.c.b16 %v1999, %v1995
    %v2140 = vpack.c.b16 %v2000, %v1996
    %v2141 = vpack.c.b16 %v2005, %v2001
    %v2142 = vpack.c.b16 %v2006, %v2002
    %v2143 = vpack.c.b16 %v2007, %v2003
    %v2144 = vpack.c.b16 %v2008, %v2004
    %v2145 = vpack.c.b16 %v2013, %v2009
    %v2146 = vpack.c.b16 %v2014, %v2010
    %v2147 = vpack.c.b16 %v2015, %v2011
    %v2148 = vpack.c.b16 %v2016, %v2012
    %v2149 = vpack.c.b16 %v2021, %v2017
    %v2150 = vpack.c.b16 %v2022, %v2018
    %v2151 = vpack.c.b16 %v2023, %v2019
    %v2152 = vpack.c.b16 %v2024, %v2020
    %2281 = vmatpush.bf16.msra.mxu0 %v2053
    %2282 = vmatpush.bf16.msra.mxu0 %v2049
    %2283 = vmatpush.bf16.msra.mxu0 %v2045
    %2284 = vmatpush.bf16.msra.mxu0 %v2041
    %2285 = vmatpush.bf16.msra.mxu0 %v2037
    %2286 = vmatpush.bf16.msra.mxu0 %v2033
    %2287 = vmatpush.bf16.msra.mxu0 %v2029
    %2288 = vmatpush.bf16.msra.mxu0 %v2025
    %2289 = vmatmul.bf16.gmra.mxu0 %v1264
    %v2290 = vpop.f32.mrf.mxu0
    %v2291 = vadd.f32 %v1599, %v2290
    %v2292 = vpop.f32.mrf.mxu0
    %2293 = vdwg.mxu0
    %2294 = vmatpush.bf16.msra.mxu0 %v2085
    %2295 = vmatpush.bf16.msra.mxu0 %v2081
    %2296 = vmatpush.bf16.msra.mxu0 %v2077
    %2297 = vmatpush.bf16.msra.mxu0 %v2073
    %2298 = vmatpush.bf16.msra.mxu0 %v2069
    %2299 = vmatpush.bf16.msra.mxu0 %v2065
    %2300 = vmatpush.bf16.msra.mxu0 %v2061
    %2301 = vmatpush.bf16.msra.mxu0 %v2057
    %2302 = vmatmul.bf16.gmra.mxu0 %v1265
    %v2303 = vpop.f32.mrf.mxu0
    %v2304 = vadd.f32 %v2291, %v2303
    %v2305 = vpop.f32.mrf.mxu0
    %2306 = vdwg.mxu0
    %2307 = vmatpush.bf16.msra.mxu0 %v2117
    %2308 = vmatpush.bf16.msra.mxu0 %v2113
    %2309 = vmatpush.bf16.msra.mxu0 %v2109
    %2310 = vmatpush.bf16.msra.mxu0 %v2105
    %2311 = vmatpush.bf16.msra.mxu0 %v2101
    %2312 = vmatpush.bf16.msra.mxu0 %v2097
    %2313 = vmatpush.bf16.msra.mxu0 %v2093
    %2314 = vmatpush.bf16.msra.mxu0 %v2089
    %2315 = vmatmul.bf16.gmra.mxu0 %v1266
    %v2316 = vpop.f32.mrf.mxu0
    %v2317 = vadd.f32 %v2304, %v2316
    %v2318 = vpop.f32.mrf.mxu0
    %2319 = vdwg.mxu0
    %2320 = vmatpush.bf16.msra.mxu0 %v2149
    %2321 = vmatpush.bf16.msra.mxu0 %v2145
    %2322 = vmatpush.bf16.msra.mxu0 %v2141
    %2323 = vmatpush.bf16.msra.mxu0 %v2137
    %2324 = vmatpush.bf16.msra.mxu0 %v2133
    %2325 = vmatpush.bf16.msra.mxu0 %v2129
    %2326 = vmatpush.bf16.msra.mxu0 %v2125
    %2327 = vmatpush.bf16.msra.mxu0 %v2121
    %2328 = vmatmul.bf16.gmra.mxu0 %v1267
    %v2329 = vpop.f32.mrf.mxu0
    %v2330 = vadd.f32 %v2317, %v2329
    %v2331 = vpop.f32.mrf.mxu0
    %2332 = vdwg.mxu0
    %2333 = vmatpush.bf16.msra.mxu0 %v2054
    %2334 = vmatpush.bf16.msra.mxu0 %v2050
    %2335 = vmatpush.bf16.msra.mxu0 %v2046
    %2336 = vmatpush.bf16.msra.mxu0 %v2042
    %2337 = vmatpush.bf16.msra.mxu0 %v2038
    %2338 = vmatpush.bf16.msra.mxu0 %v2034
    %2339 = vmatpush.bf16.msra.mxu0 %v2030
    %2340 = vmatpush.bf16.msra.mxu0 %v2026
    %2341 = vmatmul.bf16.gmra.mxu0 %v1264
    %v2342 = vpop.f32.mrf.mxu0
    %v2343 = vadd.f32 %v1612, %v2342
    %v2344 = vpop.f32.mrf.mxu0
    %2345 = vdwg.mxu0
    %2346 = vmatpush.bf16.msra.mxu0 %v2086
    %2347 = vmatpush.bf16.msra.mxu0 %v2082
    %2348 = vmatpush.bf16.msra.mxu0 %v2078
    %2349 = vmatpush.bf16.msra.mxu0 %v2074
    %2350 = vmatpush.bf16.msra.mxu0 %v2070
    %2351 = vmatpush.bf16.msra.mxu0 %v2066
    %2352 = vmatpush.bf16.msra.mxu0 %v2062
    %2353 = vmatpush.bf16.msra.mxu0 %v2058
    %2354 = vmatmul.bf16.gmra.mxu0 %v1265
    %v2355 = vpop.f32.mrf.mxu0
    %v2356 = vadd.f32 %v2343, %v2355
    %v2357 = vpop.f32.mrf.mxu0
    %2358 = vdwg.mxu0
    %2359 = vmatpush.bf16.msra.mxu0 %v2118
    %2360 = vmatpush.bf16.msra.mxu0 %v2114
    %2361 = vmatpush.bf16.msra.mxu0 %v2110
    %2362 = vmatpush.bf16.msra.mxu0 %v2106
    %2363 = vmatpush.bf16.msra.mxu0 %v2102
    %2364 = vmatpush.bf16.msra.mxu0 %v2098
    %2365 = vmatpush.bf16.msra.mxu0 %v2094
    %2366 = vmatpush.bf16.msra.mxu0 %v2090
    %2367 = vmatmul.bf16.gmra.mxu0 %v1266
    %v2368 = vpop.f32.mrf.mxu0
    %v2369 = vadd.f32 %v2356, %v2368
    %v2370 = vpop.f32.mrf.mxu0
    %2371 = vdwg.mxu0
    %2372 = vmatpush.bf16.msra.mxu0 %v2150
    %2373 = vmatpush.bf16.msra.mxu0 %v2146
    %2374 = vmatpush.bf16.msra.mxu0 %v2142
    %2375 = vmatpush.bf16.msra.mxu0 %v2138
    %2376 = vmatpush.bf16.msra.mxu0 %v2134
    %2377 = vmatpush.bf16.msra.mxu0 %v2130
    %2378 = vmatpush.bf16.msra.mxu0 %v2126
    %2379 = vmatpush.bf16.msra.mxu0 %v2122
    %2380 = vmatmul.bf16.gmra.mxu0 %v1267
    %v2381 = vpop.f32.mrf.mxu0
    %v2382 = vadd.f32 %v2369, %v2381
    %v2383 = vpop.f32.mrf.mxu0
    %2384 = vdwg.mxu0
    %2385 = vmatpush.bf16.msra.mxu0 %v2055
    %2386 = vmatpush.bf16.msra.mxu0 %v2051
    %2387 = vmatpush.bf16.msra.mxu0 %v2047
    %2388 = vmatpush.bf16.msra.mxu0 %v2043
    %2389 = vmatpush.bf16.msra.mxu0 %v2039
    %2390 = vmatpush.bf16.msra.mxu0 %v2035
    %2391 = vmatpush.bf16.msra.mxu0 %v2031
    %2392 = vmatpush.bf16.msra.mxu0 %v2027
    %2393 = vmatmul.bf16.gmra.mxu0 %v1264
    %v2394 = vpop.f32.mrf.mxu0
    %v2395 = vadd.f32 %v1625, %v2394
    %v2396 = vpop.f32.mrf.mxu0
    %2397 = vdwg.mxu0
    %2398 = vmatpush.bf16.msra.mxu0 %v2087
    %2399 = vmatpush.bf16.msra.mxu0 %v2083
    %2400 = vmatpush.bf16.msra.mxu0 %v2079
    %2401 = vmatpush.bf16.msra.mxu0 %v2075
    %2402 = vmatpush.bf16.msra.mxu0 %v2071
    %2403 = vmatpush.bf16.msra.mxu0 %v2067
    %2404 = vmatpush.bf16.msra.mxu0 %v2063
    %2405 = vmatpush.bf16.msra.mxu0 %v2059
    %2406 = vmatmul.bf16.gmra.mxu0 %v1265
    %v2407 = vpop.f32.mrf.mxu0
    %v2408 = vadd.f32 %v2395, %v2407
    %v2409 = vpop.f32.mrf.mxu0
    %2410 = vdwg.mxu0
    %2411 = vmatpush.bf16.msra.mxu0 %v2119
    %2412 = vmatpush.bf16.msra.mxu0 %v2115
    %2413 = vmatpush.bf16.msra.mxu0 %v2111
    %2414 = vmatpush.bf16.msra.mxu0 %v2107
    %2415 = vmatpush.bf16.msra.mxu0 %v2103
    %2416 = vmatpush.bf16.msra.mxu0 %v2099
    %2417 = vmatpush.bf16.msra.mxu0 %v2095
    %2418 = vmatpush.bf16.msra.mxu0 %v2091
    %2419 = vmatmul.bf16.gmra.mxu0 %v1266
    %v2420 = vpop.f32.mrf.mxu0
    %v2421 = vadd.f32 %v2408, %v2420
    %v2422 = vpop.f32.mrf.mxu0
    %2423 = vdwg.mxu0
    %2424 = vmatpush.bf16.msra.mxu0 %v2151
    %2425 = vmatpush.bf16.msra.mxu0 %v2147
    %2426 = vmatpush.bf16.msra.mxu0 %v2143
    %2427 = vmatpush.bf16.msra.mxu0 %v2139
    %2428 = vmatpush.bf16.msra.mxu0 %v2135
    %2429 = vmatpush.bf16.msra.mxu0 %v2131
    %2430 = vmatpush.bf16.msra.mxu0 %v2127
    %2431 = vmatpush.bf16.msra.mxu0 %v2123
    %2432 = vmatmul.bf16.gmra.mxu0 %v1267
    %v2433 = vpop.f32.mrf.mxu0
    %v2434 = vadd.f32 %v2421, %v2433
    %v2435 = vpop.f32.mrf.mxu0
    %2436 = vdwg.mxu0
    %2437 = vmatpush.bf16.msra.mxu0 %v2056
    %2438 = vmatpush.bf16.msra.mxu0 %v2052
    %2439 = vmatpush.bf16.msra.mxu0 %v2048
    %2440 = vmatpush.bf16.msra.mxu0 %v2044
    %2441 = vmatpush.bf16.msra.mxu0 %v2040
    %2442 = vmatpush.bf16.msra.mxu0 %v2036
    %2443 = vmatpush.bf16.msra.mxu0 %v2032
    %2444 = vmatpush.bf16.msra.mxu0 %v2028
    %2445 = vmatmul.bf16.gmra.mxu0 %v1264
    %v2446 = vpop.f32.mrf.mxu0
    %v2447 = vadd.f32 %v1638, %v2446
    %v2448 = vpop.f32.mrf.mxu0
    %2449 = vdwg.mxu0
    %2450 = vmatpush.bf16.msra.mxu0 %v2088
    %2451 = vmatpush.bf16.msra.mxu0 %v2084
    %2452 = vmatpush.bf16.msra.mxu0 %v2080
    %2453 = vmatpush.bf16.msra.mxu0 %v2076
    %2454 = vmatpush.bf16.msra.mxu0 %v2072
    %2455 = vmatpush.bf16.msra.mxu0 %v2068
    %2456 = vmatpush.bf16.msra.mxu0 %v2064
    %2457 = vmatpush.bf16.msra.mxu0 %v2060
    %2458 = vmatmul.bf16.gmra.mxu0 %v1265
    %v2459 = vpop.f32.mrf.mxu0
    %v2460 = vadd.f32 %v2447, %v2459
    %v2461 = vpop.f32.mrf.mxu0
    %2462 = vdwg.mxu0
    %2463 = vmatpush.bf16.msra.mxu0 %v2120
    %2464 = vmatpush.bf16.msra.mxu0 %v2116
    %2465 = vmatpush.bf16.msra.mxu0 %v2112
    %2466 = vmatpush.bf16.msra.mxu0 %v2108
    %2467 = vmatpush.bf16.msra.mxu0 %v2104
    %2468 = vmatpush.bf16.msra.mxu0 %v2100
    %2469 = vmatpush.bf16.msra.mxu0 %v2096
    %2470 = vmatpush.bf16.msra.mxu0 %v2092
    %2471 = vmatmul.bf16.gmra.mxu0 %v1266
    %v2472 = vpop.f32.mrf.mxu0
    %v2473 = vadd.f32 %v2460, %v2472
    %v2474 = vpop.f32.mrf.mxu0
    %2475 = vdwg.mxu0
    %2476 = vmatpush.bf16.msra.mxu0 %v2152
    %2477 = vmatpush.bf16.msra.mxu0 %v2148
    %2478 = vmatpush.bf16.msra.mxu0 %v2144
    %2479 = vmatpush.bf16.msra.mxu0 %v2140
    %2480 = vmatpush.bf16.msra.mxu0 %v2136
    %2481 = vmatpush.bf16.msra.mxu0 %v2132
    %2482 = vmatpush.bf16.msra.mxu0 %v2128
    %2483 = vmatpush.bf16.msra.mxu0 %v2124
    %2484 = vmatmul.bf16.gmra.mxu0 %v1267
    %v2485 = vpop.f32.mrf.mxu0
    %v2486 = vadd.f32 %v2473, %v2485
    %v2487 = vpop.f32.mrf.mxu0
    %2488 = vdwg.mxu0
    %v2489 = vld [vmem:[#allocation14] sm:$0xf]
    %v2491 = vperm.slane %v2489, 0
    %v2492 = vperm.slane %v2489, 1
    %v2493 = vperm.slane %v2489, 2
    %v2494 = vperm.slane %v2489, 3
    %v2499 = vadd.f32 %v2330, %v2491
    %v2500 = vadd.f32 %v2382, %v2492
    %v2501 = vadd.f32 %v2434, %v2493
    %v2502 = vadd.f32 %v2486, %v2494
    %v2503 = vmax.f32 %v2499, 0.0
    %v2504 = vmax.f32 %v2500, 0.0
    %v2505 = vmax.f32 %v2501, 0.0
    %v2506 = vmax.f32 %v2502, 0.0
    %v2507 = vpack.c.bf16 %v2503, %v2503
    %v2508 = vpack.c.bf16 %v2504, %v2504
    %v2509 = vpack.c.bf16 %v2505, %v2505
    %v2510 = vpack.c.bf16 %v2506, %v2506
    %v2511 = vld [vmem:[#allocation16] sm:$0xff]
    %v2512 = vld [vmem:[#allocation16 + $0x8] sm:$0xff]
    %v2513 = vld [vmem:[#allocation16 + $0x10] sm:$0xff]
    %v2514 = vld [vmem:[#allocation16 + $0x18] sm:$0xff]
    %v2515 = vld [vmem:[#allocation16 + $0x20] sm:$0xff]
    %v2516 = vld [vmem:[#allocation16 + $0x28] sm:$0xff]
    %v2517 = vld [vmem:[#allocation16 + $0x30] sm:$0xff]
    %v2518 = vld [vmem:[#allocation16 + $0x38] sm:$0xff]
    %v2519 = vld [vmem:[#allocation16 + $0x40] sm:$0xff]
    %v2520 = vld [vmem:[#allocation16 + $0x48] sm:$0xff]
    %v2521 = vld [vmem:[#allocation16 + $0x50] sm:$0xff]
    %v2522 = vld [vmem:[#allocation16 + $0x58] sm:$0xff]
    %v2523 = vld [vmem:[#allocation16 + $0x60] sm:$0xff]
    %v2524 = vld [vmem:[#allocation16 + $0x68] sm:$0xff]
    %v2525 = vld [vmem:[#allocation16 + $0x70] sm:$0xff]
    %v2526 = vld [vmem:[#allocation16 + $0x78] sm:$0xff]
    %v2527 = vld [vmem:[#allocation16 + $0x80] sm:$0xff]
    %v2528 = vld [vmem:[#allocation16 + $0x88] sm:$0xff]
    %v2529 = vld [vmem:[#allocation16 + $0x90] sm:$0xff]
    %v2530 = vld [vmem:[#allocation16 + $0x98] sm:$0xff]
    %v2531 = vld [vmem:[#allocation16 + $0xa0] sm:$0xff]
    %v2532 = vld [vmem:[#allocation16 + $0xa8] sm:$0xff]
    %v2533 = vld [vmem:[#allocation16 + $0xb0] sm:$0xff]
    %v2534 = vld [vmem:[#allocation16 + $0xb8] sm:$0xff]
    %v2535 = vld [vmem:[#allocation16 + $0xc0] sm:$0xff]
    %v2536 = vld [vmem:[#allocation16 + $0xc8] sm:$0xff]
    %v2537 = vld [vmem:[#allocation16 + $0xd0] sm:$0xff]
    %v2538 = vld [vmem:[#allocation16 + $0xd8] sm:$0xff]
    %v2539 = vld [vmem:[#allocation16 + $0xe0] sm:$0xff]
    %v2540 = vld [vmem:[#allocation16 + $0xe8] sm:$0xff]
    %v2541 = vld [vmem:[#allocation16 + $0xf0] sm:$0xff]
    %v2542 = vld [vmem:[#allocation16 + $0xf8] sm:$0xff]
    %v2543 = vld [vmem:[#allocation16 + $0x100] sm:$0xff]
    %v2544 = vld [vmem:[#allocation16 + $0x108] sm:$0xff]
    %v2545 = vld [vmem:[#allocation16 + $0x110] sm:$0xff]
    %v2546 = vld [vmem:[#allocation16 + $0x118] sm:$0xff]
    %v2547 = vld [vmem:[#allocation16 + $0x120] sm:$0xff]
    %v2548 = vld [vmem:[#allocation16 + $0x128] sm:$0xff]
    %v2549 = vld [vmem:[#allocation16 + $0x130] sm:$0xff]
    %v2550 = vld [vmem:[#allocation16 + $0x138] sm:$0xff]
    %v2551 = vld [vmem:[#allocation16 + $0x140] sm:$0xff]
    %v2552 = vld [vmem:[#allocation16 + $0x148] sm:$0xff]
    %v2553 = vld [vmem:[#allocation16 + $0x150] sm:$0xff]
    %v2554 = vld [vmem:[#allocation16 + $0x158] sm:$0xff]
    %v2555 = vld [vmem:[#allocation16 + $0x160] sm:$0xff]
    %v2556 = vld [vmem:[#allocation16 + $0x168] sm:$0xff]
    %v2557 = vld [vmem:[#allocation16 + $0x170] sm:$0xff]
    %v2558 = vld [vmem:[#allocation16 + $0x178] sm:$0xff]
    %v2559 = vld [vmem:[#allocation16 + $0x180] sm:$0xff]
    %v2560 = vld [vmem:[#allocation16 + $0x188] sm:$0xff]
    %v2561 = vld [vmem:[#allocation16 + $0x190] sm:$0xff]
    %v2562 = vld [vmem:[#allocation16 + $0x198] sm:$0xff]
    %v2563 = vld [vmem:[#allocation16 + $0x1a0] sm:$0xff]
    %v2564 = vld [vmem:[#allocation16 + $0x1a8] sm:$0xff]
    %v2565 = vld [vmem:[#allocation16 + $0x1b0] sm:$0xff]
    %v2566 = vld [vmem:[#allocation16 + $0x1b8] sm:$0xff]
    %v2567 = vld [vmem:[#allocation16 + $0x1c0] sm:$0xff]
    %v2568 = vld [vmem:[#allocation16 + $0x1c8] sm:$0xff]
    %v2569 = vld [vmem:[#allocation16 + $0x1d0] sm:$0xff]
    %v2570 = vld [vmem:[#allocation16 + $0x1d8] sm:$0xff]
    %v2571 = vld [vmem:[#allocation16 + $0x1e0] sm:$0xff]
    %v2572 = vld [vmem:[#allocation16 + $0x1e8] sm:$0xff]
    %v2573 = vld [vmem:[#allocation16 + $0x1f0] sm:$0xff]
    %v2574 = vld [vmem:[#allocation16 + $0x1f8] sm:$0xff]
    %v2575 = vld [vmem:[#allocation16 + $0x200] sm:$0xff]
    %v2576 = vld [vmem:[#allocation16 + $0x208] sm:$0xff]
    %v2577 = vld [vmem:[#allocation16 + $0x210] sm:$0xff]
    %v2578 = vld [vmem:[#allocation16 + $0x218] sm:$0xff]
    %v2579 = vld [vmem:[#allocation16 + $0x220] sm:$0xff]
    %v2580 = vld [vmem:[#allocation16 + $0x228] sm:$0xff]
    %v2581 = vld [vmem:[#allocation16 + $0x230] sm:$0xff]
    %v2582 = vld [vmem:[#allocation16 + $0x238] sm:$0xff]
    %v2583 = vld [vmem:[#allocation16 + $0x240] sm:$0xff]
    %v2584 = vld [vmem:[#allocation16 + $0x248] sm:$0xff]
    %v2585 = vld [vmem:[#allocation16 + $0x250] sm:$0xff]
    %v2586 = vld [vmem:[#allocation16 + $0x258] sm:$0xff]
    %v2587 = vld [vmem:[#allocation16 + $0x260] sm:$0xff]
    %v2588 = vld [vmem:[#allocation16 + $0x268] sm:$0xff]
    %v2589 = vld [vmem:[#allocation16 + $0x270] sm:$0xff]
    %v2590 = vld [vmem:[#allocation16 + $0x278] sm:$0xff]
    %v2591 = vld [vmem:[#allocation16 + $0x280] sm:$0xff]
    %v2592 = vld [vmem:[#allocation16 + $0x288] sm:$0xff]
    %v2593 = vld [vmem:[#allocation16 + $0x290] sm:$0xff]
    %v2594 = vld [vmem:[#allocation16 + $0x298] sm:$0xff]
    %v2595 = vld [vmem:[#allocation16 + $0x2a0] sm:$0xff]
    %v2596 = vld [vmem:[#allocation16 + $0x2a8] sm:$0xff]
    %v2597 = vld [vmem:[#allocation16 + $0x2b0] sm:$0xff]
    %v2598 = vld [vmem:[#allocation16 + $0x2b8] sm:$0xff]
    %v2599 = vld [vmem:[#allocation16 + $0x2c0] sm:$0xff]
    %v2600 = vld [vmem:[#allocation16 + $0x2c8] sm:$0xff]
    %v2601 = vld [vmem:[#allocation16 + $0x2d0] sm:$0xff]
    %v2602 = vld [vmem:[#allocation16 + $0x2d8] sm:$0xff]
    %v2603 = vld [vmem:[#allocation16 + $0x2e0] sm:$0xff]
    %v2604 = vld [vmem:[#allocation16 + $0x2e8] sm:$0xff]
    %v2605 = vld [vmem:[#allocation16 + $0x2f0] sm:$0xff]
    %v2606 = vld [vmem:[#allocation16 + $0x2f8] sm:$0xff]
    %v2607 = vld [vmem:[#allocation16 + $0x300] sm:$0xff]
    %v2608 = vld [vmem:[#allocation16 + $0x308] sm:$0xff]
    %v2609 = vld [vmem:[#allocation16 + $0x310] sm:$0xff]
    %v2610 = vld [vmem:[#allocation16 + $0x318] sm:$0xff]
    %v2611 = vld [vmem:[#allocation16 + $0x320] sm:$0xff]
    %v2612 = vld [vmem:[#allocation16 + $0x328] sm:$0xff]
    %v2613 = vld [vmem:[#allocation16 + $0x330] sm:$0xff]
    %v2614 = vld [vmem:[#allocation16 + $0x338] sm:$0xff]
    %v2615 = vld [vmem:[#allocation16 + $0x340] sm:$0xff]
    %v2616 = vld [vmem:[#allocation16 + $0x348] sm:$0xff]
    %v2617 = vld [vmem:[#allocation16 + $0x350] sm:$0xff]
    %v2618 = vld [vmem:[#allocation16 + $0x358] sm:$0xff]
    %v2619 = vld [vmem:[#allocation16 + $0x360] sm:$0xff]
    %v2620 = vld [vmem:[#allocation16 + $0x368] sm:$0xff]
    %v2621 = vld [vmem:[#allocation16 + $0x370] sm:$0xff]
    %v2622 = vld [vmem:[#allocation16 + $0x378] sm:$0xff]
    %v2623 = vld [vmem:[#allocation16 + $0x380] sm:$0xff]
    %v2624 = vld [vmem:[#allocation16 + $0x388] sm:$0xff]
    %v2625 = vld [vmem:[#allocation16 + $0x390] sm:$0xff]
    %v2626 = vld [vmem:[#allocation16 + $0x398] sm:$0xff]
    %v2627 = vld [vmem:[#allocation16 + $0x3a0] sm:$0xff]
    %v2628 = vld [vmem:[#allocation16 + $0x3a8] sm:$0xff]
    %v2629 = vld [vmem:[#allocation16 + $0x3b0] sm:$0xff]
    %v2630 = vld [vmem:[#allocation16 + $0x3b8] sm:$0xff]
    %v2631 = vld [vmem:[#allocation16 + $0x3c0] sm:$0xff]
    %v2632 = vld [vmem:[#allocation16 + $0x3c8] sm:$0xff]
    %v2633 = vld [vmem:[#allocation16 + $0x3d0] sm:$0xff]
    %v2634 = vld [vmem:[#allocation16 + $0x3d8] sm:$0xff]
    %v2635 = vld [vmem:[#allocation16 + $0x3e0] sm:$0xff]
    %v2636 = vld [vmem:[#allocation16 + $0x3e8] sm:$0xff]
    %v2637 = vld [vmem:[#allocation16 + $0x3f0] sm:$0xff]
    %v2638 = vld [vmem:[#allocation16 + $0x3f8] sm:$0xff]
    %v2639 = vld [vmem:[#allocation16 + $0x400] sm:$0xff]
    %v2640 = vld [vmem:[#allocation16 + $0x408] sm:$0xff]
    %v2641 = vld [vmem:[#allocation16 + $0x410] sm:$0xff]
    %v2642 = vld [vmem:[#allocation16 + $0x418] sm:$0xff]
    %v2643 = vld [vmem:[#allocation16 + $0x420] sm:$0xff]
    %v2644 = vld [vmem:[#allocation16 + $0x428] sm:$0xff]
    %v2645 = vld [vmem:[#allocation16 + $0x430] sm:$0xff]
    %v2646 = vld [vmem:[#allocation16 + $0x438] sm:$0xff]
    %v2647 = vld [vmem:[#allocation16 + $0x440] sm:$0xff]
    %v2648 = vld [vmem:[#allocation16 + $0x448] sm:$0xff]
    %v2649 = vld [vmem:[#allocation16 + $0x450] sm:$0xff]
    %v2650 = vld [vmem:[#allocation16 + $0x458] sm:$0xff]
    %v2651 = vld [vmem:[#allocation16 + $0x460] sm:$0xff]
    %v2652 = vld [vmem:[#allocation16 + $0x468] sm:$0xff]
    %v2653 = vld [vmem:[#allocation16 + $0x470] sm:$0xff]
    %v2654 = vld [vmem:[#allocation16 + $0x478] sm:$0xff]
    %v2655 = vld [vmem:[#allocation16 + $0x480] sm:$0xff]
    %v2656 = vld [vmem:[#allocation16 + $0x488] sm:$0xff]
    %v2657 = vld [vmem:[#allocation16 + $0x490] sm:$0xff]
    %v2658 = vld [vmem:[#allocation16 + $0x498] sm:$0xff]
    %v2659 = vld [vmem:[#allocation16 + $0x4a0] sm:$0xff]
    %v2660 = vld [vmem:[#allocation16 + $0x4a8] sm:$0xff]
    %v2661 = vld [vmem:[#allocation16 + $0x4b0] sm:$0xff]
    %v2662 = vld [vmem:[#allocation16 + $0x4b8] sm:$0xff]
    %v2663 = vld [vmem:[#allocation16 + $0x4c0] sm:$0xff]
    %v2664 = vld [vmem:[#allocation16 + $0x4c8] sm:$0xff]
    %v2665 = vld [vmem:[#allocation16 + $0x4d0] sm:$0xff]
    %v2666 = vld [vmem:[#allocation16 + $0x4d8] sm:$0xff]
    %v2667 = vld [vmem:[#allocation16 + $0x4e0] sm:$0xff]
    %v2668 = vld [vmem:[#allocation16 + $0x4e8] sm:$0xff]
    %v2669 = vld [vmem:[#allocation16 + $0x4f0] sm:$0xff]
    %v2670 = vld [vmem:[#allocation16 + $0x4f8] sm:$0xff]
    %v2671 = vld [vmem:[#allocation16 + $0x500] sm:$0xff]
    %v2672 = vld [vmem:[#allocation16 + $0x508] sm:$0xff]
    %v2673 = vld [vmem:[#allocation16 + $0x510] sm:$0xff]
    %v2674 = vld [vmem:[#allocation16 + $0x518] sm:$0xff]
    %v2675 = vld [vmem:[#allocation16 + $0x520] sm:$0xff]
    %v2676 = vld [vmem:[#allocation16 + $0x528] sm:$0xff]
    %v2677 = vld [vmem:[#allocation16 + $0x530] sm:$0xff]
    %v2678 = vld [vmem:[#allocation16 + $0x538] sm:$0xff]
    %v2679 = vld [vmem:[#allocation16 + $0x540] sm:$0xff]
    %v2680 = vld [vmem:[#allocation16 + $0x548] sm:$0xff]
    %v2681 = vld [vmem:[#allocation16 + $0x550] sm:$0xff]
    %v2682 = vld [vmem:[#allocation16 + $0x558] sm:$0xff]
    %v2683 = vld [vmem:[#allocation16 + $0x560] sm:$0xff]
    %v2684 = vld [vmem:[#allocation16 + $0x568] sm:$0xff]
    %v2685 = vld [vmem:[#allocation16 + $0x570] sm:$0xff]
    %v2686 = vld [vmem:[#allocation16 + $0x578] sm:$0xff]
    %v2687 = vld [vmem:[#allocation16 + $0x580] sm:$0xff]
    %v2688 = vld [vmem:[#allocation16 + $0x588] sm:$0xff]
    %v2689 = vld [vmem:[#allocation16 + $0x590] sm:$0xff]
    %v2690 = vld [vmem:[#allocation16 + $0x598] sm:$0xff]
    %v2691 = vld [vmem:[#allocation16 + $0x5a0] sm:$0xff]
    %v2692 = vld [vmem:[#allocation16 + $0x5a8] sm:$0xff]
    %v2693 = vld [vmem:[#allocation16 + $0x5b0] sm:$0xff]
    %v2694 = vld [vmem:[#allocation16 + $0x5b8] sm:$0xff]
    %v2695 = vld [vmem:[#allocation16 + $0x5c0] sm:$0xff]
    %v2696 = vld [vmem:[#allocation16 + $0x5c8] sm:$0xff]
    %v2697 = vld [vmem:[#allocation16 + $0x5d0] sm:$0xff]
    %v2698 = vld [vmem:[#allocation16 + $0x5d8] sm:$0xff]
    %v2699 = vld [vmem:[#allocation16 + $0x5e0] sm:$0xff]
    %v2700 = vld [vmem:[#allocation16 + $0x5e8] sm:$0xff]
    %v2701 = vld [vmem:[#allocation16 + $0x5f0] sm:$0xff]
    %v2702 = vld [vmem:[#allocation16 + $0x5f8] sm:$0xff]
    %v2703 = vld [vmem:[#allocation16 + $0x600] sm:$0xff]
    %v2704 = vld [vmem:[#allocation16 + $0x608] sm:$0xff]
    %v2705 = vld [vmem:[#allocation16 + $0x610] sm:$0xff]
    %v2706 = vld [vmem:[#allocation16 + $0x618] sm:$0xff]
    %v2707 = vld [vmem:[#allocation16 + $0x620] sm:$0xff]
    %v2708 = vld [vmem:[#allocation16 + $0x628] sm:$0xff]
    %v2709 = vld [vmem:[#allocation16 + $0x630] sm:$0xff]
    %v2710 = vld [vmem:[#allocation16 + $0x638] sm:$0xff]
    %v2711 = vld [vmem:[#allocation16 + $0x640] sm:$0xff]
    %v2712 = vld [vmem:[#allocation16 + $0x648] sm:$0xff]
    %v2713 = vld [vmem:[#allocation16 + $0x650] sm:$0xff]
    %v2714 = vld [vmem:[#allocation16 + $0x658] sm:$0xff]
    %v2715 = vld [vmem:[#allocation16 + $0x660] sm:$0xff]
    %v2716 = vld [vmem:[#allocation16 + $0x668] sm:$0xff]
    %v2717 = vld [vmem:[#allocation16 + $0x670] sm:$0xff]
    %v2718 = vld [vmem:[#allocation16 + $0x678] sm:$0xff]
    %v2719 = vld [vmem:[#allocation16 + $0x680] sm:$0xff]
    %v2720 = vld [vmem:[#allocation16 + $0x688] sm:$0xff]
    %v2721 = vld [vmem:[#allocation16 + $0x690] sm:$0xff]
    %v2722 = vld [vmem:[#allocation16 + $0x698] sm:$0xff]
    %v2723 = vld [vmem:[#allocation16 + $0x6a0] sm:$0xff]
    %v2724 = vld [vmem:[#allocation16 + $0x6a8] sm:$0xff]
    %v2725 = vld [vmem:[#allocation16 + $0x6b0] sm:$0xff]
    %v2726 = vld [vmem:[#allocation16 + $0x6b8] sm:$0xff]
    %v2727 = vld [vmem:[#allocation16 + $0x6c0] sm:$0xff]
    %v2728 = vld [vmem:[#allocation16 + $0x6c8] sm:$0xff]
    %v2729 = vld [vmem:[#allocation16 + $0x6d0] sm:$0xff]
    %v2730 = vld [vmem:[#allocation16 + $0x6d8] sm:$0xff]
    %v2731 = vld [vmem:[#allocation16 + $0x6e0] sm:$0xff]
    %v2732 = vld [vmem:[#allocation16 + $0x6e8] sm:$0xff]
    %v2733 = vld [vmem:[#allocation16 + $0x6f0] sm:$0xff]
    %v2734 = vld [vmem:[#allocation16 + $0x6f8] sm:$0xff]
    %v2735 = vld [vmem:[#allocation16 + $0x700] sm:$0xff]
    %v2736 = vld [vmem:[#allocation16 + $0x708] sm:$0xff]
    %v2737 = vld [vmem:[#allocation16 + $0x710] sm:$0xff]
    %v2738 = vld [vmem:[#allocation16 + $0x718] sm:$0xff]
    %v2739 = vld [vmem:[#allocation16 + $0x720] sm:$0xff]
    %v2740 = vld [vmem:[#allocation16 + $0x728] sm:$0xff]
    %v2741 = vld [vmem:[#allocation16 + $0x730] sm:$0xff]
    %v2742 = vld [vmem:[#allocation16 + $0x738] sm:$0xff]
    %v2743 = vld [vmem:[#allocation16 + $0x740] sm:$0xff]
    %v2744 = vld [vmem:[#allocation16 + $0x748] sm:$0xff]
    %v2745 = vld [vmem:[#allocation16 + $0x750] sm:$0xff]
    %v2746 = vld [vmem:[#allocation16 + $0x758] sm:$0xff]
    %v2747 = vld [vmem:[#allocation16 + $0x760] sm:$0xff]
    %v2748 = vld [vmem:[#allocation16 + $0x768] sm:$0xff]
    %v2749 = vld [vmem:[#allocation16 + $0x770] sm:$0xff]
    %v2750 = vld [vmem:[#allocation16 + $0x778] sm:$0xff]
    %v2751 = vld [vmem:[#allocation16 + $0x780] sm:$0xff]
    %v2752 = vld [vmem:[#allocation16 + $0x788] sm:$0xff]
    %v2753 = vld [vmem:[#allocation16 + $0x790] sm:$0xff]
    %v2754 = vld [vmem:[#allocation16 + $0x798] sm:$0xff]
    %v2755 = vld [vmem:[#allocation16 + $0x7a0] sm:$0xff]
    %v2756 = vld [vmem:[#allocation16 + $0x7a8] sm:$0xff]
    %v2757 = vld [vmem:[#allocation16 + $0x7b0] sm:$0xff]
    %v2758 = vld [vmem:[#allocation16 + $0x7b8] sm:$0xff]
    %v2759 = vld [vmem:[#allocation16 + $0x7c0] sm:$0xff]
    %v2760 = vld [vmem:[#allocation16 + $0x7c8] sm:$0xff]
    %v2761 = vld [vmem:[#allocation16 + $0x7d0] sm:$0xff]
    %v2762 = vld [vmem:[#allocation16 + $0x7d8] sm:$0xff]
    %v2763 = vld [vmem:[#allocation16 + $0x7e0] sm:$0xff]
    %v2764 = vld [vmem:[#allocation16 + $0x7e8] sm:$0xff]
    %v2765 = vld [vmem:[#allocation16 + $0x7f0] sm:$0xff]
    %v2766 = vld [vmem:[#allocation16 + $0x7f8] sm:$0xff]
    %v2767 = vld [vmem:[%s10] sm:$0xff]
    %v2769 = vperm.slane %v2767, 0
    %v2770 = vperm.slane %v2767, 1
    %v2771 = vperm.slane %v2767, 2
    %v2772 = vperm.slane %v2767, 3
    %v2773 = vperm.slane %v2767, 4
    %v2774 = vperm.slane %v2767, 5
    %v2775 = vperm.slane %v2767, 6
    %v2776 = vperm.slane %v2767, 7
    %v3041 = vunpack.c.l.b16 %v2511
    %v3042 = vunpack.c.h.b16 %v2511
    %v3043 = vunpack.c.l.b16 %v2512
    %v3044 = vunpack.c.h.b16 %v2512
    %v3045 = vunpack.c.l.b16 %v2513
    %v3046 = vunpack.c.h.b16 %v2513
    %v3047 = vunpack.c.l.b16 %v2514
    %v3048 = vunpack.c.h.b16 %v2514
    %v3049 = vunpack.c.l.b16 %v2515
    %v3050 = vunpack.c.h.b16 %v2515
    %v3051 = vunpack.c.l.b16 %v2516
    %v3052 = vunpack.c.h.b16 %v2516
    %v3053 = vunpack.c.l.b16 %v2517
    %v3054 = vunpack.c.h.b16 %v2517
    %v3055 = vunpack.c.l.b16 %v2518
    %v3056 = vunpack.c.h.b16 %v2518
    %v3057 = vunpack.c.l.b16 %v2519
    %v3058 = vunpack.c.h.b16 %v2519
    %v3059 = vunpack.c.l.b16 %v2520
    %v3060 = vunpack.c.h.b16 %v2520
    %v3061 = vunpack.c.l.b16 %v2521
    %v3062 = vunpack.c.h.b16 %v2521
    %v3063 = vunpack.c.l.b16 %v2522
    %v3064 = vunpack.c.h.b16 %v2522
    %v3065 = vunpack.c.l.b16 %v2523
    %v3066 = vunpack.c.h.b16 %v2523
    %v3067 = vunpack.c.l.b16 %v2524
    %v3068 = vunpack.c.h.b16 %v2524
    %v3069 = vunpack.c.l.b16 %v2525
    %v3070 = vunpack.c.h.b16 %v2525
    %v3071 = vunpack.c.l.b16 %v2526
    %v3072 = vunpack.c.h.b16 %v2526
    %v3073 = vunpack.c.l.b16 %v2527
    %v3074 = vunpack.c.h.b16 %v2527
    %v3075 = vunpack.c.l.b16 %v2528
    %v3076 = vunpack.c.h.b16 %v2528
    %v3077 = vunpack.c.l.b16 %v2529
    %v3078 = vunpack.c.h.b16 %v2529
    %v3079 = vunpack.c.l.b16 %v2530
    %v3080 = vunpack.c.h.b16 %v2530
    %v3081 = vunpack.c.l.b16 %v2531
    %v3082 = vunpack.c.h.b16 %v2531
    %v3083 = vunpack.c.l.b16 %v2532
    %v3084 = vunpack.c.h.b16 %v2532
    %v3085 = vunpack.c.l.b16 %v2533
    %v3086 = vunpack.c.h.b16 %v2533
    %v3087 = vunpack.c.l.b16 %v2534
    %v3088 = vunpack.c.h.b16 %v2534
    %v3089 = vunpack.c.l.b16 %v2535
    %v3090 = vunpack.c.h.b16 %v2535
    %v3091 = vunpack.c.l.b16 %v2536
    %v3092 = vunpack.c.h.b16 %v2536
    %v3093 = vunpack.c.l.b16 %v2537
    %v3094 = vunpack.c.h.b16 %v2537
    %v3095 = vunpack.c.l.b16 %v2538
    %v3096 = vunpack.c.h.b16 %v2538
    %v3097 = vunpack.c.l.b16 %v2539
    %v3098 = vunpack.c.h.b16 %v2539
    %v3099 = vunpack.c.l.b16 %v2540
    %v3100 = vunpack.c.h.b16 %v2540
    %v3101 = vunpack.c.l.b16 %v2541
    %v3102 = vunpack.c.h.b16 %v2541
    %v3103 = vunpack.c.l.b16 %v2542
    %v3104 = vunpack.c.h.b16 %v2542
    %v3105 = vunpack.c.l.b16 %v2543
    %v3106 = vunpack.c.h.b16 %v2543
    %v3107 = vunpack.c.l.b16 %v2544
    %v3108 = vunpack.c.h.b16 %v2544
    %v3109 = vunpack.c.l.b16 %v2545
    %v3110 = vunpack.c.h.b16 %v2545
    %v3111 = vunpack.c.l.b16 %v2546
    %v3112 = vunpack.c.h.b16 %v2546
    %v3113 = vunpack.c.l.b16 %v2547
    %v3114 = vunpack.c.h.b16 %v2547
    %v3115 = vunpack.c.l.b16 %v2548
    %v3116 = vunpack.c.h.b16 %v2548
    %v3117 = vunpack.c.l.b16 %v2549
    %v3118 = vunpack.c.h.b16 %v2549
    %v3119 = vunpack.c.l.b16 %v2550
    %v3120 = vunpack.c.h.b16 %v2550
    %v3121 = vunpack.c.l.b16 %v2551
    %v3122 = vunpack.c.h.b16 %v2551
    %v3123 = vunpack.c.l.b16 %v2552
    %v3124 = vunpack.c.h.b16 %v2552
    %v3125 = vunpack.c.l.b16 %v2553
    %v3126 = vunpack.c.h.b16 %v2553
    %v3127 = vunpack.c.l.b16 %v2554
    %v3128 = vunpack.c.h.b16 %v2554
    %v3129 = vunpack.c.l.b16 %v2555
    %v3130 = vunpack.c.h.b16 %v2555
    %v3131 = vunpack.c.l.b16 %v2556
    %v3132 = vunpack.c.h.b16 %v2556
    %v3133 = vunpack.c.l.b16 %v2557
    %v3134 = vunpack.c.h.b16 %v2557
    %v3135 = vunpack.c.l.b16 %v2558
    %v3136 = vunpack.c.h.b16 %v2558
    %v3137 = vunpack.c.l.b16 %v2559
    %v3138 = vunpack.c.h.b16 %v2559
    %v3139 = vunpack.c.l.b16 %v2560
    %v3140 = vunpack.c.h.b16 %v2560
    %v3141 = vunpack.c.l.b16 %v2561
    %v3142 = vunpack.c.h.b16 %v2561
    %v3143 = vunpack.c.l.b16 %v2562
    %v3144 = vunpack.c.h.b16 %v2562
    %v3145 = vunpack.c.l.b16 %v2563
    %v3146 = vunpack.c.h.b16 %v2563
    %v3147 = vunpack.c.l.b16 %v2564
    %v3148 = vunpack.c.h.b16 %v2564
    %v3149 = vunpack.c.l.b16 %v2565
    %v3150 = vunpack.c.h.b16 %v2565
    %v3151 = vunpack.c.l.b16 %v2566
    %v3152 = vunpack.c.h.b16 %v2566
    %v3153 = vunpack.c.l.b16 %v2567
    %v3154 = vunpack.c.h.b16 %v2567
    %v3155 = vunpack.c.l.b16 %v2568
    %v3156 = vunpack.c.h.b16 %v2568
    %v3157 = vunpack.c.l.b16 %v2569
    %v3158 = vunpack.c.h.b16 %v2569
    %v3159 = vunpack.c.l.b16 %v2570
    %v3160 = vunpack.c.h.b16 %v2570
    %v3161 = vunpack.c.l.b16 %v2571
    %v3162 = vunpack.c.h.b16 %v2571
    %v3163 = vunpack.c.l.b16 %v2572
    %v3164 = vunpack.c.h.b16 %v2572
    %v3165 = vunpack.c.l.b16 %v2573
    %v3166 = vunpack.c.h.b16 %v2573
    %v3167 = vunpack.c.l.b16 %v2574
    %v3168 = vunpack.c.h.b16 %v2574
    %v3169 = vunpack.c.l.b16 %v2575
    %v3170 = vunpack.c.h.b16 %v2575
    %v3171 = vunpack.c.l.b16 %v2576
    %v3172 = vunpack.c.h.b16 %v2576
    %v3173 = vunpack.c.l.b16 %v2577
    %v3174 = vunpack.c.h.b16 %v2577
    %v3175 = vunpack.c.l.b16 %v2578
    %v3176 = vunpack.c.h.b16 %v2578
    %v3177 = vunpack.c.l.b16 %v2579
    %v3178 = vunpack.c.h.b16 %v2579
    %v3179 = vunpack.c.l.b16 %v2580
    %v3180 = vunpack.c.h.b16 %v2580
    %v3181 = vunpack.c.l.b16 %v2581
    %v3182 = vunpack.c.h.b16 %v2581
    %v3183 = vunpack.c.l.b16 %v2582
    %v3184 = vunpack.c.h.b16 %v2582
    %v3185 = vunpack.c.l.b16 %v2583
    %v3186 = vunpack.c.h.b16 %v2583
    %v3187 = vunpack.c.l.b16 %v2584
    %v3188 = vunpack.c.h.b16 %v2584
    %v3189 = vunpack.c.l.b16 %v2585
    %v3190 = vunpack.c.h.b16 %v2585
    %v3191 = vunpack.c.l.b16 %v2586
    %v3192 = vunpack.c.h.b16 %v2586
    %v3193 = vunpack.c.l.b16 %v2587
    %v3194 = vunpack.c.h.b16 %v2587
    %v3195 = vunpack.c.l.b16 %v2588
    %v3196 = vunpack.c.h.b16 %v2588
    %v3197 = vunpack.c.l.b16 %v2589
    %v3198 = vunpack.c.h.b16 %v2589
    %v3199 = vunpack.c.l.b16 %v2590
    %v3200 = vunpack.c.h.b16 %v2590
    %v3201 = vunpack.c.l.b16 %v2591
    %v3202 = vunpack.c.h.b16 %v2591
    %v3203 = vunpack.c.l.b16 %v2592
    %v3204 = vunpack.c.h.b16 %v2592
    %v3205 = vunpack.c.l.b16 %v2593
    %v3206 = vunpack.c.h.b16 %v2593
    %v3207 = vunpack.c.l.b16 %v2594
    %v3208 = vunpack.c.h.b16 %v2594
    %v3209 = vunpack.c.l.b16 %v2595
    %v3210 = vunpack.c.h.b16 %v2595
    %v3211 = vunpack.c.l.b16 %v2596
    %v3212 = vunpack.c.h.b16 %v2596
    %v3213 = vunpack.c.l.b16 %v2597
    %v3214 = vunpack.c.h.b16 %v2597
    %v3215 = vunpack.c.l.b16 %v2598
    %v3216 = vunpack.c.h.b16 %v2598
    %v3217 = vunpack.c.l.b16 %v2599
    %v3218 = vunpack.c.h.b16 %v2599
    %v3219 = vunpack.c.l.b16 %v2600
    %v3220 = vunpack.c.h.b16 %v2600
    %v3221 = vunpack.c.l.b16 %v2601
    %v3222 = vunpack.c.h.b16 %v2601
    %v3223 = vunpack.c.l.b16 %v2602
    %v3224 = vunpack.c.h.b16 %v2602
    %v3225 = vunpack.c.l.b16 %v2603
    %v3226 = vunpack.c.h.b16 %v2603
    %v3227 = vunpack.c.l.b16 %v2604
    %v3228 = vunpack.c.h.b16 %v2604
    %v3229 = vunpack.c.l.b16 %v2605
    %v3230 = vunpack.c.h.b16 %v2605
    %v3231 = vunpack.c.l.b16 %v2606
    %v3232 = vunpack.c.h.b16 %v2606
    %v3233 = vunpack.c.l.b16 %v2607
    %v3234 = vunpack.c.h.b16 %v2607
    %v3235 = vunpack.c.l.b16 %v2608
    %v3236 = vunpack.c.h.b16 %v2608
    %v3237 = vunpack.c.l.b16 %v2609
    %v3238 = vunpack.c.h.b16 %v2609
    %v3239 = vunpack.c.l.b16 %v2610
    %v3240 = vunpack.c.h.b16 %v2610
    %v3241 = vunpack.c.l.b16 %v2611
    %v3242 = vunpack.c.h.b16 %v2611
    %v3243 = vunpack.c.l.b16 %v2612
    %v3244 = vunpack.c.h.b16 %v2612
    %v3245 = vunpack.c.l.b16 %v2613
    %v3246 = vunpack.c.h.b16 %v2613
    %v3247 = vunpack.c.l.b16 %v2614
    %v3248 = vunpack.c.h.b16 %v2614
    %v3249 = vunpack.c.l.b16 %v2615
    %v3250 = vunpack.c.h.b16 %v2615
    %v3251 = vunpack.c.l.b16 %v2616
    %v3252 = vunpack.c.h.b16 %v2616
    %v3253 = vunpack.c.l.b16 %v2617
    %v3254 = vunpack.c.h.b16 %v2617
    %v3255 = vunpack.c.l.b16 %v2618
    %v3256 = vunpack.c.h.b16 %v2618
    %v3257 = vunpack.c.l.b16 %v2619
    %v3258 = vunpack.c.h.b16 %v2619
    %v3259 = vunpack.c.l.b16 %v2620
    %v3260 = vunpack.c.h.b16 %v2620
    %v3261 = vunpack.c.l.b16 %v2621
    %v3262 = vunpack.c.h.b16 %v2621
    %v3263 = vunpack.c.l.b16 %v2622
    %v3264 = vunpack.c.h.b16 %v2622
    %v3265 = vunpack.c.l.b16 %v2623
    %v3266 = vunpack.c.h.b16 %v2623
    %v3267 = vunpack.c.l.b16 %v2624
    %v3268 = vunpack.c.h.b16 %v2624
    %v3269 = vunpack.c.l.b16 %v2625
    %v3270 = vunpack.c.h.b16 %v2625
    %v3271 = vunpack.c.l.b16 %v2626
    %v3272 = vunpack.c.h.b16 %v2626
    %v3273 = vunpack.c.l.b16 %v2627
    %v3274 = vunpack.c.h.b16 %v2627
    %v3275 = vunpack.c.l.b16 %v2628
    %v3276 = vunpack.c.h.b16 %v2628
    %v3277 = vunpack.c.l.b16 %v2629
    %v3278 = vunpack.c.h.b16 %v2629
    %v3279 = vunpack.c.l.b16 %v2630
    %v3280 = vunpack.c.h.b16 %v2630
    %v3281 = vunpack.c.l.b16 %v2631
    %v3282 = vunpack.c.h.b16 %v2631
    %v3283 = vunpack.c.l.b16 %v2632
    %v3284 = vunpack.c.h.b16 %v2632
    %v3285 = vunpack.c.l.b16 %v2633
    %v3286 = vunpack.c.h.b16 %v2633
    %v3287 = vunpack.c.l.b16 %v2634
    %v3288 = vunpack.c.h.b16 %v2634
    %v3289 = vunpack.c.l.b16 %v2635
    %v3290 = vunpack.c.h.b16 %v2635
    %v3291 = vunpack.c.l.b16 %v2636
    %v3292 = vunpack.c.h.b16 %v2636
    %v3293 = vunpack.c.l.b16 %v2637
    %v3294 = vunpack.c.h.b16 %v2637
    %v3295 = vunpack.c.l.b16 %v2638
    %v3296 = vunpack.c.h.b16 %v2638
    %v3297 = vunpack.c.l.b16 %v2639
    %v3298 = vunpack.c.h.b16 %v2639
    %v3299 = vunpack.c.l.b16 %v2640
    %v3300 = vunpack.c.h.b16 %v2640
    %v3301 = vunpack.c.l.b16 %v2641
    %v3302 = vunpack.c.h.b16 %v2641
    %v3303 = vunpack.c.l.b16 %v2642
    %v3304 = vunpack.c.h.b16 %v2642
    %v3305 = vunpack.c.l.b16 %v2643
    %v3306 = vunpack.c.h.b16 %v2643
    %v3307 = vunpack.c.l.b16 %v2644
    %v3308 = vunpack.c.h.b16 %v2644
    %v3309 = vunpack.c.l.b16 %v2645
    %v3310 = vunpack.c.h.b16 %v2645
    %v3311 = vunpack.c.l.b16 %v2646
    %v3312 = vunpack.c.h.b16 %v2646
    %v3313 = vunpack.c.l.b16 %v2647
    %v3314 = vunpack.c.h.b16 %v2647
    %v3315 = vunpack.c.l.b16 %v2648
    %v3316 = vunpack.c.h.b16 %v2648
    %v3317 = vunpack.c.l.b16 %v2649
    %v3318 = vunpack.c.h.b16 %v2649
    %v3319 = vunpack.c.l.b16 %v2650
    %v3320 = vunpack.c.h.b16 %v2650
    %v3321 = vunpack.c.l.b16 %v2651
    %v3322 = vunpack.c.h.b16 %v2651
    %v3323 = vunpack.c.l.b16 %v2652
    %v3324 = vunpack.c.h.b16 %v2652
    %v3325 = vunpack.c.l.b16 %v2653
    %v3326 = vunpack.c.h.b16 %v2653
    %v3327 = vunpack.c.l.b16 %v2654
    %v3328 = vunpack.c.h.b16 %v2654
    %v3329 = vunpack.c.l.b16 %v2655
    %v3330 = vunpack.c.h.b16 %v2655
    %v3331 = vunpack.c.l.b16 %v2656
    %v3332 = vunpack.c.h.b16 %v2656
    %v3333 = vunpack.c.l.b16 %v2657
    %v3334 = vunpack.c.h.b16 %v2657
    %v3335 = vunpack.c.l.b16 %v2658
    %v3336 = vunpack.c.h.b16 %v2658
    %v3337 = vunpack.c.l.b16 %v2659
    %v3338 = vunpack.c.h.b16 %v2659
    %v3339 = vunpack.c.l.b16 %v2660
    %v3340 = vunpack.c.h.b16 %v2660
    %v3341 = vunpack.c.l.b16 %v2661
    %v3342 = vunpack.c.h.b16 %v2661
    %v3343 = vunpack.c.l.b16 %v2662
    %v3344 = vunpack.c.h.b16 %v2662
    %v3345 = vunpack.c.l.b16 %v2663
    %v3346 = vunpack.c.h.b16 %v2663
    %v3347 = vunpack.c.l.b16 %v2664
    %v3348 = vunpack.c.h.b16 %v2664
    %v3349 = vunpack.c.l.b16 %v2665
    %v3350 = vunpack.c.h.b16 %v2665
    %v3351 = vunpack.c.l.b16 %v2666
    %v3352 = vunpack.c.h.b16 %v2666
    %v3353 = vunpack.c.l.b16 %v2667
    %v3354 = vunpack.c.h.b16 %v2667
    %v3355 = vunpack.c.l.b16 %v2668
    %v3356 = vunpack.c.h.b16 %v2668
    %v3357 = vunpack.c.l.b16 %v2669
    %v3358 = vunpack.c.h.b16 %v2669
    %v3359 = vunpack.c.l.b16 %v2670
    %v3360 = vunpack.c.h.b16 %v2670
    %v3361 = vunpack.c.l.b16 %v2671
    %v3362 = vunpack.c.h.b16 %v2671
    %v3363 = vunpack.c.l.b16 %v2672
    %v3364 = vunpack.c.h.b16 %v2672
    %v3365 = vunpack.c.l.b16 %v2673
    %v3366 = vunpack.c.h.b16 %v2673
    %v3367 = vunpack.c.l.b16 %v2674
    %v3368 = vunpack.c.h.b16 %v2674
    %v3369 = vunpack.c.l.b16 %v2675
    %v3370 = vunpack.c.h.b16 %v2675
    %v3371 = vunpack.c.l.b16 %v2676
    %v3372 = vunpack.c.h.b16 %v2676
    %v3373 = vunpack.c.l.b16 %v2677
    %v3374 = vunpack.c.h.b16 %v2677
    %v3375 = vunpack.c.l.b16 %v2678
    %v3376 = vunpack.c.h.b16 %v2678
    %v3377 = vunpack.c.l.b16 %v2679
    %v3378 = vunpack.c.h.b16 %v2679
    %v3379 = vunpack.c.l.b16 %v2680
    %v3380 = vunpack.c.h.b16 %v2680
    %v3381 = vunpack.c.l.b16 %v2681
    %v3382 = vunpack.c.h.b16 %v2681
    %v3383 = vunpack.c.l.b16 %v2682
    %v3384 = vunpack.c.h.b16 %v2682
    %v3385 = vunpack.c.l.b16 %v2683
    %v3386 = vunpack.c.h.b16 %v2683
    %v3387 = vunpack.c.l.b16 %v2684
    %v3388 = vunpack.c.h.b16 %v2684
    %v3389 = vunpack.c.l.b16 %v2685
    %v3390 = vunpack.c.h.b16 %v2685
    %v3391 = vunpack.c.l.b16 %v2686
    %v3392 = vunpack.c.h.b16 %v2686
    %v3393 = vunpack.c.l.b16 %v2687
    %v3394 = vunpack.c.h.b16 %v2687
    %v3395 = vunpack.c.l.b16 %v2688
    %v3396 = vunpack.c.h.b16 %v2688
    %v3397 = vunpack.c.l.b16 %v2689
    %v3398 = vunpack.c.h.b16 %v2689
    %v3399 = vunpack.c.l.b16 %v2690
    %v3400 = vunpack.c.h.b16 %v2690
    %v3401 = vunpack.c.l.b16 %v2691
    %v3402 = vunpack.c.h.b16 %v2691
    %v3403 = vunpack.c.l.b16 %v2692
    %v3404 = vunpack.c.h.b16 %v2692
    %v3405 = vunpack.c.l.b16 %v2693
    %v3406 = vunpack.c.h.b16 %v2693
    %v3407 = vunpack.c.l.b16 %v2694
    %v3408 = vunpack.c.h.b16 %v2694
    %v3409 = vunpack.c.l.b16 %v2695
    %v3410 = vunpack.c.h.b16 %v2695
    %v3411 = vunpack.c.l.b16 %v2696
    %v3412 = vunpack.c.h.b16 %v2696
    %v3413 = vunpack.c.l.b16 %v2697
    %v3414 = vunpack.c.h.b16 %v2697
    %v3415 = vunpack.c.l.b16 %v2698
    %v3416 = vunpack.c.h.b16 %v2698
    %v3417 = vunpack.c.l.b16 %v2699
    %v3418 = vunpack.c.h.b16 %v2699
    %v3419 = vunpack.c.l.b16 %v2700
    %v3420 = vunpack.c.h.b16 %v2700
    %v3421 = vunpack.c.l.b16 %v2701
    %v3422 = vunpack.c.h.b16 %v2701
    %v3423 = vunpack.c.l.b16 %v2702
    %v3424 = vunpack.c.h.b16 %v2702
    %v3425 = vunpack.c.l.b16 %v2703
    %v3426 = vunpack.c.h.b16 %v2703
    %v3427 = vunpack.c.l.b16 %v2704
    %v3428 = vunpack.c.h.b16 %v2704
    %v3429 = vunpack.c.l.b16 %v2705
    %v3430 = vunpack.c.h.b16 %v2705
    %v3431 = vunpack.c.l.b16 %v2706
    %v3432 = vunpack.c.h.b16 %v2706
    %v3433 = vunpack.c.l.b16 %v2707
    %v3434 = vunpack.c.h.b16 %v2707
    %v3435 = vunpack.c.l.b16 %v2708
    %v3436 = vunpack.c.h.b16 %v2708
    %v3437 = vunpack.c.l.b16 %v2709
    %v3438 = vunpack.c.h.b16 %v2709
    %v3439 = vunpack.c.l.b16 %v2710
    %v3440 = vunpack.c.h.b16 %v2710
    %v3441 = vunpack.c.l.b16 %v2711
    %v3442 = vunpack.c.h.b16 %v2711
    %v3443 = vunpack.c.l.b16 %v2712
    %v3444 = vunpack.c.h.b16 %v2712
    %v3445 = vunpack.c.l.b16 %v2713
    %v3446 = vunpack.c.h.b16 %v2713
    %v3447 = vunpack.c.l.b16 %v2714
    %v3448 = vunpack.c.h.b16 %v2714
    %v3449 = vunpack.c.l.b16 %v2715
    %v3450 = vunpack.c.h.b16 %v2715
    %v3451 = vunpack.c.l.b16 %v2716
    %v3452 = vunpack.c.h.b16 %v2716
    %v3453 = vunpack.c.l.b16 %v2717
    %v3454 = vunpack.c.h.b16 %v2717
    %v3455 = vunpack.c.l.b16 %v2718
    %v3456 = vunpack.c.h.b16 %v2718
    %v3457 = vunpack.c.l.b16 %v2719
    %v3458 = vunpack.c.h.b16 %v2719
    %v3459 = vunpack.c.l.b16 %v2720
    %v3460 = vunpack.c.h.b16 %v2720
    %v3461 = vunpack.c.l.b16 %v2721
    %v3462 = vunpack.c.h.b16 %v2721
    %v3463 = vunpack.c.l.b16 %v2722
    %v3464 = vunpack.c.h.b16 %v2722
    %v3465 = vunpack.c.l.b16 %v2723
    %v3466 = vunpack.c.h.b16 %v2723
    %v3467 = vunpack.c.l.b16 %v2724
    %v3468 = vunpack.c.h.b16 %v2724
    %v3469 = vunpack.c.l.b16 %v2725
    %v3470 = vunpack.c.h.b16 %v2725
    %v3471 = vunpack.c.l.b16 %v2726
    %v3472 = vunpack.c.h.b16 %v2726
    %v3473 = vunpack.c.l.b16 %v2727
    %v3474 = vunpack.c.h.b16 %v2727
    %v3475 = vunpack.c.l.b16 %v2728
    %v3476 = vunpack.c.h.b16 %v2728
    %v3477 = vunpack.c.l.b16 %v2729
    %v3478 = vunpack.c.h.b16 %v2729
    %v3479 = vunpack.c.l.b16 %v2730
    %v3480 = vunpack.c.h.b16 %v2730
    %v3481 = vunpack.c.l.b16 %v2731
    %v3482 = vunpack.c.h.b16 %v2731
    %v3483 = vunpack.c.l.b16 %v2732
    %v3484 = vunpack.c.h.b16 %v2732
    %v3485 = vunpack.c.l.b16 %v2733
    %v3486 = vunpack.c.h.b16 %v2733
    %v3487 = vunpack.c.l.b16 %v2734
    %v3488 = vunpack.c.h.b16 %v2734
    %v3489 = vunpack.c.l.b16 %v2735
    %v3490 = vunpack.c.h.b16 %v2735
    %v3491 = vunpack.c.l.b16 %v2736
    %v3492 = vunpack.c.h.b16 %v2736
    %v3493 = vunpack.c.l.b16 %v2737
    %v3494 = vunpack.c.h.b16 %v2737
    %v3495 = vunpack.c.l.b16 %v2738
    %v3496 = vunpack.c.h.b16 %v2738
    %v3497 = vunpack.c.l.b16 %v2739
    %v3498 = vunpack.c.h.b16 %v2739
    %v3499 = vunpack.c.l.b16 %v2740
    %v3500 = vunpack.c.h.b16 %v2740
    %v3501 = vunpack.c.l.b16 %v2741
    %v3502 = vunpack.c.h.b16 %v2741
    %v3503 = vunpack.c.l.b16 %v2742
    %v3504 = vunpack.c.h.b16 %v2742
    %v3505 = vunpack.c.l.b16 %v2743
    %v3506 = vunpack.c.h.b16 %v2743
    %v3507 = vunpack.c.l.b16 %v2744
    %v3508 = vunpack.c.h.b16 %v2744
    %v3509 = vunpack.c.l.b16 %v2745
    %v3510 = vunpack.c.h.b16 %v2745
    %v3511 = vunpack.c.l.b16 %v2746
    %v3512 = vunpack.c.h.b16 %v2746
    %v3513 = vunpack.c.l.b16 %v2747
    %v3514 = vunpack.c.h.b16 %v2747
    %v3515 = vunpack.c.l.b16 %v2748
    %v3516 = vunpack.c.h.b16 %v2748
    %v3517 = vunpack.c.l.b16 %v2749
    %v3518 = vunpack.c.h.b16 %v2749
    %v3519 = vunpack.c.l.b16 %v2750
    %v3520 = vunpack.c.h.b16 %v2750
    %v3521 = vunpack.c.l.b16 %v2751
    %v3522 = vunpack.c.h.b16 %v2751
    %v3523 = vunpack.c.l.b16 %v2752
    %v3524 = vunpack.c.h.b16 %v2752
    %v3525 = vunpack.c.l.b16 %v2753
    %v3526 = vunpack.c.h.b16 %v2753
    %v3527 = vunpack.c.l.b16 %v2754
    %v3528 = vunpack.c.h.b16 %v2754
    %v3529 = vunpack.c.l.b16 %v2755
    %v3530 = vunpack.c.h.b16 %v2755
    %v3531 = vunpack.c.l.b16 %v2756
    %v3532 = vunpack.c.h.b16 %v2756
    %v3533 = vunpack.c.l.b16 %v2757
    %v3534 = vunpack.c.h.b16 %v2757
    %v3535 = vunpack.c.l.b16 %v2758
    %v3536 = vunpack.c.h.b16 %v2758
    %v3537 = vunpack.c.l.b16 %v2759
    %v3538 = vunpack.c.h.b16 %v2759
    %v3539 = vunpack.c.l.b16 %v2760
    %v3540 = vunpack.c.h.b16 %v2760
    %v3541 = vunpack.c.l.b16 %v2761
    %v3542 = vunpack.c.h.b16 %v2761
    %v3543 = vunpack.c.l.b16 %v2762
    %v3544 = vunpack.c.h.b16 %v2762
    %v3545 = vunpack.c.l.b16 %v2763
    %v3546 = vunpack.c.h.b16 %v2763
    %v3547 = vunpack.c.l.b16 %v2764
    %v3548 = vunpack.c.h.b16 %v2764
    %v3549 = vunpack.c.l.b16 %v2765
    %v3550 = vunpack.c.h.b16 %v2765
    %v3551 = vunpack.c.l.b16 %v2766
    %v3552 = vunpack.c.h.b16 %v2766
    %v3553 = vpack.c.b16 %v3049, %v3041
    %v3554 = vpack.c.b16 %v3050, %v3042
    %v3555 = vpack.c.b16 %v3051, %v3043
    %v3556 = vpack.c.b16 %v3052, %v3044
    %v3557 = vpack.c.b16 %v3053, %v3045
    %v3558 = vpack.c.b16 %v3054, %v3046
    %v3559 = vpack.c.b16 %v3055, %v3047
    %v3560 = vpack.c.b16 %v3056, %v3048
    %v3561 = vpack.c.b16 %v3065, %v3057
    %v3562 = vpack.c.b16 %v3066, %v3058
    %v3563 = vpack.c.b16 %v3067, %v3059
    %v3564 = vpack.c.b16 %v3068, %v3060
    %v3565 = vpack.c.b16 %v3069, %v3061
    %v3566 = vpack.c.b16 %v3070, %v3062
    %v3567 = vpack.c.b16 %v3071, %v3063
    %v3568 = vpack.c.b16 %v3072, %v3064
    %v3569 = vpack.c.b16 %v3081, %v3073
    %v3570 = vpack.c.b16 %v3082, %v3074
    %v3571 = vpack.c.b16 %v3083, %v3075
    %v3572 = vpack.c.b16 %v3084, %v3076
    %v3573 = vpack.c.b16 %v3085, %v3077
    %v3574 = vpack.c.b16 %v3086, %v3078
    %v3575 = vpack.c.b16 %v3087, %v3079
    %v3576 = vpack.c.b16 %v3088, %v3080
    %v3577 = vpack.c.b16 %v3097, %v3089
    %v3578 = vpack.c.b16 %v3098, %v3090
    %v3579 = vpack.c.b16 %v3099, %v3091
    %v3580 = vpack.c.b16 %v3100, %v3092
    %v3581 = vpack.c.b16 %v3101, %v3093
    %v3582 = vpack.c.b16 %v3102, %v3094
    %v3583 = vpack.c.b16 %v3103, %v3095
    %v3584 = vpack.c.b16 %v3104, %v3096
    %v3585 = vpack.c.b16 %v3113, %v3105
    %v3586 = vpack.c.b16 %v3114, %v3106
    %v3587 = vpack.c.b16 %v3115, %v3107
    %v3588 = vpack.c.b16 %v3116, %v3108
    %v3589 = vpack.c.b16 %v3117, %v3109
    %v3590 = vpack.c.b16 %v3118, %v3110
    %v3591 = vpack.c.b16 %v3119, %v3111
    %v3592 = vpack.c.b16 %v3120, %v3112
    %v3593 = vpack.c.b16 %v3129, %v3121
    %v3594 = vpack.c.b16 %v3130, %v3122
    %v3595 = vpack.c.b16 %v3131, %v3123
    %v3596 = vpack.c.b16 %v3132, %v3124
    %v3597 = vpack.c.b16 %v3133, %v3125
    %v3598 = vpack.c.b16 %v3134, %v3126
    %v3599 = vpack.c.b16 %v3135, %v3127
    %v3600 = vpack.c.b16 %v3136, %v3128
    %v3601 = vpack.c.b16 %v3145, %v3137
    %v3602 = vpack.c.b16 %v3146, %v3138
    %v3603 = vpack.c.b16 %v3147, %v3139
    %v3604 = vpack.c.b16 %v3148, %v3140
    %v3605 = vpack.c.b16 %v3149, %v3141
    %v3606 = vpack.c.b16 %v3150, %v3142
    %v3607 = vpack.c.b16 %v3151, %v3143
    %v3608 = vpack.c.b16 %v3152, %v3144
    %v3609 = vpack.c.b16 %v3161, %v3153
    %v3610 = vpack.c.b16 %v3162, %v3154
    %v3611 = vpack.c.b16 %v3163, %v3155
    %v3612 = vpack.c.b16 %v3164, %v3156
    %v3613 = vpack.c.b16 %v3165, %v3157
    %v3614 = vpack.c.b16 %v3166, %v3158
    %v3615 = vpack.c.b16 %v3167, %v3159
    %v3616 = vpack.c.b16 %v3168, %v3160
    %v3617 = vpack.c.b16 %v3177, %v3169
    %v3618 = vpack.c.b16 %v3178, %v3170
    %v3619 = vpack.c.b16 %v3179, %v3171
    %v3620 = vpack.c.b16 %v3180, %v3172
    %v3621 = vpack.c.b16 %v3181, %v3173
    %v3622 = vpack.c.b16 %v3182, %v3174
    %v3623 = vpack.c.b16 %v3183, %v3175
    %v3624 = vpack.c.b16 %v3184, %v3176
    %v3625 = vpack.c.b16 %v3193, %v3185
    %v3626 = vpack.c.b16 %v3194, %v3186
    %v3627 = vpack.c.b16 %v3195, %v3187
    %v3628 = vpack.c.b16 %v3196, %v3188
    %v3629 = vpack.c.b16 %v3197, %v3189
    %v3630 = vpack.c.b16 %v3198, %v3190
    %v3631 = vpack.c.b16 %v3199, %v3191
    %v3632 = vpack.c.b16 %v3200, %v3192
    %v3633 = vpack.c.b16 %v3209, %v3201
    %v3634 = vpack.c.b16 %v3210, %v3202
    %v3635 = vpack.c.b16 %v3211, %v3203
    %v3636 = vpack.c.b16 %v3212, %v3204
    %v3637 = vpack.c.b16 %v3213, %v3205
    %v3638 = vpack.c.b16 %v3214, %v3206
    %v3639 = vpack.c.b16 %v3215, %v3207
    %v3640 = vpack.c.b16 %v3216, %v3208
    %v3641 = vpack.c.b16 %v3225, %v3217
    %v3642 = vpack.c.b16 %v3226, %v3218
    %v3643 = vpack.c.b16 %v3227, %v3219
    %v3644 = vpack.c.b16 %v3228, %v3220
    %v3645 = vpack.c.b16 %v3229, %v3221
    %v3646 = vpack.c.b16 %v3230, %v3222
    %v3647 = vpack.c.b16 %v3231, %v3223
    %v3648 = vpack.c.b16 %v3232, %v3224
    %v3649 = vpack.c.b16 %v3241, %v3233
    %v3650 = vpack.c.b16 %v3242, %v3234
    %v3651 = vpack.c.b16 %v3243, %v3235
    %v3652 = vpack.c.b16 %v3244, %v3236
    %v3653 = vpack.c.b16 %v3245, %v3237
    %v3654 = vpack.c.b16 %v3246, %v3238
    %v3655 = vpack.c.b16 %v3247, %v3239
    %v3656 = vpack.c.b16 %v3248, %v3240
    %v3657 = vpack.c.b16 %v3257, %v3249
    %v3658 = vpack.c.b16 %v3258, %v3250
    %v3659 = vpack.c.b16 %v3259, %v3251
    %v3660 = vpack.c.b16 %v3260, %v3252
    %v3661 = vpack.c.b16 %v3261, %v3253
    %v3662 = vpack.c.b16 %v3262, %v3254
    %v3663 = vpack.c.b16 %v3263, %v3255
    %v3664 = vpack.c.b16 %v3264, %v3256
    %v3665 = vpack.c.b16 %v3273, %v3265
    %v3666 = vpack.c.b16 %v3274, %v3266
    %v3667 = vpack.c.b16 %v3275, %v3267
    %v3668 = vpack.c.b16 %v3276, %v3268
    %v3669 = vpack.c.b16 %v3277, %v3269
    %v3670 = vpack.c.b16 %v3278, %v3270
    %v3671 = vpack.c.b16 %v3279, %v3271
    %v3672 = vpack.c.b16 %v3280, %v3272
    %v3673 = vpack.c.b16 %v3289, %v3281
    %v3674 = vpack.c.b16 %v3290, %v3282
    %v3675 = vpack.c.b16 %v3291, %v3283
    %v3676 = vpack.c.b16 %v3292, %v3284
    %v3677 = vpack.c.b16 %v3293, %v3285
    %v3678 = vpack.c.b16 %v3294, %v3286
    %v3679 = vpack.c.b16 %v3295, %v3287
    %v3680 = vpack.c.b16 %v3296, %v3288
    %v3681 = vpack.c.b16 %v3305, %v3297
    %v3682 = vpack.c.b16 %v3306, %v3298
    %v3683 = vpack.c.b16 %v3307, %v3299
    %v3684 = vpack.c.b16 %v3308, %v3300
    %v3685 = vpack.c.b16 %v3309, %v3301
    %v3686 = vpack.c.b16 %v3310, %v3302
    %v3687 = vpack.c.b16 %v3311, %v3303
    %v3688 = vpack.c.b16 %v3312, %v3304
    %v3689 = vpack.c.b16 %v3321, %v3313
    %v3690 = vpack.c.b16 %v3322, %v3314
    %v3691 = vpack.c.b16 %v3323, %v3315
    %v3692 = vpack.c.b16 %v3324, %v3316
    %v3693 = vpack.c.b16 %v3325, %v3317
    %v3694 = vpack.c.b16 %v3326, %v3318
    %v3695 = vpack.c.b16 %v3327, %v3319
    %v3696 = vpack.c.b16 %v3328, %v3320
    %v3697 = vpack.c.b16 %v3337, %v3329
    %v3698 = vpack.c.b16 %v3338, %v3330
    %v3699 = vpack.c.b16 %v3339, %v3331
    %v3700 = vpack.c.b16 %v3340, %v3332
    %v3701 = vpack.c.b16 %v3341, %v3333
    %v3702 = vpack.c.b16 %v3342, %v3334
    %v3703 = vpack.c.b16 %v3343, %v3335
    %v3704 = vpack.c.b16 %v3344, %v3336
    %v3705 = vpack.c.b16 %v3353, %v3345
    %v3706 = vpack.c.b16 %v3354, %v3346
    %v3707 = vpack.c.b16 %v3355, %v3347
    %v3708 = vpack.c.b16 %v3356, %v3348
    %v3709 = vpack.c.b16 %v3357, %v3349
    %v3710 = vpack.c.b16 %v3358, %v3350
    %v3711 = vpack.c.b16 %v3359, %v3351
    %v3712 = vpack.c.b16 %v3360, %v3352
    %v3713 = vpack.c.b16 %v3369, %v3361
    %v3714 = vpack.c.b16 %v3370, %v3362
    %v3715 = vpack.c.b16 %v3371, %v3363
    %v3716 = vpack.c.b16 %v3372, %v3364
    %v3717 = vpack.c.b16 %v3373, %v3365
    %v3718 = vpack.c.b16 %v3374, %v3366
    %v3719 = vpack.c.b16 %v3375, %v3367
    %v3720 = vpack.c.b16 %v3376, %v3368
    %v3721 = vpack.c.b16 %v3385, %v3377
    %v3722 = vpack.c.b16 %v3386, %v3378
    %v3723 = vpack.c.b16 %v3387, %v3379
    %v3724 = vpack.c.b16 %v3388, %v3380
    %v3725 = vpack.c.b16 %v3389, %v3381
    %v3726 = vpack.c.b16 %v3390, %v3382
    %v3727 = vpack.c.b16 %v3391, %v3383
    %v3728 = vpack.c.b16 %v3392, %v3384
    %v3729 = vpack.c.b16 %v3401, %v3393
    %v3730 = vpack.c.b16 %v3402, %v3394
    %v3731 = vpack.c.b16 %v3403, %v3395
    %v3732 = vpack.c.b16 %v3404, %v3396
    %v3733 = vpack.c.b16 %v3405, %v3397
    %v3734 = vpack.c.b16 %v3406, %v3398
    %v3735 = vpack.c.b16 %v3407, %v3399
    %v3736 = vpack.c.b16 %v3408, %v3400
    %v3737 = vpack.c.b16 %v3417, %v3409
    %v3738 = vpack.c.b16 %v3418, %v3410
    %v3739 = vpack.c.b16 %v3419, %v3411
    %v3740 = vpack.c.b16 %v3420, %v3412
    %v3741 = vpack.c.b16 %v3421, %v3413
    %v3742 = vpack.c.b16 %v3422, %v3414
    %v3743 = vpack.c.b16 %v3423, %v3415
    %v3744 = vpack.c.b16 %v3424, %v3416
    %v3745 = vpack.c.b16 %v3433, %v3425
    %v3746 = vpack.c.b16 %v3434, %v3426
    %v3747 = vpack.c.b16 %v3435, %v3427
    %v3748 = vpack.c.b16 %v3436, %v3428
    %v3749 = vpack.c.b16 %v3437, %v3429
    %v3750 = vpack.c.b16 %v3438, %v3430
    %v3751 = vpack.c.b16 %v3439, %v3431
    %v3752 = vpack.c.b16 %v3440, %v3432
    %v3753 = vpack.c.b16 %v3449, %v3441
    %v3754 = vpack.c.b16 %v3450, %v3442
    %v3755 = vpack.c.b16 %v3451, %v3443
    %v3756 = vpack.c.b16 %v3452, %v3444
    %v3757 = vpack.c.b16 %v3453, %v3445
    %v3758 = vpack.c.b16 %v3454, %v3446
    %v3759 = vpack.c.b16 %v3455, %v3447
    %v3760 = vpack.c.b16 %v3456, %v3448
    %v3761 = vpack.c.b16 %v3465, %v3457
    %v3762 = vpack.c.b16 %v3466, %v3458
    %v3763 = vpack.c.b16 %v3467, %v3459
    %v3764 = vpack.c.b16 %v3468, %v3460
    %v3765 = vpack.c.b16 %v3469, %v3461
    %v3766 = vpack.c.b16 %v3470, %v3462
    %v3767 = vpack.c.b16 %v3471, %v3463
    %v3768 = vpack.c.b16 %v3472, %v3464
    %v3769 = vpack.c.b16 %v3481, %v3473
    %v3770 = vpack.c.b16 %v3482, %v3474
    %v3771 = vpack.c.b16 %v3483, %v3475
    %v3772 = vpack.c.b16 %v3484, %v3476
    %v3773 = vpack.c.b16 %v3485, %v3477
    %v3774 = vpack.c.b16 %v3486, %v3478
    %v3775 = vpack.c.b16 %v3487, %v3479
    %v3776 = vpack.c.b16 %v3488, %v3480
    %v3777 = vpack.c.b16 %v3497, %v3489
    %v3778 = vpack.c.b16 %v3498, %v3490
    %v3779 = vpack.c.b16 %v3499, %v3491
    %v3780 = vpack.c.b16 %v3500, %v3492
    %v3781 = vpack.c.b16 %v3501, %v3493
    %v3782 = vpack.c.b16 %v3502, %v3494
    %v3783 = vpack.c.b16 %v3503, %v3495
    %v3784 = vpack.c.b16 %v3504, %v3496
    %v3785 = vpack.c.b16 %v3513, %v3505
    %v3786 = vpack.c.b16 %v3514, %v3506
    %v3787 = vpack.c.b16 %v3515, %v3507
    %v3788 = vpack.c.b16 %v3516, %v3508
    %v3789 = vpack.c.b16 %v3517, %v3509
    %v3790 = vpack.c.b16 %v3518, %v3510
    %v3791 = vpack.c.b16 %v3519, %v3511
    %v3792 = vpack.c.b16 %v3520, %v3512
    %v3793 = vpack.c.b16 %v3529, %v3521
    %v3794 = vpack.c.b16 %v3530, %v3522
    %v3795 = vpack.c.b16 %v3531, %v3523
    %v3796 = vpack.c.b16 %v3532, %v3524
    %v3797 = vpack.c.b16 %v3533, %v3525
    %v3798 = vpack.c.b16 %v3534, %v3526
    %v3799 = vpack.c.b16 %v3535, %v3527
    %v3800 = vpack.c.b16 %v3536, %v3528
    %v3801 = vpack.c.b16 %v3545, %v3537
    %v3802 = vpack.c.b16 %v3546, %v3538
    %v3803 = vpack.c.b16 %v3547, %v3539
    %v3804 = vpack.c.b16 %v3548, %v3540
    %v3805 = vpack.c.b16 %v3549, %v3541
    %v3806 = vpack.c.b16 %v3550, %v3542
    %v3807 = vpack.c.b16 %v3551, %v3543
    %v3808 = vpack.c.b16 %v3552, %v3544
    %4065 = vmatpush.bf16.msra.mxu0 %v3609
    %4066 = vmatpush.bf16.msra.mxu0 %v3601
    %4067 = vmatpush.bf16.msra.mxu0 %v3593
    %4068 = vmatpush.bf16.msra.mxu0 %v3585
    %4069 = vmatpush.bf16.msra.mxu0 %v3577
    %4070 = vmatpush.bf16.msra.mxu0 %v3569
    %4071 = vmatpush.bf16.msra.mxu0 %v3561
    %4072 = vmatpush.bf16.msra.mxu0 %v3553
    %4073 = vmatmul.bf16.gmra.mxu0 %v2507
    %v4074 = vpop.f32.mrf.mxu0
    %v4075 = vadd.f32 %v2769, %v4074
    %v4076 = vpop.f32.mrf.mxu0
    %4077 = vdwg.mxu0
    %4078 = vmatpush.bf16.msra.mxu0 %v3673
    %4079 = vmatpush.bf16.msra.mxu0 %v3665
    %4080 = vmatpush.bf16.msra.mxu0 %v3657
    %4081 = vmatpush.bf16.msra.mxu0 %v3649
    %4082 = vmatpush.bf16.msra.mxu0 %v3641
    %4083 = vmatpush.bf16.msra.mxu0 %v3633
    %4084 = vmatpush.bf16.msra.mxu0 %v3625
    %4085 = vmatpush.bf16.msra.mxu0 %v3617
    %4086 = vmatmul.bf16.gmra.mxu0 %v2508
    %v4087 = vpop.f32.mrf.mxu0
    %v4088 = vadd.f32 %v4075, %v4087
    %v4089 = vpop.f32.mrf.mxu0
    %4090 = vdwg.mxu0
    %4091 = vmatpush.bf16.msra.mxu0 %v3737
    %4092 = vmatpush.bf16.msra.mxu0 %v3729
    %4093 = vmatpush.bf16.msra.mxu0 %v3721
    %4094 = vmatpush.bf16.msra.mxu0 %v3713
    %4095 = vmatpush.bf16.msra.mxu0 %v3705
    %4096 = vmatpush.bf16.msra.mxu0 %v3697
    %4097 = vmatpush.bf16.msra.mxu0 %v3689
    %4098 = vmatpush.bf16.msra.mxu0 %v3681
    %4099 = vmatmul.bf16.gmra.mxu0 %v2509
    %v4100 = vpop.f32.mrf.mxu0
    %v4101 = vadd.f32 %v4088, %v4100
    %v4102 = vpop.f32.mrf.mxu0
    %4103 = vdwg.mxu0
    %4104 = vmatpush.bf16.msra.mxu0 %v3801
    %4105 = vmatpush.bf16.msra.mxu0 %v3793
    %4106 = vmatpush.bf16.msra.mxu0 %v3785
    %4107 = vmatpush.bf16.msra.mxu0 %v3777
    %4108 = vmatpush.bf16.msra.mxu0 %v3769
    %4109 = vmatpush.bf16.msra.mxu0 %v3761
    %4110 = vmatpush.bf16.msra.mxu0 %v3753
    %4111 = vmatpush.bf16.msra.mxu0 %v3745
    %4112 = vmatmul.bf16.gmra.mxu0 %v2510
    %v4113 = vpop.f32.mrf.mxu0
    %v4114 = vadd.f32 %v4101, %v4113
    %v4115 = vpop.f32.mrf.mxu0
    %4116 = vdwg.mxu0
    %4117 = vmatpush.bf16.msra.mxu0 %v3610
    %4118 = vmatpush.bf16.msra.mxu0 %v3602
    %4119 = vmatpush.bf16.msra.mxu0 %v3594
    %4120 = vmatpush.bf16.msra.mxu0 %v3586
    %4121 = vmatpush.bf16.msra.mxu0 %v3578
    %4122 = vmatpush.bf16.msra.mxu0 %v3570
    %4123 = vmatpush.bf16.msra.mxu0 %v3562
    %4124 = vmatpush.bf16.msra.mxu0 %v3554
    %4125 = vmatmul.bf16.gmra.mxu0 %v2507
    %v4126 = vpop.f32.mrf.mxu0
    %v4127 = vadd.f32 %v2770, %v4126
    %v4128 = vpop.f32.mrf.mxu0
    %4129 = vdwg.mxu0
    %4130 = vmatpush.bf16.msra.mxu0 %v3674
    %4131 = vmatpush.bf16.msra.mxu0 %v3666
    %4132 = vmatpush.bf16.msra.mxu0 %v3658
    %4133 = vmatpush.bf16.msra.mxu0 %v3650
    %4134 = vmatpush.bf16.msra.mxu0 %v3642
    %4135 = vmatpush.bf16.msra.mxu0 %v3634
    %4136 = vmatpush.bf16.msra.mxu0 %v3626
    %4137 = vmatpush.bf16.msra.mxu0 %v3618
    %4138 = vmatmul.bf16.gmra.mxu0 %v2508
    %v4139 = vpop.f32.mrf.mxu0
    %v4140 = vadd.f32 %v4127, %v4139
    %v4141 = vpop.f32.mrf.mxu0
    %4142 = vdwg.mxu0
    %4143 = vmatpush.bf16.msra.mxu0 %v3738
    %4144 = vmatpush.bf16.msra.mxu0 %v3730
    %4145 = vmatpush.bf16.msra.mxu0 %v3722
    %4146 = vmatpush.bf16.msra.mxu0 %v3714
    %4147 = vmatpush.bf16.msra.mxu0 %v3706
    %4148 = vmatpush.bf16.msra.mxu0 %v3698
    %4149 = vmatpush.bf16.msra.mxu0 %v3690
    %4150 = vmatpush.bf16.msra.mxu0 %v3682
    %4151 = vmatmul.bf16.gmra.mxu0 %v2509
    %v4152 = vpop.f32.mrf.mxu0
    %v4153 = vadd.f32 %v4140, %v4152
    %v4154 = vpop.f32.mrf.mxu0
    %4155 = vdwg.mxu0
    %4156 = vmatpush.bf16.msra.mxu0 %v3802
    %4157 = vmatpush.bf16.msra.mxu0 %v3794
    %4158 = vmatpush.bf16.msra.mxu0 %v3786
    %4159 = vmatpush.bf16.msra.mxu0 %v3778
    %4160 = vmatpush.bf16.msra.mxu0 %v3770
    %4161 = vmatpush.bf16.msra.mxu0 %v3762
    %4162 = vmatpush.bf16.msra.mxu0 %v3754
    %4163 = vmatpush.bf16.msra.mxu0 %v3746
    %4164 = vmatmul.bf16.gmra.mxu0 %v2510
    %v4165 = vpop.f32.mrf.mxu0
    %v4166 = vadd.f32 %v4153, %v4165
    %v4167 = vpop.f32.mrf.mxu0
    %4168 = vdwg.mxu0
    %4169 = vmatpush.bf16.msra.mxu0 %v3611
    %4170 = vmatpush.bf16.msra.mxu0 %v3603
    %4171 = vmatpush.bf16.msra.mxu0 %v3595
    %4172 = vmatpush.bf16.msra.mxu0 %v3587
    %4173 = vmatpush.bf16.msra.mxu0 %v3579
    %4174 = vmatpush.bf16.msra.mxu0 %v3571
    %4175 = vmatpush.bf16.msra.mxu0 %v3563
    %4176 = vmatpush.bf16.msra.mxu0 %v3555
    %4177 = vmatmul.bf16.gmra.mxu0 %v2507
    %v4178 = vpop.f32.mrf.mxu0
    %v4179 = vadd.f32 %v2771, %v4178
    %v4180 = vpop.f32.mrf.mxu0
    %4181 = vdwg.mxu0
    %4182 = vmatpush.bf16.msra.mxu0 %v3675
    %4183 = vmatpush.bf16.msra.mxu0 %v3667
    %4184 = vmatpush.bf16.msra.mxu0 %v3659
    %4185 = vmatpush.bf16.msra.mxu0 %v3651
    %4186 = vmatpush.bf16.msra.mxu0 %v3643
    %4187 = vmatpush.bf16.msra.mxu0 %v3635
    %4188 = vmatpush.bf16.msra.mxu0 %v3627
    %4189 = vmatpush.bf16.msra.mxu0 %v3619
    %4190 = vmatmul.bf16.gmra.mxu0 %v2508
    %v4191 = vpop.f32.mrf.mxu0
    %v4192 = vadd.f32 %v4179, %v4191
    %v4193 = vpop.f32.mrf.mxu0
    %4194 = vdwg.mxu0
    %4195 = vmatpush.bf16.msra.mxu0 %v3739
    %4196 = vmatpush.bf16.msra.mxu0 %v3731
    %4197 = vmatpush.bf16.msra.mxu0 %v3723
    %4198 = vmatpush.bf16.msra.mxu0 %v3715
    %4199 = vmatpush.bf16.msra.mxu0 %v3707
    %4200 = vmatpush.bf16.msra.mxu0 %v3699
    %4201 = vmatpush.bf16.msra.mxu0 %v3691
    %4202 = vmatpush.bf16.msra.mxu0 %v3683
    %4203 = vmatmul.bf16.gmra.mxu0 %v2509
    %v4204 = vpop.f32.mrf.mxu0
    %v4205 = vadd.f32 %v4192, %v4204
    %v4206 = vpop.f32.mrf.mxu0
    %4207 = vdwg.mxu0
    %4208 = vmatpush.bf16.msra.mxu0 %v3803
    %4209 = vmatpush.bf16.msra.mxu0 %v3795
    %4210 = vmatpush.bf16.msra.mxu0 %v3787
    %4211 = vmatpush.bf16.msra.mxu0 %v3779
    %4212 = vmatpush.bf16.msra.mxu0 %v3771
    %4213 = vmatpush.bf16.msra.mxu0 %v3763
    %4214 = vmatpush.bf16.msra.mxu0 %v3755
    %4215 = vmatpush.bf16.msra.mxu0 %v3747
    %4216 = vmatmul.bf16.gmra.mxu0 %v2510
    %v4217 = vpop.f32.mrf.mxu0
    %v4218 = vadd.f32 %v4205, %v4217
    %v4219 = vpop.f32.mrf.mxu0
    %4220 = vdwg.mxu0
    %4221 = vmatpush.bf16.msra.mxu0 %v3612
    %4222 = vmatpush.bf16.msra.mxu0 %v3604
    %4223 = vmatpush.bf16.msra.mxu0 %v3596
    %4224 = vmatpush.bf16.msra.mxu0 %v3588
    %4225 = vmatpush.bf16.msra.mxu0 %v3580
    %4226 = vmatpush.bf16.msra.mxu0 %v3572
    %4227 = vmatpush.bf16.msra.mxu0 %v3564
    %4228 = vmatpush.bf16.msra.mxu0 %v3556
    %4229 = vmatmul.bf16.gmra.mxu0 %v2507
    %v4230 = vpop.f32.mrf.mxu0
    %v4231 = vadd.f32 %v2772, %v4230
    %v4232 = vpop.f32.mrf.mxu0
    %4233 = vdwg.mxu0
    %4234 = vmatpush.bf16.msra.mxu0 %v3676
    %4235 = vmatpush.bf16.msra.mxu0 %v3668
    %4236 = vmatpush.bf16.msra.mxu0 %v3660
    %4237 = vmatpush.bf16.msra.mxu0 %v3652
    %4238 = vmatpush.bf16.msra.mxu0 %v3644
    %4239 = vmatpush.bf16.msra.mxu0 %v3636
    %4240 = vmatpush.bf16.msra.mxu0 %v3628
    %4241 = vmatpush.bf16.msra.mxu0 %v3620
    %4242 = vmatmul.bf16.gmra.mxu0 %v2508
    %v4243 = vpop.f32.mrf.mxu0
    %v4244 = vadd.f32 %v4231, %v4243
    %v4245 = vpop.f32.mrf.mxu0
    %4246 = vdwg.mxu0
    %4247 = vmatpush.bf16.msra.mxu0 %v3740
    %4248 = vmatpush.bf16.msra.mxu0 %v3732
    %4249 = vmatpush.bf16.msra.mxu0 %v3724
    %4250 = vmatpush.bf16.msra.mxu0 %v3716
    %4251 = vmatpush.bf16.msra.mxu0 %v3708
    %4252 = vmatpush.bf16.msra.mxu0 %v3700
    %4253 = vmatpush.bf16.msra.mxu0 %v3692
    %4254 = vmatpush.bf16.msra.mxu0 %v3684
    %4255 = vmatmul.bf16.gmra.mxu0 %v2509
    %v4256 = vpop.f32.mrf.mxu0
    %v4257 = vadd.f32 %v4244, %v4256
    %v4258 = vpop.f32.mrf.mxu0
    %4259 = vdwg.mxu0
    %4260 = vmatpush.bf16.msra.mxu0 %v3804
    %4261 = vmatpush.bf16.msra.mxu0 %v3796
    %4262 = vmatpush.bf16.msra.mxu0 %v3788
    %4263 = vmatpush.bf16.msra.mxu0 %v3780
    %4264 = vmatpush.bf16.msra.mxu0 %v3772
    %4265 = vmatpush.bf16.msra.mxu0 %v3764
    %4266 = vmatpush.bf16.msra.mxu0 %v3756
    %4267 = vmatpush.bf16.msra.mxu0 %v3748
    %4268 = vmatmul.bf16.gmra.mxu0 %v2510
    %v4269 = vpop.f32.mrf.mxu0
    %v4270 = vadd.f32 %v4257, %v4269
    %v4271 = vpop.f32.mrf.mxu0
    %4272 = vdwg.mxu0
    %4273 = vmatpush.bf16.msra.mxu0 %v3613
    %4274 = vmatpush.bf16.msra.mxu0 %v3605
    %4275 = vmatpush.bf16.msra.mxu0 %v3597
    %4276 = vmatpush.bf16.msra.mxu0 %v3589
    %4277 = vmatpush.bf16.msra.mxu0 %v3581
    %4278 = vmatpush.bf16.msra.mxu0 %v3573
    %4279 = vmatpush.bf16.msra.mxu0 %v3565
    %4280 = vmatpush.bf16.msra.mxu0 %v3557
    %4281 = vmatmul.bf16.gmra.mxu0 %v2507
    %v4282 = vpop.f32.mrf.mxu0
    %v4283 = vadd.f32 %v2773, %v4282
    %v4284 = vpop.f32.mrf.mxu0
    %4285 = vdwg.mxu0
    %4286 = vmatpush.bf16.msra.mxu0 %v3677
    %4287 = vmatpush.bf16.msra.mxu0 %v3669
    %4288 = vmatpush.bf16.msra.mxu0 %v3661
    %4289 = vmatpush.bf16.msra.mxu0 %v3653
    %4290 = vmatpush.bf16.msra.mxu0 %v3645
    %4291 = vmatpush.bf16.msra.mxu0 %v3637
    %4292 = vmatpush.bf16.msra.mxu0 %v3629
    %4293 = vmatpush.bf16.msra.mxu0 %v3621
    %4294 = vmatmul.bf16.gmra.mxu0 %v2508
    %v4295 = vpop.f32.mrf.mxu0
    %v4296 = vadd.f32 %v4283, %v4295
    %v4297 = vpop.f32.mrf.mxu0
    %4298 = vdwg.mxu0
    %4299 = vmatpush.bf16.msra.mxu0 %v3741
    %4300 = vmatpush.bf16.msra.mxu0 %v3733
    %4301 = vmatpush.bf16.msra.mxu0 %v3725
    %4302 = vmatpush.bf16.msra.mxu0 %v3717
    %4303 = vmatpush.bf16.msra.mxu0 %v3709
    %4304 = vmatpush.bf16.msra.mxu0 %v3701
    %4305 = vmatpush.bf16.msra.mxu0 %v3693
    %4306 = vmatpush.bf16.msra.mxu0 %v3685
    %4307 = vmatmul.bf16.gmra.mxu0 %v2509
    %v4308 = vpop.f32.mrf.mxu0
    %v4309 = vadd.f32 %v4296, %v4308
    %v4310 = vpop.f32.mrf.mxu0
    %4311 = vdwg.mxu0
    %4312 = vmatpush.bf16.msra.mxu0 %v3805
    %4313 = vmatpush.bf16.msra.mxu0 %v3797
    %4314 = vmatpush.bf16.msra.mxu0 %v3789
    %4315 = vmatpush.bf16.msra.mxu0 %v3781
    %4316 = vmatpush.bf16.msra.mxu0 %v3773
    %4317 = vmatpush.bf16.msra.mxu0 %v3765
    %4318 = vmatpush.bf16.msra.mxu0 %v3757
    %4319 = vmatpush.bf16.msra.mxu0 %v3749
    %4320 = vmatmul.bf16.gmra.mxu0 %v2510
    %v4321 = vpop.f32.mrf.mxu0
    %v4322 = vadd.f32 %v4309, %v4321
    %v4323 = vpop.f32.mrf.mxu0
    %4324 = vdwg.mxu0
    %4325 = vmatpush.bf16.msra.mxu0 %v3614
    %4326 = vmatpush.bf16.msra.mxu0 %v3606
    %4327 = vmatpush.bf16.msra.mxu0 %v3598
    %4328 = vmatpush.bf16.msra.mxu0 %v3590
    %4329 = vmatpush.bf16.msra.mxu0 %v3582
    %4330 = vmatpush.bf16.msra.mxu0 %v3574
    %4331 = vmatpush.bf16.msra.mxu0 %v3566
    %4332 = vmatpush.bf16.msra.mxu0 %v3558
    %4333 = vmatmul.bf16.gmra.mxu0 %v2507
    %v4334 = vpop.f32.mrf.mxu0
    %v4335 = vadd.f32 %v2774, %v4334
    %v4336 = vpop.f32.mrf.mxu0
    %4337 = vdwg.mxu0
    %4338 = vmatpush.bf16.msra.mxu0 %v3678
    %4339 = vmatpush.bf16.msra.mxu0 %v3670
    %4340 = vmatpush.bf16.msra.mxu0 %v3662
    %4341 = vmatpush.bf16.msra.mxu0 %v3654
    %4342 = vmatpush.bf16.msra.mxu0 %v3646
    %4343 = vmatpush.bf16.msra.mxu0 %v3638
    %4344 = vmatpush.bf16.msra.mxu0 %v3630
    %4345 = vmatpush.bf16.msra.mxu0 %v3622
    %4346 = vmatmul.bf16.gmra.mxu0 %v2508
    %v4347 = vpop.f32.mrf.mxu0
    %v4348 = vadd.f32 %v4335, %v4347
    %v4349 = vpop.f32.mrf.mxu0
    %4350 = vdwg.mxu0
    %4351 = vmatpush.bf16.msra.mxu0 %v3742
    %4352 = vmatpush.bf16.msra.mxu0 %v3734
    %4353 = vmatpush.bf16.msra.mxu0 %v3726
    %4354 = vmatpush.bf16.msra.mxu0 %v3718
    %4355 = vmatpush.bf16.msra.mxu0 %v3710
    %4356 = vmatpush.bf16.msra.mxu0 %v3702
    %4357 = vmatpush.bf16.msra.mxu0 %v3694
    %4358 = vmatpush.bf16.msra.mxu0 %v3686
    %4359 = vmatmul.bf16.gmra.mxu0 %v2509
    %v4360 = vpop.f32.mrf.mxu0
    %v4361 = vadd.f32 %v4348, %v4360
    %v4362 = vpop.f32.mrf.mxu0
    %4363 = vdwg.mxu0
    %4364 = vmatpush.bf16.msra.mxu0 %v3806
    %4365 = vmatpush.bf16.msra.mxu0 %v3798
    %4366 = vmatpush.bf16.msra.mxu0 %v3790
    %4367 = vmatpush.bf16.msra.mxu0 %v3782
    %4368 = vmatpush.bf16.msra.mxu0 %v3774
    %4369 = vmatpush.bf16.msra.mxu0 %v3766
    %4370 = vmatpush.bf16.msra.mxu0 %v3758
    %4371 = vmatpush.bf16.msra.mxu0 %v3750
    %4372 = vmatmul.bf16.gmra.mxu0 %v2510
    %v4373 = vpop.f32.mrf.mxu0
    %v4374 = vadd.f32 %v4361, %v4373
    %v4375 = vpop.f32.mrf.mxu0
    %4376 = vdwg.mxu0
    %4377 = vmatpush.bf16.msra.mxu0 %v3615
    %4378 = vmatpush.bf16.msra.mxu0 %v3607
    %4379 = vmatpush.bf16.msra.mxu0 %v3599
    %4380 = vmatpush.bf16.msra.mxu0 %v3591
    %4381 = vmatpush.bf16.msra.mxu0 %v3583
    %4382 = vmatpush.bf16.msra.mxu0 %v3575
    %4383 = vmatpush.bf16.msra.mxu0 %v3567
    %4384 = vmatpush.bf16.msra.mxu0 %v3559
    %4385 = vmatmul.bf16.gmra.mxu0 %v2507
    %v4386 = vpop.f32.mrf.mxu0
    %v4387 = vadd.f32 %v2775, %v4386
    %v4388 = vpop.f32.mrf.mxu0
    %4389 = vdwg.mxu0
    %4390 = vmatpush.bf16.msra.mxu0 %v3679
    %4391 = vmatpush.bf16.msra.mxu0 %v3671
    %4392 = vmatpush.bf16.msra.mxu0 %v3663
    %4393 = vmatpush.bf16.msra.mxu0 %v3655
    %4394 = vmatpush.bf16.msra.mxu0 %v3647
    %4395 = vmatpush.bf16.msra.mxu0 %v3639
    %4396 = vmatpush.bf16.msra.mxu0 %v3631
    %4397 = vmatpush.bf16.msra.mxu0 %v3623
    %4398 = vmatmul.bf16.gmra.mxu0 %v2508
    %v4399 = vpop.f32.mrf.mxu0
    %v4400 = vadd.f32 %v4387, %v4399
    %v4401 = vpop.f32.mrf.mxu0
    %4402 = vdwg.mxu0
    %4403 = vmatpush.bf16.msra.mxu0 %v3743
    %4404 = vmatpush.bf16.msra.mxu0 %v3735
    %4405 = vmatpush.bf16.msra.mxu0 %v3727
    %4406 = vmatpush.bf16.msra.mxu0 %v3719
    %4407 = vmatpush.bf16.msra.mxu0 %v3711
    %4408 = vmatpush.bf16.msra.mxu0 %v3703
    %4409 = vmatpush.bf16.msra.mxu0 %v3695
    %4410 = vmatpush.bf16.msra.mxu0 %v3687
    %4411 = vmatmul.bf16.gmra.mxu0 %v2509
    %v4412 = vpop.f32.mrf.mxu0
    %v4413 = vadd.f32 %v4400, %v4412
    %v4414 = vpop.f32.mrf.mxu0
    %4415 = vdwg.mxu0
    %4416 = vmatpush.bf16.msra.mxu0 %v3807
    %4417 = vmatpush.bf16.msra.mxu0 %v3799
    %4418 = vmatpush.bf16.msra.mxu0 %v3791
    %4419 = vmatpush.bf16.msra.mxu0 %v3783
    %4420 = vmatpush.bf16.msra.mxu0 %v3775
    %4421 = vmatpush.bf16.msra.mxu0 %v3767
    %4422 = vmatpush.bf16.msra.mxu0 %v3759
    %4423 = vmatpush.bf16.msra.mxu0 %v3751
    %4424 = vmatmul.bf16.gmra.mxu0 %v2510
    %v4425 = vpop.f32.mrf.mxu0
    %v4426 = vadd.f32 %v4413, %v4425
    %v4427 = vpop.f32.mrf.mxu0
    %4428 = vdwg.mxu0
    %4429 = vmatpush.bf16.msra.mxu0 %v3616
    %4430 = vmatpush.bf16.msra.mxu0 %v3608
    %4431 = vmatpush.bf16.msra.mxu0 %v3600
    %4432 = vmatpush.bf16.msra.mxu0 %v3592
    %4433 = vmatpush.bf16.msra.mxu0 %v3584
    %4434 = vmatpush.bf16.msra.mxu0 %v3576
    %4435 = vmatpush.bf16.msra.mxu0 %v3568
    %4436 = vmatpush.bf16.msra.mxu0 %v3560
    %4437 = vmatmul.bf16.gmra.mxu0 %v2507
    %v4438 = vpop.f32.mrf.mxu0
    %v4439 = vadd.f32 %v2776, %v4438
    %v4440 = vpop.f32.mrf.mxu0
    %4441 = vdwg.mxu0
    %4442 = vmatpush.bf16.msra.mxu0 %v3680
    %4443 = vmatpush.bf16.msra.mxu0 %v3672
    %4444 = vmatpush.bf16.msra.mxu0 %v3664
    %4445 = vmatpush.bf16.msra.mxu0 %v3656
    %4446 = vmatpush.bf16.msra.mxu0 %v3648
    %4447 = vmatpush.bf16.msra.mxu0 %v3640
    %4448 = vmatpush.bf16.msra.mxu0 %v3632
    %4449 = vmatpush.bf16.msra.mxu0 %v3624
    %4450 = vmatmul.bf16.gmra.mxu0 %v2508
    %v4451 = vpop.f32.mrf.mxu0
    %v4452 = vadd.f32 %v4439, %v4451
    %v4453 = vpop.f32.mrf.mxu0
    %4454 = vdwg.mxu0
    %4455 = vmatpush.bf16.msra.mxu0 %v3744
    %4456 = vmatpush.bf16.msra.mxu0 %v3736
    %4457 = vmatpush.bf16.msra.mxu0 %v3728
    %4458 = vmatpush.bf16.msra.mxu0 %v3720
    %4459 = vmatpush.bf16.msra.mxu0 %v3712
    %4460 = vmatpush.bf16.msra.mxu0 %v3704
    %4461 = vmatpush.bf16.msra.mxu0 %v3696
    %4462 = vmatpush.bf16.msra.mxu0 %v3688
    %4463 = vmatmul.bf16.gmra.mxu0 %v2509
    %v4464 = vpop.f32.mrf.mxu0
    %v4465 = vadd.f32 %v4452, %v4464
    %v4466 = vpop.f32.mrf.mxu0
    %4467 = vdwg.mxu0
    %4468 = vmatpush.bf16.msra.mxu0 %v3808
    %4469 = vmatpush.bf16.msra.mxu0 %v3800
    %4470 = vmatpush.bf16.msra.mxu0 %v3792
    %4471 = vmatpush.bf16.msra.mxu0 %v3784
    %4472 = vmatpush.bf16.msra.mxu0 %v3776
    %4473 = vmatpush.bf16.msra.mxu0 %v3768
    %4474 = vmatpush.bf16.msra.mxu0 %v3760
    %4475 = vmatpush.bf16.msra.mxu0 %v3752
    %4476 = vmatmul.bf16.gmra.mxu0 %v2510
    %v4477 = vpop.f32.mrf.mxu0
    %v4478 = vadd.f32 %v4465, %v4477
    %v4479 = vpop.f32.mrf.mxu0
    %4480 = vdwg.mxu0
    %v4481 = vmax.f32 %v4114, 0.0
    %v4482 = vmax.f32 %v4166, 0.0
    %v4483 = vmax.f32 %v4218, 0.0
    %v4484 = vmax.f32 %v4270, 0.0
    %v4485 = vmax.f32 %v4322, 0.0
    %v4486 = vmax.f32 %v4374, 0.0
    %v4487 = vmax.f32 %v4426, 0.0
    %v4488 = vmax.f32 %v4478, 0.0
    %v4497 = vrot.slane %v4482, 4
    %v4498 = vrot.slane %v4484, 4
    %v4499 = vrot.slane %v4486, 4
    %v4500 = vrot.slane %v4488, 4
    %vm4501 = vcmask 1043456
    %v4502 = vsel %vm4501, %v4481, %v4497
    %v4503 = vsel %vm4501, %v4483, %v4498
    %v4504 = vsel %vm4501, %v4485, %v4499
    %v4505 = vsel %vm4501, %v4487, %v4500
    %4510 = vst [vmem:[#allocation17] sm:$0xff] %v4502
    %4511 = vst [vmem:[#allocation17 + $0x8] sm:$0xff] %v4503
    %4512 = vst [vmem:[#allocation17 + $0x10] sm:$0xff] %v4504
    %4513 = vst [vmem:[#allocation17 + $0x18] sm:$0xff] %v4505
    // Predicated region
    $region82: #{tpu_custom_call.1} parent=1 // pred_check
      _
    $region83: #{tpu_custom_call.1} parent=1 // pred_check_branch
      %4515 = sbr.rel (0) target = $region85
    $region84: #{tpu_custom_call.1} parent=1 // pred_region
      %4517 = vsyncadd [#allocation4], 0
      %s4519 = sshll.u32 [#allocation17], 4
      %s4520 = int_to_ptr.vmem [resolvable:$true] %s4519
      %s4521 = sshll.u32 %s11, 4
      %s4522 = int_to_ptr.hbm [resolvable:$true] %s4521
      %4524 = dma.vmem_to_hbm [thread:$0]  %s4520, 512, %s4522, [#allocation4]
    $region85: #{tpu_custom_call.1} parent=1 // pred_fallthru
      _
    // Predicated region
    $region86: #{tpu_custom_call.1} parent=1 // pred_check
      _
    $region87: #{tpu_custom_call.1} parent=1 // pred_check_branch
      %4526 = sbr.rel (0) target = $region89
    $region88: #{tpu_custom_call.1} parent=1 // pred_region
      %4528 = dma.done [#allocation4], 512
    $region89: #{tpu_custom_call.1} parent=1 // pred_fallthru
      _
    %4529 = vsyncpa [#allocation3], 1
    %4530 = vsyncpa [#allocation6], 1
    %4531 = vsyncpa [#allocation9], 1
    %4532 = vsyncpa [#allocation12], 1
    %4533 = vsyncpa [#allocation15], 1
    %4534 = vsyncpa [#allocation4], 1

</llo_original>
